<compile_context>
chip_gen: v7x
topology: tpu7x:2x2x1
jax: 0.10.0
libtpu: 0.0.40
codegen_flags: <defaults>
</compile_context>

<pallas_src>
import math
import numpy as np
import jax
import jax.numpy as jnp
from jax import lax
from jax.experimental import pallas as pl
from jax.experimental.pallas import tpu as pltpu


# ----------------------------------------------------------------------------
# Fused kernel: one batch element = all heads + folded final 1x1 conv, in VMEM.
# Grid = (B,).
# ----------------------------------------------------------------------------
def _fused_mha_kernel(x_ref, mask_ref, logm_ref,
                      wq_ref, bq_ref, wk_ref, bk_ref, wv_ref, bv_ref,
                      wo_ref, bo_ref, wf_ref, bf_ref,
                      out_ref):
    cdt = x_ref.dtype                       # compute dtype (f32, or bf16 on v6e/v7x)
    x = x_ref[0]                            # (C, Lp)
    mask = mask_ref[0]                      # (1, Lp) float32
    logm = logm_ref[0]                      # (1, Lp) float32: log(mask+1e-6); -1e30 on pad

    num_head = wq_ref.shape[0]
    v_dim = wo_ref.shape[1]
    l_pad = x.shape[1]

    acc = jnp.zeros((v_dim, l_pad), jnp.float32)

    # TODO(synk): for production ASFormer lengths (L in the thousands) the
    # (Lp, Lp) energy tile should be replaced by flash-style online-softmax
    # tiling over the key axis (and vmem_limit_bytes raised on v5e).
    for h in range(num_head):               # static unroll over heads
        # 1x1 convs over channels (wq/bq already pre-scaled by 1/sqrt(Cq)).
        q = (jnp.dot(wq_ref[h], x, preferred_element_type=jnp.float32)
             + bq_ref[h]).astype(cdt)                                   # (Cq, Lp)
        k = (jnp.dot(wk_ref[h], x, preferred_element_type=jnp.float32)
             + bk_ref[h]).astype(cdt)                                   # (Ck, Lp)
        v = (jnp.dot(wv_ref[h], x, preferred_element_type=jnp.float32)
             + bv_ref[h]).astype(cdt)                                   # (Cv, Lp)

        # energy[lq, lk] = sum_c q[c, lq] * k[c, lk]   (no transposes)
        energy = lax.dot_general(q, k, (((0,), (0,)), ((), ())),
                                 preferred_element_type=jnp.float32)    # (Lp, Lp)

        # masked softmax over the key axis
        att = energy + logm
        att_max = jnp.max(att, axis=-1, keepdims=True)
        p = jnp.exp(att - att_max)
        denom = jnp.sum(p, axis=-1, keepdims=True)
        att = (p * pl.reciprocal(denom, approx=True)) * mask            # (Lp, Lp)

        # av[c, lq] = sum_lk v[c, lk] * att[lq, lk]
        av = lax.dot_general(v, att.astype(cdt), (((1,), (1,)), ((), ())),
                             preferred_element_type=jnp.float32)        # (Cv, Lp)

        head = (jnp.dot(wo_ref[h], jnp.maximum(av, 0.0).astype(cdt),
                        preferred_element_type=jnp.float32)
                + bo_ref[h])                                            # (V, Lp)

        # folded final conv: acc += w_final[:, h*V:(h+1)*V] @ head_out_h
        acc = acc + jnp.dot(wf_ref[h], head.astype(cdt),
                            preferred_element_type=jnp.float32)

    # (sum_h Wf_h @ out_h) * mask + b_final == W_final @ cat(masked heads) + b_final
    out_ref[0] = (acc * mask + bf_ref[...]).astype(out_ref.dtype)


# ----------------------------------------------------------------------------
# Wrapper: MultiHeadAttLayer forward
# ----------------------------------------------------------------------------
def multi_head_att_layer(x1, mask, params, compute_dtype=jnp.float32):
    """x1: (B, C, L) float32; mask: (B, 1, L) float32 -> (B, v_dim, L) float32."""
    # TODO(synk): nn.Dropout(p=0.5) implemented as identity (eval-mode forward).
    B, C, L = x1.shape
    H, Cq, _ = params["wq"].shape
    Ck = params["wk"].shape[1]
    Cv = params["wv"].shape[1]
    V = params["wo"].shape[1]

    # Lane-dense padding of the sequence axis to a multiple of 128.
    Lp = ((L + 127) // 128) * 128
    pad = Lp - L
    x_p = jnp.pad(x1, ((0, 0), (0, 0), (0, pad))).astype(compute_dtype)
    mask_p = jnp.pad(mask, ((0, 0), (0, 0), (0, pad)))          # zeros on padded cols
    # log(mask+1e-6) within L (matches the PyTorch additive mask); -1e30 on the
    # padded key columns so they get exactly zero softmax weight.
    logm_p = jnp.pad(jnp.log(mask + 1e-6), ((0, 0), (0, 0), (0, pad)),
                     constant_values=-1e30)

    # Fold 1/sqrt(c1) into the query projection.
    scale = 1.0 / math.sqrt(Cq)
    wq = (params["wq"] * scale).astype(compute_dtype)
    bq = params["bq"] * scale
    wk = params["wk"].astype(compute_dtype)
    wv = params["wv"].astype(compute_dtype)
    wo = params["wo"].astype(compute_dtype)
    # w_final (V, H*V) -> (H, V, V): wf[h] multiplies head h's output channels.
    wf = params["w_final"].reshape(V, H, V).transpose(1, 0, 2).astype(compute_dtype)

    out_p = pl.pallas_call(
        _fused_mha_kernel,
        out_shape=jax.ShapeDtypeStruct((B, V, Lp), jnp.float32),
        grid=(B,),
        in_specs=[
            pl.BlockSpec((1, C, Lp), lambda b: (b, 0, 0)),     # x
            pl.BlockSpec((1, 1, Lp), lambda b: (b, 0, 0)),     # padding mask
            pl.BlockSpec((1, 1, Lp), lambda b: (b, 0, 0)),     # log mask
            pl.BlockSpec((H, Cq, C), lambda b: (0, 0, 0)),     # wq (pre-scaled)
            pl.BlockSpec((H, Cq, 1), lambda b: (0, 0, 0)),     # bq (pre-scaled)
            pl.BlockSpec((H, Ck, C), lambda b: (0, 0, 0)),     # wk
            pl.BlockSpec((H, Ck, 1), lambda b: (0, 0, 0)),     # bk
            pl.BlockSpec((H, Cv, C), lambda b: (0, 0, 0)),     # wv
            pl.BlockSpec((H, Cv, 1), lambda b: (0, 0, 0)),     # bv
            pl.BlockSpec((H, V, Cv), lambda b: (0, 0, 0)),     # wo (per-head conv_out)
            pl.BlockSpec((H, V, 1), lambda b: (0, 0, 0)),      # bo
            pl.BlockSpec((H, V, V), lambda b: (0, 0, 0)),      # wf (final conv, per head)
            pl.BlockSpec((V, 1), lambda b: (0, 0)),            # bf (final conv bias)
        ],
        out_specs=pl.BlockSpec((1, V, Lp), lambda b: (b, 0, 0)),
        compiler_params=pltpu.CompilerParams(
            dimension_semantics=("parallel",)),   # shard batches across v7x's 2 TCs
    )(x_p, mask_p, logm_p,
      wq, bq, wk, params["bk"], wv, params["bv"],
      wo, params["bo"], wf, params["b_final"])

    return out_p[:, :, :L]


# ----------------------------------------------------------------------------
# Pure-JAX reference (for correctness check only)
# ----------------------------------------------------------------------------
def _reference(x1, mask, params):
    outs = []
    H = params["wq"].shape[0]
    for h in range(H):
        q = jnp.einsum("oc,bcl->bol", params["wq"][h], x1) + params["bq"][h][None]
        k = jnp.einsum("oc,bcl->bol", params["wk"][h], x1) + params["bk"][h][None]
        v = jnp.einsum("oc,bcl->bol", params["wv"][h], x1) + params["bv"][h][None]
        c1 = q.shape[1]
        energy = jnp.einsum("bcl,bcm->blm", q, k) / np.sqrt(c1)
        att = energy + jnp.log(mask + 1e-6)
        att = jax.nn.softmax(att, axis=-1) * mask
        out = jnp.einsum("bcm,blm->bcl", v, att)
        out = jnp.maximum(out, 0.0)
        out = jnp.einsum("oc,bcl->bol", params["wo"][h], out) + params["bo"][h][None]
        outs.append(out * mask)
    cat = jnp.concatenate(outs, axis=1)
    return jnp.einsum("oc,bcl->bol", params["w_final"], cat) + params["b_final"][None]


# ----------------------------------------------------------------------------
# Deterministic parameter init (Conv1d kernel_size=1 weights stored as (out, in))
# ----------------------------------------------------------------------------
def init_params(key, q_dim, k_dim, v_dim, r1, r2, r3, num_head):
    cq, ck, cv = q_dim // r1, k_dim // r2, v_dim // r3
    ks = jax.random.split(key, 12)

    def u(k, shape, fan_in):
        bound = 1.0 / math.sqrt(fan_in)
        return jax.random.uniform(k, shape, jnp.float32, -bound, bound)

    return {
        "wq": u(ks[0], (num_head, cq, q_dim), q_dim),
        "bq": u(ks[1], (num_head, cq, 1), q_dim),
        "wk": u(ks[2], (num_head, ck, k_dim), k_dim),
        "bk": u(ks[3], (num_head, ck, 1), k_dim),
        "wv": u(ks[4], (num_head, cv, v_dim), v_dim),
        "bv": u(ks[5], (num_head, cv, 1), v_dim),
        "wo": u(ks[6], (num_head, v_dim, cv), cv),
        "bo": u(ks[7], (num_head, v_dim, 1), cv),
        "w_final": u(ks[8], (v_dim, v_dim * num_head), v_dim * num_head),
        "b_final": u(ks[9], (v_dim, 1), v_dim * num_head),
    }


if __name__ == "__main__":
    # MultiHeadAttLayer(q_dim=16, k_dim=16, v_dim=16, r1=r2=r3=2, bl=4,
    #                   stage='encoder', att_type='normal_att', num_head=3)
    q_dim = k_dim = v_dim = 16
    r1 = r2 = r3 = 2
    num_head = 3
    B, L = 2, 16

    key = jax.random.PRNGKey(0)
    kx, kp = jax.random.split(key)

    x1 = jax.random.normal(kx, (B, q_dim, L), jnp.float32)
    # padding mask: batch 0 fully valid, batch 1 has last 5 positions padded
    mask = jnp.ones((B, 1, L), jnp.float32)
    mask = mask.at[1, 0, 11:].set(0.0)

    params = init_params(kp, q_dim, k_dim, v_dim, r1, r2, r3, num_head)

    out = multi_head_att_layer(x1, mask, params)
    out = jax.block_until_ready(out)

    ref = _reference(x1, mask, params)
    # Tolerance accounts for the EUP approximate-reciprocal softmax normalization.
    np.testing.assert_allclose(np.asarray(out), np.asarray(ref), rtol=5e-3, atol=5e-3)

    print("KERNEL_OK")
</pallas_src>

<mosaic_0001>
module attributes {stable_mosaic.version = 11 : i64} {
  func.func @_fused_mha_kernel(%arg0: i32, %arg1: memref<1x16x128xf32, #tpu.memory_space<vmem>>, %arg2: memref<1x1x128xf32, #tpu.memory_space<vmem>>, %arg3: memref<1x1x128xf32, #tpu.memory_space<vmem>>, %arg4: memref<3x8x16xf32, #tpu.memory_space<vmem>>, %arg5: memref<3x8x1xf32, #tpu.memory_space<vmem>>, %arg6: memref<3x8x16xf32, #tpu.memory_space<vmem>>, %arg7: memref<3x8x1xf32, #tpu.memory_space<vmem>>, %arg8: memref<3x8x16xf32, #tpu.memory_space<vmem>>, %arg9: memref<3x8x1xf32, #tpu.memory_space<vmem>>, %arg10: memref<3x16x8xf32, #tpu.memory_space<vmem>>, %arg11: memref<3x16x1xf32, #tpu.memory_space<vmem>>, %arg12: memref<3x16x16xf32, #tpu.memory_space<vmem>>, %arg13: memref<16x1xf32, #tpu.memory_space<vmem>>, %arg14: memref<1x16x128xf32, #tpu.memory_space<vmem>>) attributes {dimension_semantics = [#tpu.dimension_semantics<parallel>], iteration_bounds = array<i64: 2>, scalar_prefetch = 0 : i64, scratch_operands = 0 : i64, tpu.core_type = #tpu.core_type<tc>, window_params = [{transform_indices = @transform_0, window_bounds = array<i64: 1, 16, 128>}, {transform_indices = @transform_1, window_bounds = array<i64: 1, 1, 128>}, {transform_indices = @transform_2, window_bounds = array<i64: 1, 1, 128>}, {pipeline_mode = #tpu.pipeline_mode<synchronous>, transform_indices = @transform_3, window_bounds = array<i64: 3, 8, 16>}, {pipeline_mode = #tpu.pipeline_mode<synchronous>, transform_indices = @transform_4, window_bounds = array<i64: 3, 8, 1>}, {pipeline_mode = #tpu.pipeline_mode<synchronous>, transform_indices = @transform_5, window_bounds = array<i64: 3, 8, 16>}, {pipeline_mode = #tpu.pipeline_mode<synchronous>, transform_indices = @transform_6, window_bounds = array<i64: 3, 8, 1>}, {pipeline_mode = #tpu.pipeline_mode<synchronous>, transform_indices = @transform_7, window_bounds = array<i64: 3, 8, 16>}, {pipeline_mode = #tpu.pipeline_mode<synchronous>, transform_indices = @transform_8, window_bounds = array<i64: 3, 8, 1>}, {pipeline_mode = #tpu.pipeline_mode<synchronous>, transform_indices = @transform_9, window_bounds = array<i64: 3, 16, 8>}, {pipeline_mode = #tpu.pipeline_mode<synchronous>, transform_indices = @transform_10, window_bounds = array<i64: 3, 16, 1>}, {pipeline_mode = #tpu.pipeline_mode<synchronous>, transform_indices = @transform_11, window_bounds = array<i64: 3, 16, 16>}, {pipeline_mode = #tpu.pipeline_mode<synchronous>, transform_indices = @transform_12, window_bounds = array<i64: 16, 1>}, {transform_indices = @transform_13, window_bounds = array<i64: 1, 16, 128>}]} {
    %c0 = arith.constant 0 : index
    %c0_0 = arith.constant 0 : index
    %c0_1 = arith.constant 0 : index
    %0 = vector.load %arg1[%c0, %c0_0, %c0_1] : memref<1x16x128xf32, #tpu.memory_space<vmem>>, vector<1x16x128xf32>
    %1 = vector.shape_cast %0 : vector<1x16x128xf32> to vector<16x128xf32>
    %c0_2 = arith.constant 0 : index
    %c0_3 = arith.constant 0 : index
    %c0_4 = arith.constant 0 : index
    %2 = vector.load %arg2[%c0_2, %c0_3, %c0_4] : memref<1x1x128xf32, #tpu.memory_space<vmem>>, vector<1x1x128xf32>
    %3 = vector.shape_cast %2 : vector<1x1x128xf32> to vector<1x128xf32>
    %c0_5 = arith.constant 0 : index
    %c0_6 = arith.constant 0 : index
    %c0_7 = arith.constant 0 : index
    %4 = vector.load %arg3[%c0_5, %c0_6, %c0_7] : memref<1x1x128xf32, #tpu.memory_space<vmem>>, vector<1x1x128xf32>
    %5 = vector.shape_cast %4 : vector<1x1x128xf32> to vector<1x128xf32>
    %cst = arith.constant 0.000000e+00 : f32
    %6 = vector.broadcast %cst : f32 to vector<16x128xf32>
    %c0_8 = arith.constant 0 : index
    %c0_9 = arith.constant 0 : index
    %c0_10 = arith.constant 0 : index
    %7 = vector.load %arg4[%c0_8, %c0_9, %c0_10] : memref<3x8x16xf32, #tpu.memory_space<vmem>>, vector<1x8x16xf32>
    %8 = vector.shape_cast %7 : vector<1x8x16xf32> to vector<8x16xf32>
    %cst_11 = arith.constant dense<0.000000e+00> : vector<8x128xf32>
    %9 = tpu.matmul %8, %1, %cst_11 {dimension_numbers = #tpu.dot_dimension_numbers<[1], [0], [0], [1], [0, 0, 1, 1], [], []>} : vector<8x16xf32>, vector<16x128xf32>, vector<8x128xf32> -> vector<8x128xf32>
    %c0_12 = arith.constant 0 : index
    %c0_13 = arith.constant 0 : index
    %c0_14 = arith.constant 0 : index
    %10 = vector.load %arg5[%c0_12, %c0_13, %c0_14] : memref<3x8x1xf32, #tpu.memory_space<vmem>>, vector<1x8x1xf32>
    %11 = vector.shape_cast %10 : vector<1x8x1xf32> to vector<8x1xf32>
    %12 = vector.broadcast %11 : vector<8x1xf32> to vector<8x128xf32>
    %13 = arith.addf %9, %12 : vector<8x128xf32>
    %c0_15 = arith.constant 0 : index
    %c0_16 = arith.constant 0 : index
    %c0_17 = arith.constant 0 : index
    %14 = vector.load %arg6[%c0_15, %c0_16, %c0_17] : memref<3x8x16xf32, #tpu.memory_space<vmem>>, vector<1x8x16xf32>
    %15 = vector.shape_cast %14 : vector<1x8x16xf32> to vector<8x16xf32>
    %cst_18 = arith.constant dense<0.000000e+00> : vector<8x128xf32>
    %16 = tpu.matmul %15, %1, %cst_18 {dimension_numbers = #tpu.dot_dimension_numbers<[1], [0], [0], [1], [0, 0, 1, 1], [], []>} : vector<8x16xf32>, vector<16x128xf32>, vector<8x128xf32> -> vector<8x128xf32>
    %c0_19 = arith.constant 0 : index
    %c0_20 = arith.constant 0 : index
    %c0_21 = arith.constant 0 : index
    %17 = vector.load %arg7[%c0_19, %c0_20, %c0_21] : memref<3x8x1xf32, #tpu.memory_space<vmem>>, vector<1x8x1xf32>
    %18 = vector.shape_cast %17 : vector<1x8x1xf32> to vector<8x1xf32>
    %19 = vector.broadcast %18 : vector<8x1xf32> to vector<8x128xf32>
    %20 = arith.addf %16, %19 : vector<8x128xf32>
    %c0_22 = arith.constant 0 : index
    %c0_23 = arith.constant 0 : index
    %c0_24 = arith.constant 0 : index
    %21 = vector.load %arg8[%c0_22, %c0_23, %c0_24] : memref<3x8x16xf32, #tpu.memory_space<vmem>>, vector<1x8x16xf32>
    %22 = vector.shape_cast %21 : vector<1x8x16xf32> to vector<8x16xf32>
    %cst_25 = arith.constant dense<0.000000e+00> : vector<8x128xf32>
    %23 = tpu.matmul %22, %1, %cst_25 {dimension_numbers = #tpu.dot_dimension_numbers<[1], [0], [0], [1], [0, 0, 1, 1], [], []>} : vector<8x16xf32>, vector<16x128xf32>, vector<8x128xf32> -> vector<8x128xf32>
    %c0_26 = arith.constant 0 : index
    %c0_27 = arith.constant 0 : index
    %c0_28 = arith.constant 0 : index
    %24 = vector.load %arg9[%c0_26, %c0_27, %c0_28] : memref<3x8x1xf32, #tpu.memory_space<vmem>>, vector<1x8x1xf32>
    %25 = vector.shape_cast %24 : vector<1x8x1xf32> to vector<8x1xf32>
    %26 = vector.broadcast %25 : vector<8x1xf32> to vector<8x128xf32>
    %27 = arith.addf %23, %26 : vector<8x128xf32>
    %cst_29 = arith.constant dense<0.000000e+00> : vector<128x128xf32>
    %28 = tpu.matmul %13, %20, %cst_29 {dimension_numbers = #tpu.dot_dimension_numbers<[0], [0], [1], [1], [0, 1, 1, 1], [], []>} : vector<8x128xf32>, vector<8x128xf32>, vector<128x128xf32> -> vector<128x128xf32>
    %29 = vector.broadcast %5 : vector<1x128xf32> to vector<128x128xf32>
    %30 = arith.addf %28, %29 : vector<128x128xf32>
    %cst_30 = arith.constant dense<0xFF800000> : vector<128xf32>
    %31 = vector.multi_reduction <maximumf>, %30, %cst_30 [1] : vector<128x128xf32> to vector<128xf32>
    %32 = vector.shape_cast %31 : vector<128xf32> to vector<128x1xf32>
    %33 = vector.broadcast %32 : vector<128x1xf32> to vector<128x128xf32>
    %34 = arith.subf %30, %33 : vector<128x128xf32>
    %35 = math.exp %34 : vector<128x128xf32>
    %cst_31 = arith.constant dense<0.000000e+00> : vector<128xf32>
    %36 = vector.multi_reduction <add>, %35, %cst_31 [1] : vector<128x128xf32> to vector<128xf32>
    %37 = vector.shape_cast %36 : vector<128xf32> to vector<128x1xf32>
    %38 = tpu.reciprocal %37 {approx = true} : vector<128x1xf32> -> vector<128x1xf32>
    %39 = vector.broadcast %38 : vector<128x1xf32> to vector<128x128xf32>
    %40 = arith.mulf %35, %39 : vector<128x128xf32>
    %41 = vector.broadcast %3 : vector<1x128xf32> to vector<128x128xf32>
    %42 = arith.mulf %40, %41 : vector<128x128xf32>
    %cst_32 = arith.constant dense<0.000000e+00> : vector<8x128xf32>
    %43 = tpu.matmul %27, %42, %cst_32 {dimension_numbers = #tpu.dot_dimension_numbers<[1], [1], [0], [0], [0, 0, 1, 0], [], []>} : vector<8x128xf32>, vector<128x128xf32>, vector<8x128xf32> -> vector<8x128xf32>
    %c0_33 = arith.constant 0 : index
    %c0_34 = arith.constant 0 : index
    %c0_35 = arith.constant 0 : index
    %44 = vector.load %arg10[%c0_33, %c0_34, %c0_35] : memref<3x16x8xf32, #tpu.memory_space<vmem>>, vector<1x16x8xf32>
    %45 = vector.shape_cast %44 : vector<1x16x8xf32> to vector<16x8xf32>
    %cst_36 = arith.constant 0.000000e+00 : f32
    %46 = vector.broadcast %cst_36 : f32 to vector<8x128xf32>
    %47 = arith.maximumf %43, %46 : vector<8x128xf32>
    %cst_37 = arith.constant dense<0.000000e+00> : vector<16x128xf32>
    %48 = tpu.matmul %45, %47, %cst_37 {dimension_numbers = #tpu.dot_dimension_numbers<[1], [0], [0], [1], [0, 0, 1, 1], [], []>} : vector<16x8xf32>, vector<8x128xf32>, vector<16x128xf32> -> vector<16x128xf32>
    %c0_38 = arith.constant 0 : index
    %c0_39 = arith.constant 0 : index
    %c0_40 = arith.constant 0 : index
    %49 = vector.load %arg11[%c0_38, %c0_39, %c0_40] : memref<3x16x1xf32, #tpu.memory_space<vmem>>, vector<1x16x1xf32>
    %50 = vector.shape_cast %49 : vector<1x16x1xf32> to vector<16x1xf32>
    %51 = vector.broadcast %50 : vector<16x1xf32> to vector<16x128xf32>
    %52 = arith.addf %48, %51 : vector<16x128xf32>
    %c0_41 = arith.constant 0 : index
    %c0_42 = arith.constant 0 : index
    %c0_43 = arith.constant 0 : index
    %53 = vector.load %arg12[%c0_41, %c0_42, %c0_43] : memref<3x16x16xf32, #tpu.memory_space<vmem>>, vector<1x16x16xf32>
    %54 = vector.shape_cast %53 : vector<1x16x16xf32> to vector<16x16xf32>
    %cst_44 = arith.constant dense<0.000000e+00> : vector<16x128xf32>
    %55 = tpu.matmul %54, %52, %cst_44 {dimension_numbers = #tpu.dot_dimension_numbers<[1], [0], [0], [1], [0, 0, 1, 1], [], []>} : vector<16x16xf32>, vector<16x128xf32>, vector<16x128xf32> -> vector<16x128xf32>
    %56 = arith.addf %6, %55 : vector<16x128xf32>
    %c1 = arith.constant 1 : index
    %c0_45 = arith.constant 0 : index
    %c0_46 = arith.constant 0 : index
    %57 = vector.load %arg4[%c1, %c0_45, %c0_46] : memref<3x8x16xf32, #tpu.memory_space<vmem>>, vector<1x8x16xf32>
    %58 = vector.shape_cast %57 : vector<1x8x16xf32> to vector<8x16xf32>
    %cst_47 = arith.constant dense<0.000000e+00> : vector<8x128xf32>
    %59 = tpu.matmul %58, %1, %cst_47 {dimension_numbers = #tpu.dot_dimension_numbers<[1], [0], [0], [1], [0, 0, 1, 1], [], []>} : vector<8x16xf32>, vector<16x128xf32>, vector<8x128xf32> -> vector<8x128xf32>
    %c1_48 = arith.constant 1 : index
    %c0_49 = arith.constant 0 : index
    %c0_50 = arith.constant 0 : index
    %60 = vector.load %arg5[%c1_48, %c0_49, %c0_50] : memref<3x8x1xf32, #tpu.memory_space<vmem>>, vector<1x8x1xf32>
    %61 = vector.shape_cast %60 : vector<1x8x1xf32> to vector<8x1xf32>
    %62 = vector.broadcast %61 : vector<8x1xf32> to vector<8x128xf32>
    %63 = arith.addf %59, %62 : vector<8x128xf32>
    %c1_51 = arith.constant 1 : index
    %c0_52 = arith.constant 0 : index
    %c0_53 = arith.constant 0 : index
    %64 = vector.load %arg6[%c1_51, %c0_52, %c0_53] : memref<3x8x16xf32, #tpu.memory_space<vmem>>, vector<1x8x16xf32>
    %65 = vector.shape_cast %64 : vector<1x8x16xf32> to vector<8x16xf32>
    %cst_54 = arith.constant dense<0.000000e+00> : vector<8x128xf32>
    %66 = tpu.matmul %65, %1, %cst_54 {dimension_numbers = #tpu.dot_dimension_numbers<[1], [0], [0], [1], [0, 0, 1, 1], [], []>} : vector<8x16xf32>, vector<16x128xf32>, vector<8x128xf32> -> vector<8x128xf32>
    %c1_55 = arith.constant 1 : index
    %c0_56 = arith.constant 0 : index
    %c0_57 = arith.constant 0 : index
    %67 = vector.load %arg7[%c1_55, %c0_56, %c0_57] : memref<3x8x1xf32, #tpu.memory_space<vmem>>, vector<1x8x1xf32>
    %68 = vector.shape_cast %67 : vector<1x8x1xf32> to vector<8x1xf32>
    %69 = vector.broadcast %68 : vector<8x1xf32> to vector<8x128xf32>
    %70 = arith.addf %66, %69 : vector<8x128xf32>
    %c1_58 = arith.constant 1 : index
    %c0_59 = arith.constant 0 : index
    %c0_60 = arith.constant 0 : index
    %71 = vector.load %arg8[%c1_58, %c0_59, %c0_60] : memref<3x8x16xf32, #tpu.memory_space<vmem>>, vector<1x8x16xf32>
    %72 = vector.shape_cast %71 : vector<1x8x16xf32> to vector<8x16xf32>
    %cst_61 = arith.constant dense<0.000000e+00> : vector<8x128xf32>
    %73 = tpu.matmul %72, %1, %cst_61 {dimension_numbers = #tpu.dot_dimension_numbers<[1], [0], [0], [1], [0, 0, 1, 1], [], []>} : vector<8x16xf32>, vector<16x128xf32>, vector<8x128xf32> -> vector<8x128xf32>
    %c1_62 = arith.constant 1 : index
    %c0_63 = arith.constant 0 : index
    %c0_64 = arith.constant 0 : index
    %74 = vector.load %arg9[%c1_62, %c0_63, %c0_64] : memref<3x8x1xf32, #tpu.memory_space<vmem>>, vector<1x8x1xf32>
    %75 = vector.shape_cast %74 : vector<1x8x1xf32> to vector<8x1xf32>
    %76 = vector.broadcast %75 : vector<8x1xf32> to vector<8x128xf32>
    %77 = arith.addf %73, %76 : vector<8x128xf32>
    %cst_65 = arith.constant dense<0.000000e+00> : vector<128x128xf32>
    %78 = tpu.matmul %63, %70, %cst_65 {dimension_numbers = #tpu.dot_dimension_numbers<[0], [0], [1], [1], [0, 1, 1, 1], [], []>} : vector<8x128xf32>, vector<8x128xf32>, vector<128x128xf32> -> vector<128x128xf32>
    %79 = vector.broadcast %5 : vector<1x128xf32> to vector<128x128xf32>
    %80 = arith.addf %78, %79 : vector<128x128xf32>
    %cst_66 = arith.constant dense<0xFF800000> : vector<128xf32>
    %81 = vector.multi_reduction <maximumf>, %80, %cst_66 [1] : vector<128x128xf32> to vector<128xf32>
    %82 = vector.shape_cast %81 : vector<128xf32> to vector<128x1xf32>
    %83 = vector.broadcast %82 : vector<128x1xf32> to vector<128x128xf32>
    %84 = arith.subf %80, %83 : vector<128x128xf32>
    %85 = math.exp %84 : vector<128x128xf32>
    %cst_67 = arith.constant dense<0.000000e+00> : vector<128xf32>
    %86 = vector.multi_reduction <add>, %85, %cst_67 [1] : vector<128x128xf32> to vector<128xf32>
    %87 = vector.shape_cast %86 : vector<128xf32> to vector<128x1xf32>
    %88 = tpu.reciprocal %87 {approx = true} : vector<128x1xf32> -> vector<128x1xf32>
    %89 = vector.broadcast %88 : vector<128x1xf32> to vector<128x128xf32>
    %90 = arith.mulf %85, %89 : vector<128x128xf32>
    %91 = vector.broadcast %3 : vector<1x128xf32> to vector<128x128xf32>
    %92 = arith.mulf %90, %91 : vector<128x128xf32>
    %cst_68 = arith.constant dense<0.000000e+00> : vector<8x128xf32>
    %93 = tpu.matmul %77, %92, %cst_68 {dimension_numbers = #tpu.dot_dimension_numbers<[1], [1], [0], [0], [0, 0, 1, 0], [], []>} : vector<8x128xf32>, vector<128x128xf32>, vector<8x128xf32> -> vector<8x128xf32>
    %c1_69 = arith.constant 1 : index
    %c0_70 = arith.constant 0 : index
    %c0_71 = arith.constant 0 : index
    %94 = vector.load %arg10[%c1_69, %c0_70, %c0_71] : memref<3x16x8xf32, #tpu.memory_space<vmem>>, vector<1x16x8xf32>
    %95 = vector.shape_cast %94 : vector<1x16x8xf32> to vector<16x8xf32>
    %cst_72 = arith.constant 0.000000e+00 : f32
    %96 = vector.broadcast %cst_72 : f32 to vector<8x128xf32>
    %97 = arith.maximumf %93, %96 : vector<8x128xf32>
    %cst_73 = arith.constant dense<0.000000e+00> : vector<16x128xf32>
    %98 = tpu.matmul %95, %97, %cst_73 {dimension_numbers = #tpu.dot_dimension_numbers<[1], [0], [0], [1], [0, 0, 1, 1], [], []>} : vector<16x8xf32>, vector<8x128xf32>, vector<16x128xf32> -> vector<16x128xf32>
    %c1_74 = arith.constant 1 : index
    %c0_75 = arith.constant 0 : index
    %c0_76 = arith.constant 0 : index
    %99 = vector.load %arg11[%c1_74, %c0_75, %c0_76] : memref<3x16x1xf32, #tpu.memory_space<vmem>>, vector<1x16x1xf32>
    %100 = vector.shape_cast %99 : vector<1x16x1xf32> to vector<16x1xf32>
    %101 = vector.broadcast %100 : vector<16x1xf32> to vector<16x128xf32>
    %102 = arith.addf %98, %101 : vector<16x128xf32>
    %c1_77 = arith.constant 1 : index
    %c0_78 = arith.constant 0 : index
    %c0_79 = arith.constant 0 : index
    %103 = vector.load %arg12[%c1_77, %c0_78, %c0_79] : memref<3x16x16xf32, #tpu.memory_space<vmem>>, vector<1x16x16xf32>
    %104 = vector.shape_cast %103 : vector<1x16x16xf32> to vector<16x16xf32>
    %cst_80 = arith.constant dense<0.000000e+00> : vector<16x128xf32>
    %105 = tpu.matmul %104, %102, %cst_80 {dimension_numbers = #tpu.dot_dimension_numbers<[1], [0], [0], [1], [0, 0, 1, 1], [], []>} : vector<16x16xf32>, vector<16x128xf32>, vector<16x128xf32> -> vector<16x128xf32>
    %106 = arith.addf %56, %105 : vector<16x128xf32>
    %c2 = arith.constant 2 : index
    %c0_81 = arith.constant 0 : index
    %c0_82 = arith.constant 0 : index
    %107 = vector.load %arg4[%c2, %c0_81, %c0_82] : memref<3x8x16xf32, #tpu.memory_space<vmem>>, vector<1x8x16xf32>
    %108 = vector.shape_cast %107 : vector<1x8x16xf32> to vector<8x16xf32>
    %cst_83 = arith.constant dense<0.000000e+00> : vector<8x128xf32>
    %109 = tpu.matmul %108, %1, %cst_83 {dimension_numbers = #tpu.dot_dimension_numbers<[1], [0], [0], [1], [0, 0, 1, 1], [], []>} : vector<8x16xf32>, vector<16x128xf32>, vector<8x128xf32> -> vector<8x128xf32>
    %c2_84 = arith.constant 2 : index
    %c0_85 = arith.constant 0 : index
    %c0_86 = arith.constant 0 : index
    %110 = vector.load %arg5[%c2_84, %c0_85, %c0_86] : memref<3x8x1xf32, #tpu.memory_space<vmem>>, vector<1x8x1xf32>
    %111 = vector.shape_cast %110 : vector<1x8x1xf32> to vector<8x1xf32>
    %112 = vector.broadcast %111 : vector<8x1xf32> to vector<8x128xf32>
    %113 = arith.addf %109, %112 : vector<8x128xf32>
    %c2_87 = arith.constant 2 : index
    %c0_88 = arith.constant 0 : index
    %c0_89 = arith.constant 0 : index
    %114 = vector.load %arg6[%c2_87, %c0_88, %c0_89] : memref<3x8x16xf32, #tpu.memory_space<vmem>>, vector<1x8x16xf32>
    %115 = vector.shape_cast %114 : vector<1x8x16xf32> to vector<8x16xf32>
    %cst_90 = arith.constant dense<0.000000e+00> : vector<8x128xf32>
    %116 = tpu.matmul %115, %1, %cst_90 {dimension_numbers = #tpu.dot_dimension_numbers<[1], [0], [0], [1], [0, 0, 1, 1], [], []>} : vector<8x16xf32>, vector<16x128xf32>, vector<8x128xf32> -> vector<8x128xf32>
    %c2_91 = arith.constant 2 : index
    %c0_92 = arith.constant 0 : index
    %c0_93 = arith.constant 0 : index
    %117 = vector.load %arg7[%c2_91, %c0_92, %c0_93] : memref<3x8x1xf32, #tpu.memory_space<vmem>>, vector<1x8x1xf32>
    %118 = vector.shape_cast %117 : vector<1x8x1xf32> to vector<8x1xf32>
    %119 = vector.broadcast %118 : vector<8x1xf32> to vector<8x128xf32>
    %120 = arith.addf %116, %119 : vector<8x128xf32>
    %c2_94 = arith.constant 2 : index
    %c0_95 = arith.constant 0 : index
    %c0_96 = arith.constant 0 : index
    %121 = vector.load %arg8[%c2_94, %c0_95, %c0_96] : memref<3x8x16xf32, #tpu.memory_space<vmem>>, vector<1x8x16xf32>
    %122 = vector.shape_cast %121 : vector<1x8x16xf32> to vector<8x16xf32>
    %cst_97 = arith.constant dense<0.000000e+00> : vector<8x128xf32>
    %123 = tpu.matmul %122, %1, %cst_97 {dimension_numbers = #tpu.dot_dimension_numbers<[1], [0], [0], [1], [0, 0, 1, 1], [], []>} : vector<8x16xf32>, vector<16x128xf32>, vector<8x128xf32> -> vector<8x128xf32>
    %c2_98 = arith.constant 2 : index
    %c0_99 = arith.constant 0 : index
    %c0_100 = arith.constant 0 : index
    %124 = vector.load %arg9[%c2_98, %c0_99, %c0_100] : memref<3x8x1xf32, #tpu.memory_space<vmem>>, vector<1x8x1xf32>
    %125 = vector.shape_cast %124 : vector<1x8x1xf32> to vector<8x1xf32>
    %126 = vector.broadcast %125 : vector<8x1xf32> to vector<8x128xf32>
    %127 = arith.addf %123, %126 : vector<8x128xf32>
    %cst_101 = arith.constant dense<0.000000e+00> : vector<128x128xf32>
    %128 = tpu.matmul %113, %120, %cst_101 {dimension_numbers = #tpu.dot_dimension_numbers<[0], [0], [1], [1], [0, 1, 1, 1], [], []>} : vector<8x128xf32>, vector<8x128xf32>, vector<128x128xf32> -> vector<128x128xf32>
    %129 = vector.broadcast %5 : vector<1x128xf32> to vector<128x128xf32>
    %130 = arith.addf %128, %129 : vector<128x128xf32>
    %cst_102 = arith.constant dense<0xFF800000> : vector<128xf32>
    %131 = vector.multi_reduction <maximumf>, %130, %cst_102 [1] : vector<128x128xf32> to vector<128xf32>
    %132 = vector.shape_cast %131 : vector<128xf32> to vector<128x1xf32>
    %133 = vector.broadcast %132 : vector<128x1xf32> to vector<128x128xf32>
    %134 = arith.subf %130, %133 : vector<128x128xf32>
    %135 = math.exp %134 : vector<128x128xf32>
    %cst_103 = arith.constant dense<0.000000e+00> : vector<128xf32>
    %136 = vector.multi_reduction <add>, %135, %cst_103 [1] : vector<128x128xf32> to vector<128xf32>
    %137 = vector.shape_cast %136 : vector<128xf32> to vector<128x1xf32>
    %138 = tpu.reciprocal %137 {approx = true} : vector<128x1xf32> -> vector<128x1xf32>
    %139 = vector.broadcast %138 : vector<128x1xf32> to vector<128x128xf32>
    %140 = arith.mulf %135, %139 : vector<128x128xf32>
    %141 = vector.broadcast %3 : vector<1x128xf32> to vector<128x128xf32>
    %142 = arith.mulf %140, %141 : vector<128x128xf32>
    %cst_104 = arith.constant dense<0.000000e+00> : vector<8x128xf32>
    %143 = tpu.matmul %127, %142, %cst_104 {dimension_numbers = #tpu.dot_dimension_numbers<[1], [1], [0], [0], [0, 0, 1, 0], [], []>} : vector<8x128xf32>, vector<128x128xf32>, vector<8x128xf32> -> vector<8x128xf32>
    %c2_105 = arith.constant 2 : index
    %c0_106 = arith.constant 0 : index
    %c0_107 = arith.constant 0 : index
    %144 = vector.load %arg10[%c2_105, %c0_106, %c0_107] : memref<3x16x8xf32, #tpu.memory_space<vmem>>, vector<1x16x8xf32>
    %145 = vector.shape_cast %144 : vector<1x16x8xf32> to vector<16x8xf32>
    %cst_108 = arith.constant 0.000000e+00 : f32
    %146 = vector.broadcast %cst_108 : f32 to vector<8x128xf32>
    %147 = arith.maximumf %143, %146 : vector<8x128xf32>
    %cst_109 = arith.constant dense<0.000000e+00> : vector<16x128xf32>
    %148 = tpu.matmul %145, %147, %cst_109 {dimension_numbers = #tpu.dot_dimension_numbers<[1], [0], [0], [1], [0, 0, 1, 1], [], []>} : vector<16x8xf32>, vector<8x128xf32>, vector<16x128xf32> -> vector<16x128xf32>
    %c2_110 = arith.constant 2 : index
    %c0_111 = arith.constant 0 : index
    %c0_112 = arith.constant 0 : index
    %149 = vector.load %arg11[%c2_110, %c0_111, %c0_112] : memref<3x16x1xf32, #tpu.memory_space<vmem>>, vector<1x16x1xf32>
    %150 = vector.shape_cast %149 : vector<1x16x1xf32> to vector<16x1xf32>
    %151 = vector.broadcast %150 : vector<16x1xf32> to vector<16x128xf32>
    %152 = arith.addf %148, %151 : vector<16x128xf32>
    %c2_113 = arith.constant 2 : index
    %c0_114 = arith.constant 0 : index
    %c0_115 = arith.constant 0 : index
    %153 = vector.load %arg12[%c2_113, %c0_114, %c0_115] : memref<3x16x16xf32, #tpu.memory_space<vmem>>, vector<1x16x16xf32>
    %154 = vector.shape_cast %153 : vector<1x16x16xf32> to vector<16x16xf32>
    %cst_116 = arith.constant dense<0.000000e+00> : vector<16x128xf32>
    %155 = tpu.matmul %154, %152, %cst_116 {dimension_numbers = #tpu.dot_dimension_numbers<[1], [0], [0], [1], [0, 0, 1, 1], [], []>} : vector<16x16xf32>, vector<16x128xf32>, vector<16x128xf32> -> vector<16x128xf32>
    %156 = arith.addf %106, %155 : vector<16x128xf32>
    %157 = vector.broadcast %3 : vector<1x128xf32> to vector<16x128xf32>
    %158 = arith.mulf %156, %157 : vector<16x128xf32>
    %c0_117 = arith.constant 0 : index
    %c0_118 = arith.constant 0 : index
    %159 = vector.load %arg13[%c0_117, %c0_118] : memref<16x1xf32, #tpu.memory_space<vmem>>, vector<16x1xf32>
    %160 = vector.broadcast %159 : vector<16x1xf32> to vector<16x128xf32>
    %161 = arith.addf %158, %160 : vector<16x128xf32>
    %c0_119 = arith.constant 0 : index
    %c0_120 = arith.constant 0 : index
    %c0_121 = arith.constant 0 : index
    %162 = vector.load %arg14[%c0_119, %c0_120, %c0_121] : memref<1x16x128xf32, #tpu.memory_space<vmem>>, vector<1x16x128xf32>
    %163 = vector.shape_cast %162 : vector<1x16x128xf32> to vector<16x128xf32>
    %164 = vector.shape_cast %161 : vector<16x128xf32> to vector<1x16x128xf32>
    tpu.vector_store %arg14[%c0_119, %c0_120, %c0_121], %164 {strides = array<i32>} : memref<1x16x128xf32, #tpu.memory_space<vmem>>, vector<1x16x128xf32>,
    return
  }
  func.func @transform_0(%arg0: i32) -> (i32, i32, i32) {
    %c0_i32 = arith.constant 0 : i32
    %c0_i32_0 = arith.constant 0 : i32
    %c0_i32_1 = arith.constant 0 : i32
    return %arg0, %c0_i32, %c0_i32_0 : i32, i32, i32
  }
  func.func @transform_1(%arg0: i32) -> (i32, i32, i32) {
    %c0_i32 = arith.constant 0 : i32
    %c0_i32_0 = arith.constant 0 : i32
    %c0_i32_1 = arith.constant 0 : i32
    return %arg0, %c0_i32, %c0_i32_0 : i32, i32, i32
  }
  func.func @transform_2(%arg0: i32) -> (i32, i32, i32) {
    %c0_i32 = arith.constant 0 : i32
    %c0_i32_0 = arith.constant 0 : i32
    %c0_i32_1 = arith.constant 0 : i32
    return %arg0, %c0_i32, %c0_i32_0 : i32, i32, i32
  }
  func.func @transform_3(%arg0: i32) -> (i32, i32, i32) {
    %c0_i32 = arith.constant 0 : i32
    %c0_i32_0 = arith.constant 0 : i32
    %c0_i32_1 = arith.constant 0 : i32
    %c0_i32_2 = arith.constant 0 : i32
    return %c0_i32, %c0_i32_0, %c0_i32_1 : i32, i32, i32
  }
  func.func @transform_4(%arg0: i32) -> (i32, i32, i32) {
    %c0_i32 = arith.constant 0 : i32
    %c0_i32_0 = arith.constant 0 : i32
    %c0_i32_1 = arith.constant 0 : i32
    %c0_i32_2 = arith.constant 0 : i32
    return %c0_i32, %c0_i32_0, %c0_i32_1 : i32, i32, i32
  }
  func.func @transform_5(%arg0: i32) -> (i32, i32, i32) {
    %c0_i32 = arith.constant 0 : i32
    %c0_i32_0 = arith.constant 0 : i32
    %c0_i32_1 = arith.constant 0 : i32
    %c0_i32_2 = arith.constant 0 : i32
    return %c0_i32, %c0_i32_0, %c0_i32_1 : i32, i32, i32
  }
  func.func @transform_6(%arg0: i32) -> (i32, i32, i32) {
    %c0_i32 = arith.constant 0 : i32
    %c0_i32_0 = arith.constant 0 : i32
    %c0_i32_1 = arith.constant 0 : i32
    %c0_i32_2 = arith.constant 0 : i32
    return %c0_i32, %c0_i32_0, %c0_i32_1 : i32, i32, i32
  }
  func.func @transform_7(%arg0: i32) -> (i32, i32, i32) {
    %c0_i32 = arith.constant 0 : i32
    %c0_i32_0 = arith.constant 0 : i32
    %c0_i32_1 = arith.constant 0 : i32
    %c0_i32_2 = arith.constant 0 : i32
    return %c0_i32, %c0_i32_0, %c0_i32_1 : i32, i32, i32
  }
  func.func @transform_8(%arg0: i32) -> (i32, i32, i32) {
    %c0_i32 = arith.constant 0 : i32
    %c0_i32_0 = arith.constant 0 : i32
    %c0_i32_1 = arith.constant 0 : i32
    %c0_i32_2 = arith.constant 0 : i32
    return %c0_i32, %c0_i32_0, %c0_i32_1 : i32, i32, i32
  }
  func.func @transform_9(%arg0: i32) -> (i32, i32, i32) {
    %c0_i32 = arith.constant 0 : i32
    %c0_i32_0 = arith.constant 0 : i32
    %c0_i32_1 = arith.constant 0 : i32
    %c0_i32_2 = arith.constant 0 : i32
    return %c0_i32, %c0_i32_0, %c0_i32_1 : i32, i32, i32
  }
  func.func @transform_10(%arg0: i32) -> (i32, i32, i32) {
    %c0_i32 = arith.constant 0 : i32
    %c0_i32_0 = arith.constant 0 : i32
    %c0_i32_1 = arith.constant 0 : i32
    %c0_i32_2 = arith.constant 0 : i32
    return %c0_i32, %c0_i32_0, %c0_i32_1 : i32, i32, i32
  }
  func.func @transform_11(%arg0: i32) -> (i32, i32, i32) {
    %c0_i32 = arith.constant 0 : i32
    %c0_i32_0 = arith.constant 0 : i32
    %c0_i32_1 = arith.constant 0 : i32
    %c0_i32_2 = arith.constant 0 : i32
    return %c0_i32, %c0_i32_0, %c0_i32_1 : i32, i32, i32
  }
  func.func @transform_12(%arg0: i32) -> (i32, i32) {
    %c0_i32 = arith.constant 0 : i32
    %c0_i32_0 = arith.constant 0 : i32
    %c0_i32_1 = arith.constant 0 : i32
    return %c0_i32, %c0_i32_0 : i32, i32
  }
  func.func @transform_13(%arg0: i32) -> (i32, i32, i32) {
    %c0_i32 = arith.constant 0 : i32
    %c0_i32_0 = arith.constant 0 : i32
    %c0_i32_1 = arith.constant 0 : i32
    return %arg0, %c0_i32, %c0_i32_0 : i32, i32, i32
  }
}

</mosaic_0001>

<llo_original>
// kernel: tpu_custom_call.1
$region0: #{tpu_custom_call.1}
  #allocation0 [shape = 'u32[]', space=smem, size = 0x4, offset = 0x4, fixed_abs, tag = 'smem constant byte address 0x4 - core index']
  #allocation1 [shape = 'u32[144,128]{1,0:T(1,128)}', space=vmem, size = 0x12000, scoped, tag = 'internal scratch']
  %s0 = inlined_call_operand.vmem [shape: f32[2,16,128], index: 0, kind: input, shape index: {}]
  %s1 = inlined_call_operand.vmem [shape: f32[2,1,128], index: 1, kind: input, shape index: {}]
  %s2 = inlined_call_operand.vmem [shape: f32[2,1,128], index: 2, kind: input, shape index: {}]
  %s3 = inlined_call_operand.vmem [shape: f32[3,8,16], index: 3, kind: input, shape index: {}]
  %s4 = inlined_call_operand.vmem [shape: f32[3,8,1], index: 4, kind: input, shape index: {}]
  %s5 = inlined_call_operand.vmem [shape: f32[3,8,16], index: 5, kind: input, shape index: {}]
  %s6 = inlined_call_operand.vmem [shape: f32[3,8,1], index: 6, kind: input, shape index: {}]
  %s7 = inlined_call_operand.vmem [shape: f32[3,8,16], index: 7, kind: input, shape index: {}]
  %s8 = inlined_call_operand.vmem [shape: f32[3,8,1], index: 8, kind: input, shape index: {}]
  %s9 = inlined_call_operand.vmem [shape: f32[3,16,8], index: 9, kind: input, shape index: {}]
  %s10 = inlined_call_operand.vmem [shape: f32[3,16,1], index: 10, kind: input, shape index: {}]
  %s11 = inlined_call_operand.vmem [shape: f32[3,16,16], index: 11, kind: input, shape index: {}]
  %s12 = inlined_call_operand.vmem [shape: f32[16,1], index: 12, kind: input, shape index: {}]
  %s13 = inlined_call_operand.hbm [shape: f32[2,16,128], index: 13, kind: output, shape index: {}]
  %s14 = sld [smem:[#allocation0]]
  $region85: #{tpu_custom_call.1} parent=0
    _
  %s16 = ssub.s32 1, %s14
  %s17 = scalar_select 0, %s16, %s14
  $region1: #{tpu_custom_call.1} parent=0
    #allocation2 [shape = 'u8[16384]{0}', space=vmem, size = 0x4000, scoped, tag = 'output window, operand 0']
    #allocation3 [shape = 's32[2]{0}', space=sflag, size = 0x8, scoped, tag = 'scoped memory for tpu_custom_call.1']
    %18 = vsyncpa [#allocation3], 0
    %s19 = scalar_lea.sflag [#allocation3], 1
    %20 = vsyncpa %s19, 0
    loop: start=0, step=1, limit=4
    $region2: #{tpu_custom_call.1} parent=1 // loop_pre_header
      _
    $region3: #{tpu_custom_call.1} parent=1 // loop_header
      %s22 = sphi 0, %s26
      %p23 = scmp.ge.s32.totalorder %s22, 4
      %s32 = sphi 0, %s34
      %s35 = sphi 0, %s32
      %s36 = sphi 0, %s35
      %s52 = sphi 0, %s36
      %s58 = sphi 0, %s60
      %s61 = sphi 0, %s58
      %s62 = sphi 0, %s61
      %s78 = sphi 0, %s62
      %s84 = sphi 0, %s86
      %s87 = sphi 0, %s84
      %s88 = sphi 0, %s87
      %s104 = sphi 0, %s88
      %s108 = sphi 0, %s108
      %s110 = sphi 0, %s108
      %s111 = sphi 0, %s110
      %s125 = sphi 0, %s111
      %s129 = sphi 0, %s129
      %s131 = sphi 0, %s129
      %s132 = sphi 0, %s131
      %s146 = sphi 0, %s132
      %s150 = sphi 0, %s150
      %s152 = sphi 0, %s150
      %s153 = sphi 0, %s152
      %s167 = sphi 0, %s153
      %s171 = sphi 0, %s171
      %s173 = sphi 0, %s171
      %s174 = sphi 0, %s173
      %s188 = sphi 0, %s174
      %s192 = sphi 0, %s192
      %s194 = sphi 0, %s192
      %s195 = sphi 0, %s194
      %s209 = sphi 0, %s195
      %s213 = sphi 0, %s213
      %s215 = sphi 0, %s213
      %s216 = sphi 0, %s215
      %s230 = sphi 0, %s216
      %s234 = sphi 0, %s234
      %s236 = sphi 0, %s234
      %s237 = sphi 0, %s236
      %s251 = sphi 0, %s237
      %s255 = sphi 0, %s255
      %s257 = sphi 0, %s255
      %s258 = sphi 0, %s257
      %s272 = sphi 0, %s258
      %s276 = sphi 0, %s276
      %s278 = sphi 0, %s276
      %s279 = sphi 0, %s278
      %s293 = sphi 0, %s279
      %s297 = sphi 0, %s297
      %s299 = sphi 0, %s297
      %s300 = sphi 0, %s299
      %s314 = sphi 0, %s300
      %s320 = sphi 0, %s322
      %s323 = sphi 0, %s320
      %s324 = sphi 0, %s323
      %s340 = sphi 0, %s324
    $region4: #{tpu_custom_call.1} parent=1 // loop_header_branch
      %25 = sbr.rel (%p23) target = $region8
    $region5: #{tpu_custom_call.1} parent=1 // loop_body
      %s27 = ssub.s32 %s22, 1
      %s28 = ssub.s32 %s22, 2
      %s29 = sadd.s32 %s22, 1
      %s30 = ssub.s32 %s22, %s29
      %p31 = scmp.eq.s32.totalorder %s30, 0
      %s33 = sadd.s32 %s32, 1
      %s34 = scalar_select %p31, %s32, %s33
      %p37 = pneg %p31
      %p38 = scmp.eq.s32.totalorder %s22, 1
      %p39 = por %p37, %p38
      %p40 = scmp.ne.s32.totalorder %s32, %s35
      %p41 = scmp.eq.s32.totalorder %s22, 0
      %p42 = por %p40, %p41
      %p43 = scmp.ne.s32.totalorder %s32, %s35
      %p44 = scmp.eq.s32.totalorder %s27, 1
      %p45 = por %p43, %p44
      %p46 = scmp.ne.s32.totalorder %s35, %s36
      %p47 = scmp.eq.s32.totalorder %s27, 0
      %p48 = por %p46, %p47
      %p49 = scmp.ne.s32.totalorder %s35, %s36
      %p50 = scmp.eq.s32.totalorder %s28, 1
      %p51 = por %p49, %p50
      %p53 = scmp.ne.s32.totalorder %s36, %s52
      %p54 = scmp.eq.s32.totalorder %s28, 0
      %p55 = por %p53, %p54
      %s56 = ssub.s32 %s22, %s29
      %p57 = scmp.eq.s32.totalorder %s56, 0
      %s59 = sadd.s32 %s58, 1
      %s60 = scalar_select %p57, %s58, %s59
      %p63 = pneg %p57
      %p64 = scmp.eq.s32.totalorder %s22, 1
      %p65 = por %p63, %p64
      %p66 = scmp.ne.s32.totalorder %s58, %s61
      %p67 = scmp.eq.s32.totalorder %s22, 0
      %p68 = por %p66, %p67
      %p69 = scmp.ne.s32.totalorder %s58, %s61
      %p70 = scmp.eq.s32.totalorder %s27, 1
      %p71 = por %p69, %p70
      %p72 = scmp.ne.s32.totalorder %s61, %s62
      %p73 = scmp.eq.s32.totalorder %s27, 0
      %p74 = por %p72, %p73
      %p75 = scmp.ne.s32.totalorder %s61, %s62
      %p76 = scmp.eq.s32.totalorder %s28, 1
      %p77 = por %p75, %p76
      %p79 = scmp.ne.s32.totalorder %s62, %s78
      %p80 = scmp.eq.s32.totalorder %s28, 0
      %p81 = por %p79, %p80
      %s82 = ssub.s32 %s22, %s29
      %p83 = scmp.eq.s32.totalorder %s82, 0
      %s85 = sadd.s32 %s84, 1
      %s86 = scalar_select %p83, %s84, %s85
      %p89 = pneg %p83
      %p90 = scmp.eq.s32.totalorder %s22, 1
      %p91 = por %p89, %p90
      %p92 = scmp.ne.s32.totalorder %s84, %s87
      %p93 = scmp.eq.s32.totalorder %s22, 0
      %p94 = por %p92, %p93
      %p95 = scmp.ne.s32.totalorder %s84, %s87
      %p96 = scmp.eq.s32.totalorder %s27, 1
      %p97 = por %p95, %p96
      %p98 = scmp.ne.s32.totalorder %s87, %s88
      %p99 = scmp.eq.s32.totalorder %s27, 0
      %p100 = por %p98, %p99
      %p101 = scmp.ne.s32.totalorder %s87, %s88
      %p102 = scmp.eq.s32.totalorder %s28, 1
      %p103 = por %p101, %p102
      %p105 = scmp.ne.s32.totalorder %s88, %s104
      %p106 = scmp.eq.s32.totalorder %s28, 0
      %p107 = por %p105, %p106
      %s109 = sadd.s32 %s108, 1
      %p112 = scmp.eq.s32.totalorder %s22, 1
      %p113 = scmp.ne.s32.totalorder %s108, %s110
      %p114 = scmp.eq.s32.totalorder %s22, 0
      %p115 = por %p113, %p114
      %p116 = scmp.ne.s32.totalorder %s108, %s110
      %p117 = scmp.eq.s32.totalorder %s27, 1
      %p118 = por %p116, %p117
      %p119 = scmp.ne.s32.totalorder %s110, %s111
      %p120 = scmp.eq.s32.totalorder %s27, 0
      %p121 = por %p119, %p120
      %p122 = scmp.ne.s32.totalorder %s110, %s111
      %p123 = scmp.eq.s32.totalorder %s28, 1
      %p124 = por %p122, %p123
      %p126 = scmp.ne.s32.totalorder %s111, %s125
      %p127 = scmp.eq.s32.totalorder %s28, 0
      %p128 = por %p126, %p127
      %s130 = sadd.s32 %s129, 1
      %p133 = scmp.eq.s32.totalorder %s22, 1
      %p134 = scmp.ne.s32.totalorder %s129, %s131
      %p135 = scmp.eq.s32.totalorder %s22, 0
      %p136 = por %p134, %p135
      %p137 = scmp.ne.s32.totalorder %s129, %s131
      %p138 = scmp.eq.s32.totalorder %s27, 1
      %p139 = por %p137, %p138
      %p140 = scmp.ne.s32.totalorder %s131, %s132
      %p141 = scmp.eq.s32.totalorder %s27, 0
      %p142 = por %p140, %p141
      %p143 = scmp.ne.s32.totalorder %s131, %s132
      %p144 = scmp.eq.s32.totalorder %s28, 1
      %p145 = por %p143, %p144
      %p147 = scmp.ne.s32.totalorder %s132, %s146
      %p148 = scmp.eq.s32.totalorder %s28, 0
      %p149 = por %p147, %p148
      %s151 = sadd.s32 %s150, 1
      %p154 = scmp.eq.s32.totalorder %s22, 1
      %p155 = scmp.ne.s32.totalorder %s150, %s152
      %p156 = scmp.eq.s32.totalorder %s22, 0
      %p157 = por %p155, %p156
      %p158 = scmp.ne.s32.totalorder %s150, %s152
      %p159 = scmp.eq.s32.totalorder %s27, 1
      %p160 = por %p158, %p159
      %p161 = scmp.ne.s32.totalorder %s152, %s153
      %p162 = scmp.eq.s32.totalorder %s27, 0
      %p163 = por %p161, %p162
      %p164 = scmp.ne.s32.totalorder %s152, %s153
      %p165 = scmp.eq.s32.totalorder %s28, 1
      %p166 = por %p164, %p165
      %p168 = scmp.ne.s32.totalorder %s153, %s167
      %p169 = scmp.eq.s32.totalorder %s28, 0
      %p170 = por %p168, %p169
      %s172 = sadd.s32 %s171, 1
      %p175 = scmp.eq.s32.totalorder %s22, 1
      %p176 = scmp.ne.s32.totalorder %s171, %s173
      %p177 = scmp.eq.s32.totalorder %s22, 0
      %p178 = por %p176, %p177
      %p179 = scmp.ne.s32.totalorder %s171, %s173
      %p180 = scmp.eq.s32.totalorder %s27, 1
      %p181 = por %p179, %p180
      %p182 = scmp.ne.s32.totalorder %s173, %s174
      %p183 = scmp.eq.s32.totalorder %s27, 0
      %p184 = por %p182, %p183
      %p185 = scmp.ne.s32.totalorder %s173, %s174
      %p186 = scmp.eq.s32.totalorder %s28, 1
      %p187 = por %p185, %p186
      %p189 = scmp.ne.s32.totalorder %s174, %s188
      %p190 = scmp.eq.s32.totalorder %s28, 0
      %p191 = por %p189, %p190
      %s193 = sadd.s32 %s192, 1
      %p196 = scmp.eq.s32.totalorder %s22, 1
      %p197 = scmp.ne.s32.totalorder %s192, %s194
      %p198 = scmp.eq.s32.totalorder %s22, 0
      %p199 = por %p197, %p198
      %p200 = scmp.ne.s32.totalorder %s192, %s194
      %p201 = scmp.eq.s32.totalorder %s27, 1
      %p202 = por %p200, %p201
      %p203 = scmp.ne.s32.totalorder %s194, %s195
      %p204 = scmp.eq.s32.totalorder %s27, 0
      %p205 = por %p203, %p204
      %p206 = scmp.ne.s32.totalorder %s194, %s195
      %p207 = scmp.eq.s32.totalorder %s28, 1
      %p208 = por %p206, %p207
      %p210 = scmp.ne.s32.totalorder %s195, %s209
      %p211 = scmp.eq.s32.totalorder %s28, 0
      %p212 = por %p210, %p211
      %s214 = sadd.s32 %s213, 1
      %p217 = scmp.eq.s32.totalorder %s22, 1
      %p218 = scmp.ne.s32.totalorder %s213, %s215
      %p219 = scmp.eq.s32.totalorder %s22, 0
      %p220 = por %p218, %p219
      %p221 = scmp.ne.s32.totalorder %s213, %s215
      %p222 = scmp.eq.s32.totalorder %s27, 1
      %p223 = por %p221, %p222
      %p224 = scmp.ne.s32.totalorder %s215, %s216
      %p225 = scmp.eq.s32.totalorder %s27, 0
      %p226 = por %p224, %p225
      %p227 = scmp.ne.s32.totalorder %s215, %s216
      %p228 = scmp.eq.s32.totalorder %s28, 1
      %p229 = por %p227, %p228
      %p231 = scmp.ne.s32.totalorder %s216, %s230
      %p232 = scmp.eq.s32.totalorder %s28, 0
      %p233 = por %p231, %p232
      %s235 = sadd.s32 %s234, 1
      %p238 = scmp.eq.s32.totalorder %s22, 1
      %p239 = scmp.ne.s32.totalorder %s234, %s236
      %p240 = scmp.eq.s32.totalorder %s22, 0
      %p241 = por %p239, %p240
      %p242 = scmp.ne.s32.totalorder %s234, %s236
      %p243 = scmp.eq.s32.totalorder %s27, 1
      %p244 = por %p242, %p243
      %p245 = scmp.ne.s32.totalorder %s236, %s237
      %p246 = scmp.eq.s32.totalorder %s27, 0
      %p247 = por %p245, %p246
      %p248 = scmp.ne.s32.totalorder %s236, %s237
      %p249 = scmp.eq.s32.totalorder %s28, 1
      %p250 = por %p248, %p249
      %p252 = scmp.ne.s32.totalorder %s237, %s251
      %p253 = scmp.eq.s32.totalorder %s28, 0
      %p254 = por %p252, %p253
      %s256 = sadd.s32 %s255, 1
      %p259 = scmp.eq.s32.totalorder %s22, 1
      %p260 = scmp.ne.s32.totalorder %s255, %s257
      %p261 = scmp.eq.s32.totalorder %s22, 0
      %p262 = por %p260, %p261
      %p263 = scmp.ne.s32.totalorder %s255, %s257
      %p264 = scmp.eq.s32.totalorder %s27, 1
      %p265 = por %p263, %p264
      %p266 = scmp.ne.s32.totalorder %s257, %s258
      %p267 = scmp.eq.s32.totalorder %s27, 0
      %p268 = por %p266, %p267
      %p269 = scmp.ne.s32.totalorder %s257, %s258
      %p270 = scmp.eq.s32.totalorder %s28, 1
      %p271 = por %p269, %p270
      %p273 = scmp.ne.s32.totalorder %s258, %s272
      %p274 = scmp.eq.s32.totalorder %s28, 0
      %p275 = por %p273, %p274
      %s277 = sadd.s32 %s276, 1
      %p280 = scmp.eq.s32.totalorder %s22, 1
      %p281 = scmp.ne.s32.totalorder %s276, %s278
      %p282 = scmp.eq.s32.totalorder %s22, 0
      %p283 = por %p281, %p282
      %p284 = scmp.ne.s32.totalorder %s276, %s278
      %p285 = scmp.eq.s32.totalorder %s27, 1
      %p286 = por %p284, %p285
      %p287 = scmp.ne.s32.totalorder %s278, %s279
      %p288 = scmp.eq.s32.totalorder %s27, 0
      %p289 = por %p287, %p288
      %p290 = scmp.ne.s32.totalorder %s278, %s279
      %p291 = scmp.eq.s32.totalorder %s28, 1
      %p292 = por %p290, %p291
      %p294 = scmp.ne.s32.totalorder %s279, %s293
      %p295 = scmp.eq.s32.totalorder %s28, 0
      %p296 = por %p294, %p295
      %s298 = sadd.s32 %s297, 1
      %p301 = scmp.eq.s32.totalorder %s22, 1
      %p302 = scmp.ne.s32.totalorder %s297, %s299
      %p303 = scmp.eq.s32.totalorder %s22, 0
      %p304 = por %p302, %p303
      %p305 = scmp.ne.s32.totalorder %s297, %s299
      %p306 = scmp.eq.s32.totalorder %s27, 1
      %p307 = por %p305, %p306
      %p308 = scmp.ne.s32.totalorder %s299, %s300
      %p309 = scmp.eq.s32.totalorder %s27, 0
      %p310 = por %p308, %p309
      %p311 = scmp.ne.s32.totalorder %s299, %s300
      %p312 = scmp.eq.s32.totalorder %s28, 1
      %p313 = por %p311, %p312
      %p315 = scmp.ne.s32.totalorder %s300, %s314
      %p316 = scmp.eq.s32.totalorder %s28, 0
      %p317 = por %p315, %p316
      %s318 = ssub.s32 %s22, %s29
      %p319 = scmp.eq.s32.totalorder %s318, 0
      %s321 = sadd.s32 %s320, 1
      %s322 = scalar_select %p319, %s320, %s321
      %p325 = pneg %p319
      %p326 = scmp.eq.s32.totalorder %s22, 1
      %p327 = por %p325, %p326
      %p328 = scmp.ne.s32.totalorder %s320, %s323
      %p329 = scmp.eq.s32.totalorder %s22, 0
      %p330 = por %p328, %p329
      %p331 = scmp.ne.s32.totalorder %s320, %s323
      %p332 = scmp.eq.s32.totalorder %s27, 1
      %p333 = por %p331, %p332
      %p334 = scmp.ne.s32.totalorder %s323, %s324
      %p335 = scmp.eq.s32.totalorder %s27, 0
      %p336 = por %p334, %p335
      %p337 = scmp.ne.s32.totalorder %s323, %s324
      %p338 = scmp.eq.s32.totalorder %s28, 1
      %p339 = por %p337, %p338
      %p341 = scmp.ne.s32.totalorder %s324, %s340
      %p342 = scmp.eq.s32.totalorder %s28, 0
      %p343 = por %p341, %p342
      %p344 = scmp.le.s32.totalorder 1, %s22
      %p345 = scmp.lt.s32.totalorder %s22, 3
      %p346 = pnand %p344, %p345
      %p347 = pneg %p346
      // Predicated region
      $region9: #{tpu_custom_call.1} parent=5 // pred_check
        _
      $region10: #{tpu_custom_call.1} parent=5 // pred_check_branch
        %349 = sbr.rel (%p346) target = $region12
      $region11: #{tpu_custom_call.1} parent=5 // pred_region
        %s350 = ssub.s32 %s22, 1
        // Predicated region
        $region13: #{tpu_custom_call.1} parent=11 // pred_check
          %p351 = pneg %p121
        $region14: #{tpu_custom_call.1} parent=11 // pred_check_branch
          %353 = sbr.rel (%p351) target = $region16
        $region15: #{tpu_custom_call.1} parent=11 // pred_region
          _
        $region16: #{tpu_custom_call.1} parent=11 // pred_fallthru
          _
        // Predicated region
        $region17: #{tpu_custom_call.1} parent=11 // pred_check
          %p354 = pneg %p142
        $region18: #{tpu_custom_call.1} parent=11 // pred_check_branch
          %356 = sbr.rel (%p354) target = $region20
        $region19: #{tpu_custom_call.1} parent=11 // pred_region
          _
        $region20: #{tpu_custom_call.1} parent=11 // pred_fallthru
          _
        // Predicated region
        $region21: #{tpu_custom_call.1} parent=11 // pred_check
          %p357 = pneg %p163
        $region22: #{tpu_custom_call.1} parent=11 // pred_check_branch
          %359 = sbr.rel (%p357) target = $region24
        $region23: #{tpu_custom_call.1} parent=11 // pred_region
          _
        $region24: #{tpu_custom_call.1} parent=11 // pred_fallthru
          _
        // Predicated region
        $region25: #{tpu_custom_call.1} parent=11 // pred_check
          %p360 = pneg %p184
        $region26: #{tpu_custom_call.1} parent=11 // pred_check_branch
          %362 = sbr.rel (%p360) target = $region28
        $region27: #{tpu_custom_call.1} parent=11 // pred_region
          _
        $region28: #{tpu_custom_call.1} parent=11 // pred_fallthru
          _
        // Predicated region
        $region29: #{tpu_custom_call.1} parent=11 // pred_check
          %p363 = pneg %p205
        $region30: #{tpu_custom_call.1} parent=11 // pred_check_branch
          %365 = sbr.rel (%p363) target = $region32
        $region31: #{tpu_custom_call.1} parent=11 // pred_region
          _
        $region32: #{tpu_custom_call.1} parent=11 // pred_fallthru
          _
        // Predicated region
        $region33: #{tpu_custom_call.1} parent=11 // pred_check
          %p366 = pneg %p226
        $region34: #{tpu_custom_call.1} parent=11 // pred_check_branch
          %368 = sbr.rel (%p366) target = $region36
        $region35: #{tpu_custom_call.1} parent=11 // pred_region
          _
        $region36: #{tpu_custom_call.1} parent=11 // pred_fallthru
          _
        // Predicated region
        $region37: #{tpu_custom_call.1} parent=11 // pred_check
          %p369 = pneg %p247
        $region38: #{tpu_custom_call.1} parent=11 // pred_check_branch
          %371 = sbr.rel (%p369) target = $region40
        $region39: #{tpu_custom_call.1} parent=11 // pred_region
          _
        $region40: #{tpu_custom_call.1} parent=11 // pred_fallthru
          _
        // Predicated region
        $region41: #{tpu_custom_call.1} parent=11 // pred_check
          %p372 = pneg %p268
        $region42: #{tpu_custom_call.1} parent=11 // pred_check_branch
          %374 = sbr.rel (%p372) target = $region44
        $region43: #{tpu_custom_call.1} parent=11 // pred_region
          _
        $region44: #{tpu_custom_call.1} parent=11 // pred_fallthru
          _
        // Predicated region
        $region45: #{tpu_custom_call.1} parent=11 // pred_check
          %p375 = pneg %p289
        $region46: #{tpu_custom_call.1} parent=11 // pred_check_branch
          %377 = sbr.rel (%p375) target = $region48
        $region47: #{tpu_custom_call.1} parent=11 // pred_region
          _
        $region48: #{tpu_custom_call.1} parent=11 // pred_fallthru
          _
        // Predicated region
        $region49: #{tpu_custom_call.1} parent=11 // pred_check
          %p378 = pneg %p310
        $region50: #{tpu_custom_call.1} parent=11 // pred_check_branch
          %380 = sbr.rel (%p378) target = $region52
        $region51: #{tpu_custom_call.1} parent=11 // pred_region
          _
        $region52: #{tpu_custom_call.1} parent=11 // pred_fallthru
          _
      $region12: #{tpu_custom_call.1} parent=5 // pred_fallthru
        _
      %p381 = scmp.lt.s32.totalorder %s22, 2
      // Predicated region
      $region53: #{tpu_custom_call.1} parent=5 // pred_check
        %p382 = pneg %p381
      $region54: #{tpu_custom_call.1} parent=5 // pred_check_branch
        %384 = sbr.rel (%p382) target = $region56
      $region55: #{tpu_custom_call.1} parent=5 // pred_region
        // Predicated region
        $region57: #{tpu_custom_call.1} parent=55 // pred_check
          %p385 = pneg %p42
        $region58: #{tpu_custom_call.1} parent=55 // pred_check_branch
          %387 = sbr.rel (%p385) target = $region60
        $region59: #{tpu_custom_call.1} parent=55 // pred_region
          %p388 = scmp.lt.s32.totalorder %s22, 1
          %s389 = scalar_select %p388, %s22, 1
          %s390 = smul.addr %s389, 2
          %s391 = smul.addr %s390, 8
          %s392 = scalar_lea.vmem %s0, %s391
        $region60: #{tpu_custom_call.1} parent=55 // pred_fallthru
          _
        // Predicated region
        $region61: #{tpu_custom_call.1} parent=55 // pred_check
          %p393 = pneg %p68
        $region62: #{tpu_custom_call.1} parent=55 // pred_check_branch
          %395 = sbr.rel (%p393) target = $region64
        $region63: #{tpu_custom_call.1} parent=55 // pred_region
          %p396 = scmp.lt.s32.totalorder %s22, 1
          %s397 = scalar_select %p396, %s22, 1
          %s398 = scalar_lea.vmem %s1, %s397
        $region64: #{tpu_custom_call.1} parent=55 // pred_fallthru
          _
        // Predicated region
        $region65: #{tpu_custom_call.1} parent=55 // pred_check
          %p399 = pneg %p94
        $region66: #{tpu_custom_call.1} parent=55 // pred_check_branch
          %401 = sbr.rel (%p399) target = $region68
        $region67: #{tpu_custom_call.1} parent=55 // pred_region
          %p402 = scmp.lt.s32.totalorder %s22, 1
          %s403 = scalar_select %p402, %s22, 1
          %s404 = scalar_lea.vmem %s2, %s403
        $region68: #{tpu_custom_call.1} parent=55 // pred_fallthru
          _
      $region56: #{tpu_custom_call.1} parent=5 // pred_fallthru
        _
      %p405 = scmp.le.s32.totalorder 1, %s22
      %p406 = scmp.lt.s32.totalorder %s22, 3
      %p407 = pnand %p405, %p406
      %p408 = pneg %p407
      // Predicated region
      $region69: #{tpu_custom_call.1} parent=5 // pred_check
        _
      $region70: #{tpu_custom_call.1} parent=5 // pred_check_branch
        %410 = sbr.rel (%p407) target = $region72
      $region71: #{tpu_custom_call.1} parent=5 // pred_region
        %s411 = ssub.s32 %s22, 1
        %p412 = scmp.lt.s32.totalorder %s27, 1
        %s413 = scalar_select %p412, %s27, 1
        %s414 = smul.addr %s413, 2
        %s415 = smul.addr %s414, 8
        %s416 = scalar_lea.vmem %s0, %s415
        %p417 = pneg %p48
        %p418 = pneg %p45
        %p419 = scmp.lt.s32.totalorder %s27, 1
        %s420 = scalar_select %p419, %s27, 1
        %s421 = scalar_lea.vmem %s1, %s420
        %p422 = pneg %p74
        %p423 = pneg %p71
        %p424 = scmp.lt.s32.totalorder %s27, 1
        %s425 = scalar_select %p424, %s27, 1
        %s426 = scalar_lea.vmem %s2, %s425
        %p427 = pneg %p100
        %p428 = pneg %p97
        %p429 = pneg %p121
        %p430 = pneg %p118
        %p431 = pneg %p142
        %p432 = pneg %p139
        %p433 = pneg %p163
        %p434 = pneg %p160
        %p435 = pneg %p184
        %p436 = pneg %p181
        %p437 = pneg %p205
        %p438 = pneg %p202
        %p439 = pneg %p226
        %p440 = pneg %p223
        %p441 = pneg %p247
        %p442 = pneg %p244
        %p443 = pneg %p268
        %p444 = pneg %p265
        %p445 = pneg %p289
        %p446 = pneg %p286
        %p447 = pneg %p310
        %p448 = pneg %p307
        %p449 = pneg %p336
        %p450 = pneg %p333
        %s451 = sand.u32 %s323, 1
        %s452 = scalar_lea.sflag [#allocation3], %s451
        %s453 = sand.u32 %s323, 1
        %s454 = smul.addr %s453, 16
        %s455 = scalar_lea.vmem [#allocation2], %s454
        %p456 = scmp.lt.s32.totalorder %s27, 1
        %s457 = scalar_select %p456, %s27, 1
        %s458 = smul.addr %s457, 2
        %s459 = smul.addr %s458, 8
        %s460 = scalar_lea.vmem %s0, %s459
        %p461 = scmp.lt.s32.totalorder %s27, 1
        %s462 = scalar_select %p461, %s27, 1
        %s463 = scalar_lea.vmem %s1, %s462
        %p464 = scmp.lt.s32.totalorder %s27, 1
        %s465 = scalar_select %p464, %s27, 1
        %s466 = scalar_lea.vmem %s2, %s465
        %v467 = vld [vmem:[%s460] sm:$0xff]
        %v468 = vld [vmem:[%s460 + $0x8] sm:$0xff]
        %v469 = vld [vmem:[%s463] sm:$0x1]
        %v470 = vld [vmem:[%s466] sm:$0x1]
        %v471 = vld [vmem:[%s3] sm:$0xff]
        %v472 = vld [vmem:[%s4] sm:$0xff]
        %474 = vset.pattern.permute.xlu0 0
        %475 = vperm.xlu0 %474, %v472
        %v476 = vpop.permute.xlu0 %475
        %vm478 = vcmask 130048
        %v480 = vsel %vm478, %v471, 0
        %482 = vmatprep.subr.mxu0 0.0
        %483 = vmatpush1.msra.mxu0 %v467
        %484 = vmatprep.subr.mxu0 0.0
        %485 = vmatpush1.msra.mxu0 %v468
        %486 = vmatprep.subr.mxu0 0.0
        %487 = vmatpush1.msra.mxu0 0.0
        %488 = vmatprep.subr.mxu0 0.0
        %489 = vmatpush1.msra.mxu0 0.0
        %490 = vmatprep.subr.mxu0 0.0
        %491 = vmatpush1.msra.mxu0 0.0
        %492 = vmatprep.subr.mxu0 0.0
        %493 = vmatpush1.msra.mxu0 0.0
        %494 = vmatprep.subr.mxu0 0.0
        %495 = vmatpush1.msra.mxu0 0.0
        %496 = vmatprep.subr.mxu0 0.0
        %497 = vmatpush1.msra.mxu0 0.0
        %498 = vmatprep.subr.mxu0 0.0
        %499 = vmatpush1.msra.mxu0 0.0
        %500 = vmatprep.subr.mxu0 0.0
        %501 = vmatpush1.msra.mxu0 0.0
        %502 = vmatprep.subr.mxu0 0.0
        %503 = vmatpush1.msra.mxu0 0.0
        %504 = vmatprep.subr.mxu0 0.0
        %505 = vmatpush1.msra.mxu0 0.0
        %506 = vmatprep.subr.mxu0 0.0
        %507 = vmatpush1.msra.mxu0 0.0
        %508 = vmatprep.subr.mxu0 0.0
        %509 = vmatpush1.msra.mxu0 0.0
        %510 = vmatprep.subr.mxu0 0.0
        %511 = vmatpush1.msra.mxu0 0.0
        %512 = vmatprep.subr.mxu0 0.0
        %513 = vmatpush1.msra.mxu0 0.0
        %514 = vmatprep.subr.mxu0 0.0
        %515 = vmatpush1.msra.mxu0 0.0
        %516 = vmatprep.subr.mxu0 0.0
        %517 = vmatpush1.msra.mxu0 0.0
        %518 = vmatprep.subr.mxu0 0.0
        %519 = vmatpush1.msra.mxu0 0.0
        %520 = vmatprep.subr.mxu0 0.0
        %521 = vmatpush1.msra.mxu0 0.0
        %522 = vmatprep.subr.mxu0 0.0
        %523 = vmatpush1.msra.mxu0 0.0
        %524 = vmatprep.subr.mxu0 0.0
        %525 = vmatpush1.msra.mxu0 0.0
        %526 = vmatprep.subr.mxu0 0.0
        %527 = vmatpush1.msra.mxu0 0.0
        %528 = vmatprep.subr.mxu0 0.0
        %529 = vmatpush1.msra.mxu0 0.0
        %530 = vmatprep.subr.mxu0 0.0
        %531 = vmatpush1.msra.mxu0 0.0
        %532 = vmatprep.subr.mxu0 0.0
        %533 = vmatpush1.msra.mxu0 0.0
        %534 = vmatprep.subr.mxu0 0.0
        %535 = vmatpush1.msra.mxu0 0.0
        %536 = vmatprep.subr.mxu0 0.0
        %537 = vmatpush1.msra.mxu0 0.0
        %538 = vmatprep.subr.mxu0 0.0
        %539 = vmatpush1.msra.mxu0 0.0
        %540 = vmatprep.subr.mxu0 0.0
        %541 = vmatpush1.msra.mxu0 0.0
        %542 = vmatprep.subr.mxu0 0.0
        %543 = vmatpush1.msra.mxu0 0.0
        %544 = vmatprep.subr.mxu0 0.0
        %545 = vmatpush1.msra.mxu0 0.0
        %546 = vmatprep.mubr.f32.mxu0 0.0
        %547 = vmatmul.mubr.f32.gmra.mrb[0].mxu0 %v480
        %v548 = vpop.f32.mrb[0].mxu0
        %v549 = vadd.f32 %v476, %v548
        %v550 = vpop.f32.mrb[0].mxu0
        %551 = vdwg.mxu0
        %v552 = vld [vmem:[%s5] sm:$0xff]
        %v553 = vld [vmem:[%s6] sm:$0xff]
        %555 = vset.pattern.permute.xlu0 0
        %556 = vperm.xlu0 %555, %v553
        %v557 = vpop.permute.xlu0 %556
        %v560 = vsel %vm478, %v552, 0
        %562 = vmatprep.subr.mxu0 0.0
        %563 = vmatpush1.msra.mxu0 %v467
        %564 = vmatprep.subr.mxu0 0.0
        %565 = vmatpush1.msra.mxu0 %v468
        %566 = vmatprep.subr.mxu0 0.0
        %567 = vmatpush1.msra.mxu0 0.0
        %568 = vmatprep.subr.mxu0 0.0
        %569 = vmatpush1.msra.mxu0 0.0
        %570 = vmatprep.subr.mxu0 0.0
        %571 = vmatpush1.msra.mxu0 0.0
        %572 = vmatprep.subr.mxu0 0.0
        %573 = vmatpush1.msra.mxu0 0.0
        %574 = vmatprep.subr.mxu0 0.0
        %575 = vmatpush1.msra.mxu0 0.0
        %576 = vmatprep.subr.mxu0 0.0
        %577 = vmatpush1.msra.mxu0 0.0
        %578 = vmatprep.subr.mxu0 0.0
        %579 = vmatpush1.msra.mxu0 0.0
        %580 = vmatprep.subr.mxu0 0.0
        %581 = vmatpush1.msra.mxu0 0.0
        %582 = vmatprep.subr.mxu0 0.0
        %583 = vmatpush1.msra.mxu0 0.0
        %584 = vmatprep.subr.mxu0 0.0
        %585 = vmatpush1.msra.mxu0 0.0
        %586 = vmatprep.subr.mxu0 0.0
        %587 = vmatpush1.msra.mxu0 0.0
        %588 = vmatprep.subr.mxu0 0.0
        %589 = vmatpush1.msra.mxu0 0.0
        %590 = vmatprep.subr.mxu0 0.0
        %591 = vmatpush1.msra.mxu0 0.0
        %592 = vmatprep.subr.mxu0 0.0
        %593 = vmatpush1.msra.mxu0 0.0
        %594 = vmatprep.subr.mxu0 0.0
        %595 = vmatpush1.msra.mxu0 0.0
        %596 = vmatprep.subr.mxu0 0.0
        %597 = vmatpush1.msra.mxu0 0.0
        %598 = vmatprep.subr.mxu0 0.0
        %599 = vmatpush1.msra.mxu0 0.0
        %600 = vmatprep.subr.mxu0 0.0
        %601 = vmatpush1.msra.mxu0 0.0
        %602 = vmatprep.subr.mxu0 0.0
        %603 = vmatpush1.msra.mxu0 0.0
        %604 = vmatprep.subr.mxu0 0.0
        %605 = vmatpush1.msra.mxu0 0.0
        %606 = vmatprep.subr.mxu0 0.0
        %607 = vmatpush1.msra.mxu0 0.0
        %608 = vmatprep.subr.mxu0 0.0
        %609 = vmatpush1.msra.mxu0 0.0
        %610 = vmatprep.subr.mxu0 0.0
        %611 = vmatpush1.msra.mxu0 0.0
        %612 = vmatprep.subr.mxu0 0.0
        %613 = vmatpush1.msra.mxu0 0.0
        %614 = vmatprep.subr.mxu0 0.0
        %615 = vmatpush1.msra.mxu0 0.0
        %616 = vmatprep.subr.mxu0 0.0
        %617 = vmatpush1.msra.mxu0 0.0
        %618 = vmatprep.subr.mxu0 0.0
        %619 = vmatpush1.msra.mxu0 0.0
        %620 = vmatprep.subr.mxu0 0.0
        %621 = vmatpush1.msra.mxu0 0.0
        %622 = vmatprep.subr.mxu0 0.0
        %623 = vmatpush1.msra.mxu0 0.0
        %624 = vmatprep.subr.mxu0 0.0
        %625 = vmatpush1.msra.mxu0 0.0
        %626 = vmatprep.mubr.f32.mxu0 0.0
        %627 = vmatmul.mubr.f32.gmra.mrb[0].mxu0 %v560
        %v628 = vpop.f32.mrb[0].mxu0
        %v629 = vadd.f32 %v557, %v628
        %v630 = vpop.f32.mrb[0].mxu0
        %631 = vdwg.mxu0
        %v632 = vld [vmem:[%s7] sm:$0xff]
        %v633 = vld [vmem:[%s8] sm:$0xff]
        %635 = vset.pattern.permute.xlu0 0
        %636 = vperm.xlu0 %635, %v633
        %v637 = vpop.permute.xlu0 %636
        %v640 = vsel %vm478, %v632, 0
        %642 = vmatprep.subr.mxu0 0.0
        %643 = vmatpush1.msra.mxu0 %v467
        %644 = vmatprep.subr.mxu0 0.0
        %645 = vmatpush1.msra.mxu0 %v468
        %646 = vmatprep.subr.mxu0 0.0
        %647 = vmatpush1.msra.mxu0 0.0
        %648 = vmatprep.subr.mxu0 0.0
        %649 = vmatpush1.msra.mxu0 0.0
        %650 = vmatprep.subr.mxu0 0.0
        %651 = vmatpush1.msra.mxu0 0.0
        %652 = vmatprep.subr.mxu0 0.0
        %653 = vmatpush1.msra.mxu0 0.0
        %654 = vmatprep.subr.mxu0 0.0
        %655 = vmatpush1.msra.mxu0 0.0
        %656 = vmatprep.subr.mxu0 0.0
        %657 = vmatpush1.msra.mxu0 0.0
        %658 = vmatprep.subr.mxu0 0.0
        %659 = vmatpush1.msra.mxu0 0.0
        %660 = vmatprep.subr.mxu0 0.0
        %661 = vmatpush1.msra.mxu0 0.0
        %662 = vmatprep.subr.mxu0 0.0
        %663 = vmatpush1.msra.mxu0 0.0
        %664 = vmatprep.subr.mxu0 0.0
        %665 = vmatpush1.msra.mxu0 0.0
        %666 = vmatprep.subr.mxu0 0.0
        %667 = vmatpush1.msra.mxu0 0.0
        %668 = vmatprep.subr.mxu0 0.0
        %669 = vmatpush1.msra.mxu0 0.0
        %670 = vmatprep.subr.mxu0 0.0
        %671 = vmatpush1.msra.mxu0 0.0
        %672 = vmatprep.subr.mxu0 0.0
        %673 = vmatpush1.msra.mxu0 0.0
        %674 = vmatprep.subr.mxu0 0.0
        %675 = vmatpush1.msra.mxu0 0.0
        %676 = vmatprep.subr.mxu0 0.0
        %677 = vmatpush1.msra.mxu0 0.0
        %678 = vmatprep.subr.mxu0 0.0
        %679 = vmatpush1.msra.mxu0 0.0
        %680 = vmatprep.subr.mxu0 0.0
        %681 = vmatpush1.msra.mxu0 0.0
        %682 = vmatprep.subr.mxu0 0.0
        %683 = vmatpush1.msra.mxu0 0.0
        %684 = vmatprep.subr.mxu0 0.0
        %685 = vmatpush1.msra.mxu0 0.0
        %686 = vmatprep.subr.mxu0 0.0
        %687 = vmatpush1.msra.mxu0 0.0
        %688 = vmatprep.subr.mxu0 0.0
        %689 = vmatpush1.msra.mxu0 0.0
        %690 = vmatprep.subr.mxu0 0.0
        %691 = vmatpush1.msra.mxu0 0.0
        %692 = vmatprep.subr.mxu0 0.0
        %693 = vmatpush1.msra.mxu0 0.0
        %694 = vmatprep.subr.mxu0 0.0
        %695 = vmatpush1.msra.mxu0 0.0
        %696 = vmatprep.subr.mxu0 0.0
        %697 = vmatpush1.msra.mxu0 0.0
        %698 = vmatprep.subr.mxu0 0.0
        %699 = vmatpush1.msra.mxu0 0.0
        %700 = vmatprep.subr.mxu0 0.0
        %701 = vmatpush1.msra.mxu0 0.0
        %702 = vmatprep.subr.mxu0 0.0
        %703 = vmatpush1.msra.mxu0 0.0
        %704 = vmatprep.subr.mxu0 0.0
        %705 = vmatpush1.msra.mxu0 0.0
        %706 = vmatprep.mubr.f32.mxu0 0.0
        %707 = vmatmul.mubr.f32.gmra.mrb[0].mxu0 %v640
        %v708 = vpop.f32.mrb[0].mxu0
        %v709 = vadd.f32 %v637, %v708
        %v710 = vpop.f32.mrb[0].mxu0
        %711 = vdwg.mxu0
        %v713 = vlaneseq
        %v714 = vshrl.u32 %v713, 7
        %v715 = vsub.s32 0, %v714
        %v716 = vrot.slane %v470, %v715
        %718 = vxpose.xlu0.b32.start [1/16] %v549, 128
        %719 = vxpose.xlu0.b32.cont [2/16] 0.0, 128
        %720 = vxpose.xlu0.b32.cont [3/16] 0.0, 128
        %721 = vxpose.xlu0.b32.cont [4/16] 0.0, 128
        %722 = vxpose.xlu0.b32.cont [5/16] 0.0, 128
        %723 = vxpose.xlu0.b32.cont [6/16] 0.0, 128
        %724 = vxpose.xlu0.b32.cont [7/16] 0.0, 128
        %725 = vxpose.xlu0.b32.cont [8/16] 0.0, 128
        %726 = vxpose.xlu0.b32.cont [9/16] 0.0, 128
        %727 = vxpose.xlu0.b32.cont [10/16] 0.0, 128
        %728 = vxpose.xlu0.b32.cont [11/16] 0.0, 128
        %729 = vxpose.xlu0.b32.cont [12/16] 0.0, 128
        %730 = vxpose.xlu0.b32.cont [13/16] 0.0, 128
        %731 = vxpose.xlu0.b32.cont [14/16] 0.0, 128
        %732 = vxpose.xlu0.b32.cont [15/16] 0.0, 128
        %733 = vxpose.xlu0.b32.end [16/16] 0.0, 128
        %v734 = vpop.trf.xlu0
        %v735 = vpop.trf.xlu0
        %v736 = vpop.trf.xlu0
        %v737 = vpop.trf.xlu0
        %v738 = vpop.trf.xlu0
        %v739 = vpop.trf.xlu0
        %v740 = vpop.trf.xlu0
        %v741 = vpop.trf.xlu0
        %v742 = vpop.trf.xlu0
        %v743 = vpop.trf.xlu0
        %v744 = vpop.trf.xlu0
        %v745 = vpop.trf.xlu0
        %v746 = vpop.trf.xlu0
        %v747 = vpop.trf.xlu0
        %v748 = vpop.trf.xlu0
        %v749 = vpop.trf.xlu0
        %vm750 = vcmask 64512
        %v752 = vsel %vm750, %v734, 0
        %v755 = vsel %vm750, %v735, 0
        %v758 = vsel %vm750, %v736, 0
        %v761 = vsel %vm750, %v737, 0
        %v764 = vsel %vm750, %v738, 0
        %v767 = vsel %vm750, %v739, 0
        %v770 = vsel %vm750, %v740, 0
        %v773 = vsel %vm750, %v741, 0
        %v776 = vsel %vm750, %v742, 0
        %v779 = vsel %vm750, %v743, 0
        %v782 = vsel %vm750, %v744, 0
        %v785 = vsel %vm750, %v745, 0
        %v788 = vsel %vm750, %v746, 0
        %v791 = vsel %vm750, %v747, 0
        %v794 = vsel %vm750, %v748, 0
        %v797 = vsel %vm750, %v749, 0
        %799 = vmatprep.subr.mxu0 0.0
        %800 = vmatpush1.msra.mxu0 %v629
        %801 = vmatprep.subr.mxu0 0.0
        %802 = vmatpush1.msra.mxu0 0.0
        %803 = vmatprep.subr.mxu0 0.0
        %804 = vmatpush1.msra.mxu0 0.0
        %805 = vmatprep.subr.mxu0 0.0
        %806 = vmatpush1.msra.mxu0 0.0
        %807 = vmatprep.subr.mxu0 0.0
        %808 = vmatpush1.msra.mxu0 0.0
        %809 = vmatprep.subr.mxu0 0.0
        %810 = vmatpush1.msra.mxu0 0.0
        %811 = vmatprep.subr.mxu0 0.0
        %812 = vmatpush1.msra.mxu0 0.0
        %813 = vmatprep.subr.mxu0 0.0
        %814 = vmatpush1.msra.mxu0 0.0
        %815 = vmatprep.subr.mxu0 0.0
        %816 = vmatpush1.msra.mxu0 0.0
        %817 = vmatprep.subr.mxu0 0.0
        %818 = vmatpush1.msra.mxu0 0.0
        %819 = vmatprep.subr.mxu0 0.0
        %820 = vmatpush1.msra.mxu0 0.0
        %821 = vmatprep.subr.mxu0 0.0
        %822 = vmatpush1.msra.mxu0 0.0
        %823 = vmatprep.subr.mxu0 0.0
        %824 = vmatpush1.msra.mxu0 0.0
        %825 = vmatprep.subr.mxu0 0.0
        %826 = vmatpush1.msra.mxu0 0.0
        %827 = vmatprep.subr.mxu0 0.0
        %828 = vmatpush1.msra.mxu0 0.0
        %829 = vmatprep.subr.mxu0 0.0
        %830 = vmatpush1.msra.mxu0 0.0
        %831 = vmatprep.subr.mxu0 0.0
        %832 = vmatpush1.msra.mxu0 0.0
        %833 = vmatprep.subr.mxu0 0.0
        %834 = vmatpush1.msra.mxu0 0.0
        %835 = vmatprep.subr.mxu0 0.0
        %836 = vmatpush1.msra.mxu0 0.0
        %837 = vmatprep.subr.mxu0 0.0
        %838 = vmatpush1.msra.mxu0 0.0
        %839 = vmatprep.subr.mxu0 0.0
        %840 = vmatpush1.msra.mxu0 0.0
        %841 = vmatprep.subr.mxu0 0.0
        %842 = vmatpush1.msra.mxu0 0.0
        %843 = vmatprep.subr.mxu0 0.0
        %844 = vmatpush1.msra.mxu0 0.0
        %845 = vmatprep.subr.mxu0 0.0
        %846 = vmatpush1.msra.mxu0 0.0
        %847 = vmatprep.subr.mxu0 0.0
        %848 = vmatpush1.msra.mxu0 0.0
        %849 = vmatprep.subr.mxu0 0.0
        %850 = vmatpush1.msra.mxu0 0.0
        %851 = vmatprep.subr.mxu0 0.0
        %852 = vmatpush1.msra.mxu0 0.0
        %853 = vmatprep.subr.mxu0 0.0
        %854 = vmatpush1.msra.mxu0 0.0
        %855 = vmatprep.subr.mxu0 0.0
        %856 = vmatpush1.msra.mxu0 0.0
        %857 = vmatprep.subr.mxu0 0.0
        %858 = vmatpush1.msra.mxu0 0.0
        %859 = vmatprep.subr.mxu0 0.0
        %860 = vmatpush1.msra.mxu0 0.0
        %861 = vmatprep.subr.mxu0 0.0
        %862 = vmatpush1.msra.mxu0 0.0
        %863 = vmatprep.mubr.f32.mxu0 0.0
        %864 = vmatmul.mubr.f32.gmra.mrb[0].mxu0 %v752
        %v865 = vpop.f32.mrb[0].mxu0
        %v866 = vadd.f32 %v716, %v865
        %v867 = vpop.f32.mrb[0].mxu0
        %868 = vmatprep.mubr.f32.mxu0 0.0
        %869 = vmatmul.mubr.f32.gmra.mrb[0].mxu0 %v755
        %v870 = vpop.f32.mrb[0].mxu0
        %v871 = vadd.f32 %v716, %v870
        %v872 = vpop.f32.mrb[0].mxu0
        %873 = vmatprep.mubr.f32.mxu0 0.0
        %874 = vmatmul.mubr.f32.gmra.mrb[0].mxu0 %v758
        %v875 = vpop.f32.mrb[0].mxu0
        %v876 = vadd.f32 %v716, %v875
        %v877 = vpop.f32.mrb[0].mxu0
        %878 = vmatprep.mubr.f32.mxu0 0.0
        %879 = vmatmul.mubr.f32.gmra.mrb[0].mxu0 %v761
        %v880 = vpop.f32.mrb[0].mxu0
        %v881 = vadd.f32 %v716, %v880
        %v882 = vpop.f32.mrb[0].mxu0
        %883 = vmatprep.mubr.f32.mxu0 0.0
        %884 = vmatmul.mubr.f32.gmra.mrb[0].mxu0 %v764
        %v885 = vpop.f32.mrb[0].mxu0
        %v886 = vadd.f32 %v716, %v885
        %v887 = vpop.f32.mrb[0].mxu0
        %888 = vmatprep.mubr.f32.mxu0 0.0
        %889 = vmatmul.mubr.f32.gmra.mrb[0].mxu0 %v767
        %v890 = vpop.f32.mrb[0].mxu0
        %v891 = vadd.f32 %v716, %v890
        %v892 = vpop.f32.mrb[0].mxu0
        %893 = vmatprep.mubr.f32.mxu0 0.0
        %894 = vmatmul.mubr.f32.gmra.mrb[0].mxu0 %v770
        %v895 = vpop.f32.mrb[0].mxu0
        %v896 = vadd.f32 %v716, %v895
        %v897 = vpop.f32.mrb[0].mxu0
        %898 = vmatprep.mubr.f32.mxu0 0.0
        %899 = vmatmul.mubr.f32.gmra.mrb[0].mxu0 %v773
        %v900 = vpop.f32.mrb[0].mxu0
        %v901 = vadd.f32 %v716, %v900
        %v902 = vpop.f32.mrb[0].mxu0
        %903 = vmatprep.mubr.f32.mxu0 0.0
        %904 = vmatmul.mubr.f32.gmra.mrb[0].mxu0 %v776
        %v905 = vpop.f32.mrb[0].mxu0
        %v906 = vadd.f32 %v716, %v905
        %v907 = vpop.f32.mrb[0].mxu0
        %908 = vmatprep.mubr.f32.mxu0 0.0
        %909 = vmatmul.mubr.f32.gmra.mrb[0].mxu0 %v779
        %v910 = vpop.f32.mrb[0].mxu0
        %v911 = vadd.f32 %v716, %v910
        %v912 = vpop.f32.mrb[0].mxu0
        %913 = vmatprep.mubr.f32.mxu0 0.0
        %914 = vmatmul.mubr.f32.gmra.mrb[0].mxu0 %v782
        %v915 = vpop.f32.mrb[0].mxu0
        %v916 = vadd.f32 %v716, %v915
        %v917 = vpop.f32.mrb[0].mxu0
        %918 = vmatprep.mubr.f32.mxu0 0.0
        %919 = vmatmul.mubr.f32.gmra.mrb[0].mxu0 %v785
        %v920 = vpop.f32.mrb[0].mxu0
        %v921 = vadd.f32 %v716, %v920
        %v922 = vpop.f32.mrb[0].mxu0
        %923 = vmatprep.mubr.f32.mxu0 0.0
        %924 = vmatmul.mubr.f32.gmra.mrb[0].mxu0 %v788
        %v925 = vpop.f32.mrb[0].mxu0
        %v926 = vadd.f32 %v716, %v925
        %v927 = vpop.f32.mrb[0].mxu0
        %928 = vmatprep.mubr.f32.mxu0 0.0
        %929 = vmatmul.mubr.f32.gmra.mrb[0].mxu0 %v791
        %v930 = vpop.f32.mrb[0].mxu0
        %v931 = vadd.f32 %v716, %v930
        %v932 = vpop.f32.mrb[0].mxu0
        %933 = vmatprep.mubr.f32.mxu0 0.0
        %934 = vmatmul.mubr.f32.gmra.mrb[0].mxu0 %v794
        %v935 = vpop.f32.mrb[0].mxu0
        %v936 = vadd.f32 %v716, %v935
        %v937 = vpop.f32.mrb[0].mxu0
        %938 = vmatprep.mubr.f32.mxu0 0.0
        %939 = vmatmul.mubr.f32.gmra.mrb[0].mxu0 %v797
        %v940 = vpop.f32.mrb[0].mxu0
        %v941 = vadd.f32 %v716, %v940
        %v942 = vpop.f32.mrb[0].mxu0
        %943 = vdwg.mxu0
        %944 = vmax.xlane.f32.xlu0 %v866
        %v945 = vpop.xlane.xlu0 %944
        %946 = vmax.xlane.f32.xlu0 %v871
        %v947 = vpop.xlane.xlu0 %946
        %948 = vmax.xlane.f32.xlu0 %v876
        %v949 = vpop.xlane.xlu0 %948
        %950 = vmax.xlane.f32.xlu0 %v881
        %v951 = vpop.xlane.xlu0 %950
        %952 = vmax.xlane.f32.xlu0 %v886
        %v953 = vpop.xlane.xlu0 %952
        %954 = vmax.xlane.f32.xlu0 %v891
        %v955 = vpop.xlane.xlu0 %954
        %956 = vmax.xlane.f32.xlu0 %v896
        %v957 = vpop.xlane.xlu0 %956
        %958 = vmax.xlane.f32.xlu0 %v901
        %v959 = vpop.xlane.xlu0 %958
        %960 = vmax.xlane.f32.xlu0 %v906
        %v961 = vpop.xlane.xlu0 %960
        %962 = vmax.xlane.f32.xlu0 %v911
        %v963 = vpop.xlane.xlu0 %962
        %964 = vmax.xlane.f32.xlu0 %v916
        %v965 = vpop.xlane.xlu0 %964
        %966 = vmax.xlane.f32.xlu0 %v921
        %v967 = vpop.xlane.xlu0 %966
        %968 = vmax.xlane.f32.xlu0 %v926
        %v969 = vpop.xlane.xlu0 %968
        %970 = vmax.xlane.f32.xlu0 %v931
        %v971 = vpop.xlane.xlu0 %970
        %972 = vmax.xlane.f32.xlu0 %v936
        %v973 = vpop.xlane.xlu0 %972
        %974 = vmax.xlane.f32.xlu0 %v941
        %v975 = vpop.xlane.xlu0 %974
        %v976 = vsub.f32 %v866, %v945
        %v977 = vsub.f32 %v871, %v947
        %v978 = vsub.f32 %v876, %v949
        %v979 = vsub.f32 %v881, %v951
        %v980 = vsub.f32 %v886, %v953
        %v981 = vsub.f32 %v891, %v955
        %v982 = vsub.f32 %v896, %v957
        %v983 = vsub.f32 %v901, %v959
        %v984 = vsub.f32 %v906, %v961
        %v985 = vsub.f32 %v911, %v963
        %v986 = vsub.f32 %v916, %v965
        %v987 = vsub.f32 %v921, %v967
        %v988 = vsub.f32 %v926, %v969
        %v989 = vsub.f32 %v931, %v971
        %v990 = vsub.f32 %v936, %v973
        %v991 = vsub.f32 %v941, %v975
        %v992 = vmul.f32 %v976, 1.442695
        %v993 = vpow.pop %v992
        %v994 = vmul.f32 %v977, 1.442695
        %v995 = vpow.pop %v994
        %v996 = vmul.f32 %v978, 1.442695
        %v997 = vpow.pop %v996
        %v998 = vmul.f32 %v979, 1.442695
        %v999 = vpow.pop %v998
        %v1000 = vmul.f32 %v980, 1.442695
        %v1001 = vpow.pop %v1000
        %v1002 = vmul.f32 %v981, 1.442695
        %v1003 = vpow.pop %v1002
        %v1004 = vmul.f32 %v982, 1.442695
        %v1005 = vpow.pop %v1004
        %v1006 = vmul.f32 %v983, 1.442695
        %v1007 = vpow.pop %v1006
        %v1008 = vmul.f32 %v984, 1.442695
        %v1009 = vpow.pop %v1008
        %v1010 = vmul.f32 %v985, 1.442695
        %v1011 = vpow.pop %v1010
        %v1012 = vmul.f32 %v986, 1.442695
        %v1013 = vpow.pop %v1012
        %v1014 = vmul.f32 %v987, 1.442695
        %v1015 = vpow.pop %v1014
        %v1016 = vmul.f32 %v988, 1.442695
        %v1017 = vpow.pop %v1016
        %v1018 = vmul.f32 %v989, 1.442695
        %v1019 = vpow.pop %v1018
        %v1020 = vmul.f32 %v990, 1.442695
        %v1021 = vpow.pop %v1020
        %v1022 = vmul.f32 %v991, 1.442695
        %v1023 = vpow.pop %v1022
        %1024 = vadd.xlane.f32.xlu0 %v993
        %v1025 = vpop.xlane.xlu0 %1024
        %1026 = vadd.xlane.f32.xlu0 %v995
        %v1027 = vpop.xlane.xlu0 %1026
        %1028 = vadd.xlane.f32.xlu0 %v997
        %v1029 = vpop.xlane.xlu0 %1028
        %1030 = vadd.xlane.f32.xlu0 %v999
        %v1031 = vpop.xlane.xlu0 %1030
        %1032 = vadd.xlane.f32.xlu0 %v1001
        %v1033 = vpop.xlane.xlu0 %1032
        %1034 = vadd.xlane.f32.xlu0 %v1003
        %v1035 = vpop.xlane.xlu0 %1034
        %1036 = vadd.xlane.f32.xlu0 %v1005
        %v1037 = vpop.xlane.xlu0 %1036
        %1038 = vadd.xlane.f32.xlu0 %v1007
        %v1039 = vpop.xlane.xlu0 %1038
        %1040 = vadd.xlane.f32.xlu0 %v1009
        %v1041 = vpop.xlane.xlu0 %1040
        %1042 = vadd.xlane.f32.xlu0 %v1011
        %v1043 = vpop.xlane.xlu0 %1042
        %1044 = vadd.xlane.f32.xlu0 %v1013
        %v1045 = vpop.xlane.xlu0 %1044
        %1046 = vadd.xlane.f32.xlu0 %v1015
        %v1047 = vpop.xlane.xlu0 %1046
        %1048 = vadd.xlane.f32.xlu0 %v1017
        %v1049 = vpop.xlane.xlu0 %1048
        %1050 = vadd.xlane.f32.xlu0 %v1019
        %v1051 = vpop.xlane.xlu0 %1050
        %1052 = vadd.xlane.f32.xlu0 %v1021
        %v1053 = vpop.xlane.xlu0 %1052
        %1054 = vadd.xlane.f32.xlu0 %v1023
        %v1055 = vpop.xlane.xlu0 %1054
        %v1056 = vrcp.pop %v1025
        %v1057 = vrcp.pop %v1027
        %v1058 = vrcp.pop %v1029
        %v1059 = vrcp.pop %v1031
        %v1060 = vrcp.pop %v1033
        %v1061 = vrcp.pop %v1035
        %v1062 = vrcp.pop %v1037
        %v1063 = vrcp.pop %v1039
        %v1064 = vrcp.pop %v1041
        %v1065 = vrcp.pop %v1043
        %v1066 = vrcp.pop %v1045
        %v1067 = vrcp.pop %v1047
        %v1068 = vrcp.pop %v1049
        %v1069 = vrcp.pop %v1051
        %v1070 = vrcp.pop %v1053
        %v1071 = vrcp.pop %v1055
        %v1072 = vmul.f32 %v993, %v1056
        %v1073 = vmul.f32 %v995, %v1057
        %v1074 = vmul.f32 %v997, %v1058
        %v1075 = vmul.f32 %v999, %v1059
        %v1076 = vmul.f32 %v1001, %v1060
        %v1077 = vmul.f32 %v1003, %v1061
        %v1078 = vmul.f32 %v1005, %v1062
        %v1079 = vmul.f32 %v1007, %v1063
        %v1080 = vmul.f32 %v1009, %v1064
        %v1081 = vmul.f32 %v1011, %v1065
        %v1082 = vmul.f32 %v1013, %v1066
        %v1083 = vmul.f32 %v1015, %v1067
        %v1084 = vmul.f32 %v1017, %v1068
        %v1085 = vmul.f32 %v1019, %v1069
        %v1086 = vmul.f32 %v1021, %v1070
        %v1087 = vmul.f32 %v1023, %v1071
        %v1089 = vlaneseq
        %v1090 = vshrl.u32 %v1089, 7
        %v1091 = vsub.s32 0, %v1090
        %v1092 = vrot.slane %v469, %v1091
        %v1094 = vmul.f32 %v1072, %v1092
        %v1095 = vmul.f32 %v1073, %v1092
        %v1096 = vmul.f32 %v1074, %v1092
        %v1097 = vmul.f32 %v1075, %v1092
        %v1098 = vmul.f32 %v1076, %v1092
        %v1099 = vmul.f32 %v1077, %v1092
        %v1100 = vmul.f32 %v1078, %v1092
        %v1101 = vmul.f32 %v1079, %v1092
        %v1102 = vmul.f32 %v1080, %v1092
        %v1103 = vmul.f32 %v1081, %v1092
        %v1104 = vmul.f32 %v1082, %v1092
        %v1105 = vmul.f32 %v1083, %v1092
        %v1106 = vmul.f32 %v1084, %v1092
        %v1107 = vmul.f32 %v1085, %v1092
        %v1108 = vmul.f32 %v1086, %v1092
        %v1109 = vmul.f32 %v1087, %v1092
        %1110 = vmatprep.subr.mxu0 0.0
        %1111 = vmatpush1.xpose.msra.mxu0 %v1094
        %1112 = vmatprep.subr.mxu0 0.0
        %1113 = vmatpush1.xpose.msra.mxu0 %v1095
        %1114 = vmatprep.subr.mxu0 0.0
        %1115 = vmatpush1.xpose.msra.mxu0 %v1096
        %1116 = vmatprep.subr.mxu0 0.0
        %1117 = vmatpush1.xpose.msra.mxu0 %v1097
        %1118 = vmatprep.subr.mxu0 0.0
        %1119 = vmatpush1.xpose.msra.mxu0 %v1098
        %1120 = vmatprep.subr.mxu0 0.0
        %1121 = vmatpush1.xpose.msra.mxu0 %v1099
        %1122 = vmatprep.subr.mxu0 0.0
        %1123 = vmatpush1.xpose.msra.mxu0 %v1100
        %1124 = vmatprep.subr.mxu0 0.0
        %1125 = vmatpush1.xpose.msra.mxu0 %v1101
        %1126 = vmatprep.subr.mxu0 0.0
        %1127 = vmatpush1.xpose.msra.mxu0 %v1102
        %1128 = vmatprep.subr.mxu0 0.0
        %1129 = vmatpush1.xpose.msra.mxu0 %v1103
        %1130 = vmatprep.subr.mxu0 0.0
        %1131 = vmatpush1.xpose.msra.mxu0 %v1104
        %1132 = vmatprep.subr.mxu0 0.0
        %1133 = vmatpush1.xpose.msra.mxu0 %v1105
        %1134 = vmatprep.subr.mxu0 0.0
        %1135 = vmatpush1.xpose.msra.mxu0 %v1106
        %1136 = vmatprep.subr.mxu0 0.0
        %1137 = vmatpush1.xpose.msra.mxu0 %v1107
        %1138 = vmatprep.subr.mxu0 0.0
        %1139 = vmatpush1.xpose.msra.mxu0 %v1108
        %1140 = vmatprep.subr.mxu0 0.0
        %1141 = vmatpush1.xpose.msra.mxu0 %v1109
        %1142 = vmatprep.subr.mxu0 0.0
        %1143 = vmatpush1.xpose.msra.mxu0 0.0
        %1144 = vmatprep.subr.mxu0 0.0
        %1145 = vmatpush1.xpose.msra.mxu0 0.0
        %1146 = vmatprep.subr.mxu0 0.0
        %1147 = vmatpush1.xpose.msra.mxu0 0.0
        %1148 = vmatprep.subr.mxu0 0.0
        %1149 = vmatpush1.xpose.msra.mxu0 0.0
        %1150 = vmatprep.subr.mxu0 0.0
        %1151 = vmatpush1.xpose.msra.mxu0 0.0
        %1152 = vmatprep.subr.mxu0 0.0
        %1153 = vmatpush1.xpose.msra.mxu0 0.0
        %1154 = vmatprep.subr.mxu0 0.0
        %1155 = vmatpush1.xpose.msra.mxu0 0.0
        %1156 = vmatprep.subr.mxu0 0.0
        %1157 = vmatpush1.xpose.msra.mxu0 0.0
        %1158 = vmatprep.subr.mxu0 0.0
        %1159 = vmatpush1.xpose.msra.mxu0 0.0
        %1160 = vmatprep.subr.mxu0 0.0
        %1161 = vmatpush1.xpose.msra.mxu0 0.0
        %1162 = vmatprep.subr.mxu0 0.0
        %1163 = vmatpush1.xpose.msra.mxu0 0.0
        %1164 = vmatprep.subr.mxu0 0.0
        %1165 = vmatpush1.xpose.msra.mxu0 0.0
        %1166 = vmatprep.subr.mxu0 0.0
        %1167 = vmatpush1.xpose.msra.mxu0 0.0
        %1168 = vmatprep.subr.mxu0 0.0
        %1169 = vmatpush1.xpose.msra.mxu0 0.0
        %1170 = vmatprep.subr.mxu0 0.0
        %1171 = vmatpush1.xpose.msra.mxu0 0.0
        %1172 = vmatprep.subr.mxu0 0.0
        %1173 = vmatpush1.xpose.msra.mxu0 0.0
        %1174 = vmatprep.mubr.f32.mxu0 0.0
        %1175 = vmatmul.mubr.f32.gmra.mrb[0].mxu0 %v709
        %v1176 = vpop.f32.mrb[0].mxu0
        %v1177 = vadd.f32 0.0, %v1176
        %v1178 = vpop.f32.mrb[0].mxu0
        %1179 = vdwg.mxu0
        %v1180 = vld [vmem:[%s9] sm:$0xff]
        %v1181 = vld [vmem:[%s9 + $0x8] sm:$0xff]
        %v1182 = vmax.f32 %v1177, 0.0
        %v1183 = vld [vmem:[%s10] sm:$0xff]
        %v1184 = vld [vmem:[%s10 + $0x8] sm:$0xff]
        %1186 = vset.pattern.permute.xlu0 0
        %1187 = vperm.xlu0 %1186, %v1183
        %v1188 = vpop.permute.xlu0 %1187
        %1191 = vset.pattern.permute.xlu0 0
        %1192 = vperm.xlu0 %1191, %v1184
        %v1193 = vpop.permute.xlu0 %1192
        %v1196 = vsel %vm750, %v1180, 0
        %v1199 = vsel %vm750, %v1181, 0
        %1201 = vmatprep.subr.mxu0 0.0
        %1202 = vmatpush1.msra.mxu0 %v1182
        %1203 = vmatprep.subr.mxu0 0.0
        %1204 = vmatpush1.msra.mxu0 0.0
        %1205 = vmatprep.subr.mxu0 0.0
        %1206 = vmatpush1.msra.mxu0 0.0
        %1207 = vmatprep.subr.mxu0 0.0
        %1208 = vmatpush1.msra.mxu0 0.0
        %1209 = vmatprep.subr.mxu0 0.0
        %1210 = vmatpush1.msra.mxu0 0.0
        %1211 = vmatprep.subr.mxu0 0.0
        %1212 = vmatpush1.msra.mxu0 0.0
        %1213 = vmatprep.subr.mxu0 0.0
        %1214 = vmatpush1.msra.mxu0 0.0
        %1215 = vmatprep.subr.mxu0 0.0
        %1216 = vmatpush1.msra.mxu0 0.0
        %1217 = vmatprep.subr.mxu0 0.0
        %1218 = vmatpush1.msra.mxu0 0.0
        %1219 = vmatprep.subr.mxu0 0.0
        %1220 = vmatpush1.msra.mxu0 0.0
        %1221 = vmatprep.subr.mxu0 0.0
        %1222 = vmatpush1.msra.mxu0 0.0
        %1223 = vmatprep.subr.mxu0 0.0
        %1224 = vmatpush1.msra.mxu0 0.0
        %1225 = vmatprep.subr.mxu0 0.0
        %1226 = vmatpush1.msra.mxu0 0.0
        %1227 = vmatprep.subr.mxu0 0.0
        %1228 = vmatpush1.msra.mxu0 0.0
        %1229 = vmatprep.subr.mxu0 0.0
        %1230 = vmatpush1.msra.mxu0 0.0
        %1231 = vmatprep.subr.mxu0 0.0
        %1232 = vmatpush1.msra.mxu0 0.0
        %1233 = vmatprep.subr.mxu0 0.0
        %1234 = vmatpush1.msra.mxu0 0.0
        %1235 = vmatprep.subr.mxu0 0.0
        %1236 = vmatpush1.msra.mxu0 0.0
        %1237 = vmatprep.subr.mxu0 0.0
        %1238 = vmatpush1.msra.mxu0 0.0
        %1239 = vmatprep.subr.mxu0 0.0
        %1240 = vmatpush1.msra.mxu0 0.0
        %1241 = vmatprep.subr.mxu0 0.0
        %1242 = vmatpush1.msra.mxu0 0.0
        %1243 = vmatprep.subr.mxu0 0.0
        %1244 = vmatpush1.msra.mxu0 0.0
        %1245 = vmatprep.subr.mxu0 0.0
        %1246 = vmatpush1.msra.mxu0 0.0
        %1247 = vmatprep.subr.mxu0 0.0
        %1248 = vmatpush1.msra.mxu0 0.0
        %1249 = vmatprep.subr.mxu0 0.0
        %1250 = vmatpush1.msra.mxu0 0.0
        %1251 = vmatprep.subr.mxu0 0.0
        %1252 = vmatpush1.msra.mxu0 0.0
        %1253 = vmatprep.subr.mxu0 0.0
        %1254 = vmatpush1.msra.mxu0 0.0
        %1255 = vmatprep.subr.mxu0 0.0
        %1256 = vmatpush1.msra.mxu0 0.0
        %1257 = vmatprep.subr.mxu0 0.0
        %1258 = vmatpush1.msra.mxu0 0.0
        %1259 = vmatprep.subr.mxu0 0.0
        %1260 = vmatpush1.msra.mxu0 0.0
        %1261 = vmatprep.subr.mxu0 0.0
        %1262 = vmatpush1.msra.mxu0 0.0
        %1263 = vmatprep.subr.mxu0 0.0
        %1264 = vmatpush1.msra.mxu0 0.0
        %1265 = vmatprep.mubr.f32.mxu0 0.0
        %1266 = vmatmul.mubr.f32.gmra.mrb[0].mxu0 %v1196
        %v1267 = vpop.f32.mrb[0].mxu0
        %v1268 = vadd.f32 %v1188, %v1267
        %v1269 = vpop.f32.mrb[0].mxu0
        %1270 = vmatprep.mubr.f32.mxu0 0.0
        %1271 = vmatmul.mubr.f32.gmra.mrb[0].mxu0 %v1199
        %v1272 = vpop.f32.mrb[0].mxu0
        %v1273 = vadd.f32 %v1193, %v1272
        %v1274 = vpop.f32.mrb[0].mxu0
        %1275 = vdwg.mxu0
        %v1276 = vld [vmem:[%s11] sm:$0xff]
        %v1277 = vld [vmem:[%s11 + $0x8] sm:$0xff]
        %s1278 = scalar_lea.vmem %s3, 8
        %v1279 = vld [vmem:[%s1278] sm:$0xff]
        %s1280 = scalar_lea.vmem %s4, 8
        %v1281 = vld [vmem:[%s1280] sm:$0xff]
        %1283 = vset.pattern.permute.xlu0 0
        %1284 = vperm.xlu0 %1283, %v1281
        %v1285 = vpop.permute.xlu0 %1284
        %v1288 = vsel %vm478, %v1279, 0
        %1290 = vmatprep.subr.mxu0 0.0
        %1291 = vmatpush1.msra.mxu0 %v467
        %1292 = vmatprep.subr.mxu0 0.0
        %1293 = vmatpush1.msra.mxu0 %v468
        %1294 = vmatprep.subr.mxu0 0.0
        %1295 = vmatpush1.msra.mxu0 0.0
        %1296 = vmatprep.subr.mxu0 0.0
        %1297 = vmatpush1.msra.mxu0 0.0
        %1298 = vmatprep.subr.mxu0 0.0
        %1299 = vmatpush1.msra.mxu0 0.0
        %1300 = vmatprep.subr.mxu0 0.0
        %1301 = vmatpush1.msra.mxu0 0.0
        %1302 = vmatprep.subr.mxu0 0.0
        %1303 = vmatpush1.msra.mxu0 0.0
        %1304 = vmatprep.subr.mxu0 0.0
        %1305 = vmatpush1.msra.mxu0 0.0
        %1306 = vmatprep.subr.mxu0 0.0
        %1307 = vmatpush1.msra.mxu0 0.0
        %1308 = vmatprep.subr.mxu0 0.0
        %1309 = vmatpush1.msra.mxu0 0.0
        %1310 = vmatprep.subr.mxu0 0.0
        %1311 = vmatpush1.msra.mxu0 0.0
        %1312 = vmatprep.subr.mxu0 0.0
        %1313 = vmatpush1.msra.mxu0 0.0
        %1314 = vmatprep.subr.mxu0 0.0
        %1315 = vmatpush1.msra.mxu0 0.0
        %1316 = vmatprep.subr.mxu0 0.0
        %1317 = vmatpush1.msra.mxu0 0.0
        %1318 = vmatprep.subr.mxu0 0.0
        %1319 = vmatpush1.msra.mxu0 0.0
        %1320 = vmatprep.subr.mxu0 0.0
        %1321 = vmatpush1.msra.mxu0 0.0
        %1322 = vmatprep.subr.mxu0 0.0
        %1323 = vmatpush1.msra.mxu0 0.0
        %1324 = vmatprep.subr.mxu0 0.0
        %1325 = vmatpush1.msra.mxu0 0.0
        %1326 = vmatprep.subr.mxu0 0.0
        %1327 = vmatpush1.msra.mxu0 0.0
        %1328 = vmatprep.subr.mxu0 0.0
        %1329 = vmatpush1.msra.mxu0 0.0
        %1330 = vmatprep.subr.mxu0 0.0
        %1331 = vmatpush1.msra.mxu0 0.0
        %1332 = vmatprep.subr.mxu0 0.0
        %1333 = vmatpush1.msra.mxu0 0.0
        %1334 = vmatprep.subr.mxu0 0.0
        %1335 = vmatpush1.msra.mxu0 0.0
        %1336 = vmatprep.subr.mxu0 0.0
        %1337 = vmatpush1.msra.mxu0 0.0
        %1338 = vmatprep.subr.mxu0 0.0
        %1339 = vmatpush1.msra.mxu0 0.0
        %1340 = vmatprep.subr.mxu0 0.0
        %1341 = vmatpush1.msra.mxu0 0.0
        %1342 = vmatprep.subr.mxu0 0.0
        %1343 = vmatpush1.msra.mxu0 0.0
        %1344 = vmatprep.subr.mxu0 0.0
        %1345 = vmatpush1.msra.mxu0 0.0
        %1346 = vmatprep.subr.mxu0 0.0
        %1347 = vmatpush1.msra.mxu0 0.0
        %1348 = vmatprep.subr.mxu0 0.0
        %1349 = vmatpush1.msra.mxu0 0.0
        %1350 = vmatprep.subr.mxu0 0.0
        %1351 = vmatpush1.msra.mxu0 0.0
        %1352 = vmatprep.subr.mxu0 0.0
        %1353 = vmatpush1.msra.mxu0 0.0
        %1354 = vmatprep.mubr.f32.mxu0 0.0
        %1355 = vmatmul.mubr.f32.gmra.mrb[0].mxu0 %v1288
        %v1356 = vpop.f32.mrb[0].mxu0
        %v1357 = vadd.f32 %v1285, %v1356
        %v1358 = vpop.f32.mrb[0].mxu0
        %1359 = vdwg.mxu0
        %s1360 = scalar_lea.vmem %s5, 8
        %v1361 = vld [vmem:[%s1360] sm:$0xff]
        %s1362 = scalar_lea.vmem %s6, 8
        %v1363 = vld [vmem:[%s1362] sm:$0xff]
        %1365 = vset.pattern.permute.xlu0 0
        %1366 = vperm.xlu0 %1365, %v1363
        %v1367 = vpop.permute.xlu0 %1366
        %v1370 = vsel %vm478, %v1361, 0
        %1372 = vmatprep.subr.mxu0 0.0
        %1373 = vmatpush1.msra.mxu0 %v467
        %1374 = vmatprep.subr.mxu0 0.0
        %1375 = vmatpush1.msra.mxu0 %v468
        %1376 = vmatprep.subr.mxu0 0.0
        %1377 = vmatpush1.msra.mxu0 0.0
        %1378 = vmatprep.subr.mxu0 0.0
        %1379 = vmatpush1.msra.mxu0 0.0
        %1380 = vmatprep.subr.mxu0 0.0
        %1381 = vmatpush1.msra.mxu0 0.0
        %1382 = vmatprep.subr.mxu0 0.0
        %1383 = vmatpush1.msra.mxu0 0.0
        %1384 = vmatprep.subr.mxu0 0.0
        %1385 = vmatpush1.msra.mxu0 0.0
        %1386 = vmatprep.subr.mxu0 0.0
        %1387 = vmatpush1.msra.mxu0 0.0
        %1388 = vmatprep.subr.mxu0 0.0
        %1389 = vmatpush1.msra.mxu0 0.0
        %1390 = vmatprep.subr.mxu0 0.0
        %1391 = vmatpush1.msra.mxu0 0.0
        %1392 = vmatprep.subr.mxu0 0.0
        %1393 = vmatpush1.msra.mxu0 0.0
        %1394 = vmatprep.subr.mxu0 0.0
        %1395 = vmatpush1.msra.mxu0 0.0
        %1396 = vmatprep.subr.mxu0 0.0
        %1397 = vmatpush1.msra.mxu0 0.0
        %1398 = vmatprep.subr.mxu0 0.0
        %1399 = vmatpush1.msra.mxu0 0.0
        %1400 = vmatprep.subr.mxu0 0.0
        %1401 = vmatpush1.msra.mxu0 0.0
        %1402 = vmatprep.subr.mxu0 0.0
        %1403 = vmatpush1.msra.mxu0 0.0
        %1404 = vmatprep.subr.mxu0 0.0
        %1405 = vmatpush1.msra.mxu0 0.0
        %1406 = vmatprep.subr.mxu0 0.0
        %1407 = vmatpush1.msra.mxu0 0.0
        %1408 = vmatprep.subr.mxu0 0.0
        %1409 = vmatpush1.msra.mxu0 0.0
        %1410 = vmatprep.subr.mxu0 0.0
        %1411 = vmatpush1.msra.mxu0 0.0
        %1412 = vmatprep.subr.mxu0 0.0
        %1413 = vmatpush1.msra.mxu0 0.0
        %1414 = vmatprep.subr.mxu0 0.0
        %1415 = vmatpush1.msra.mxu0 0.0
        %1416 = vmatprep.subr.mxu0 0.0
        %1417 = vmatpush1.msra.mxu0 0.0
        %1418 = vmatprep.subr.mxu0 0.0
        %1419 = vmatpush1.msra.mxu0 0.0
        %1420 = vmatprep.subr.mxu0 0.0
        %1421 = vmatpush1.msra.mxu0 0.0
        %1422 = vmatprep.subr.mxu0 0.0
        %1423 = vmatpush1.msra.mxu0 0.0
        %1424 = vmatprep.subr.mxu0 0.0
        %1425 = vmatpush1.msra.mxu0 0.0
        %1426 = vmatprep.subr.mxu0 0.0
        %1427 = vmatpush1.msra.mxu0 0.0
        %1428 = vmatprep.subr.mxu0 0.0
        %1429 = vmatpush1.msra.mxu0 0.0
        %1430 = vmatprep.subr.mxu0 0.0
        %1431 = vmatpush1.msra.mxu0 0.0
        %1432 = vmatprep.subr.mxu0 0.0
        %1433 = vmatpush1.msra.mxu0 0.0
        %1434 = vmatprep.subr.mxu0 0.0
        %1435 = vmatpush1.msra.mxu0 0.0
        %1436 = vmatprep.mubr.f32.mxu0 0.0
        %1437 = vmatmul.mubr.f32.gmra.mrb[0].mxu0 %v1370
        %v1438 = vpop.f32.mrb[0].mxu0
        %v1439 = vadd.f32 %v1367, %v1438
        %v1440 = vpop.f32.mrb[0].mxu0
        %1441 = vdwg.mxu0
        %s1442 = scalar_lea.vmem %s7, 8
        %v1443 = vld [vmem:[%s1442] sm:$0xff]
        %s1444 = scalar_lea.vmem %s8, 8
        %v1445 = vld [vmem:[%s1444] sm:$0xff]
        %1447 = vset.pattern.permute.xlu0 0
        %1448 = vperm.xlu0 %1447, %v1445
        %v1449 = vpop.permute.xlu0 %1448
        %v1452 = vsel %vm478, %v1443, 0
        %1454 = vmatprep.subr.mxu0 0.0
        %1455 = vmatpush1.msra.mxu0 %v467
        %1456 = vmatprep.subr.mxu0 0.0
        %1457 = vmatpush1.msra.mxu0 %v468
        %1458 = vmatprep.subr.mxu0 0.0
        %1459 = vmatpush1.msra.mxu0 0.0
        %1460 = vmatprep.subr.mxu0 0.0
        %1461 = vmatpush1.msra.mxu0 0.0
        %1462 = vmatprep.subr.mxu0 0.0
        %1463 = vmatpush1.msra.mxu0 0.0
        %1464 = vmatprep.subr.mxu0 0.0
        %1465 = vmatpush1.msra.mxu0 0.0
        %1466 = vmatprep.subr.mxu0 0.0
        %1467 = vmatpush1.msra.mxu0 0.0
        %1468 = vmatprep.subr.mxu0 0.0
        %1469 = vmatpush1.msra.mxu0 0.0
        %1470 = vmatprep.subr.mxu0 0.0
        %1471 = vmatpush1.msra.mxu0 0.0
        %1472 = vmatprep.subr.mxu0 0.0
        %1473 = vmatpush1.msra.mxu0 0.0
        %1474 = vmatprep.subr.mxu0 0.0
        %1475 = vmatpush1.msra.mxu0 0.0
        %1476 = vmatprep.subr.mxu0 0.0
        %1477 = vmatpush1.msra.mxu0 0.0
        %1478 = vmatprep.subr.mxu0 0.0
        %1479 = vmatpush1.msra.mxu0 0.0
        %1480 = vmatprep.subr.mxu0 0.0
        %1481 = vmatpush1.msra.mxu0 0.0
        %1482 = vmatprep.subr.mxu0 0.0
        %1483 = vmatpush1.msra.mxu0 0.0
        %1484 = vmatprep.subr.mxu0 0.0
        %1485 = vmatpush1.msra.mxu0 0.0
        %1486 = vmatprep.subr.mxu0 0.0
        %1487 = vmatpush1.msra.mxu0 0.0
        %1488 = vmatprep.subr.mxu0 0.0
        %1489 = vmatpush1.msra.mxu0 0.0
        %1490 = vmatprep.subr.mxu0 0.0
        %1491 = vmatpush1.msra.mxu0 0.0
        %1492 = vmatprep.subr.mxu0 0.0
        %1493 = vmatpush1.msra.mxu0 0.0
        %1494 = vmatprep.subr.mxu0 0.0
        %1495 = vmatpush1.msra.mxu0 0.0
        %1496 = vmatprep.subr.mxu0 0.0
        %1497 = vmatpush1.msra.mxu0 0.0
        %1498 = vmatprep.subr.mxu0 0.0
        %1499 = vmatpush1.msra.mxu0 0.0
        %1500 = vmatprep.subr.mxu0 0.0
        %1501 = vmatpush1.msra.mxu0 0.0
        %1502 = vmatprep.subr.mxu0 0.0
        %1503 = vmatpush1.msra.mxu0 0.0
        %1504 = vmatprep.subr.mxu0 0.0
        %1505 = vmatpush1.msra.mxu0 0.0
        %1506 = vmatprep.subr.mxu0 0.0
        %1507 = vmatpush1.msra.mxu0 0.0
        %1508 = vmatprep.subr.mxu0 0.0
        %1509 = vmatpush1.msra.mxu0 0.0
        %1510 = vmatprep.subr.mxu0 0.0
        %1511 = vmatpush1.msra.mxu0 0.0
        %1512 = vmatprep.subr.mxu0 0.0
        %1513 = vmatpush1.msra.mxu0 0.0
        %1514 = vmatprep.subr.mxu0 0.0
        %1515 = vmatpush1.msra.mxu0 0.0
        %1516 = vmatprep.subr.mxu0 0.0
        %1517 = vmatpush1.msra.mxu0 0.0
        %1518 = vmatprep.mubr.f32.mxu0 0.0
        %1519 = vmatmul.mubr.f32.gmra.mrb[0].mxu0 %v1452
        %v1520 = vpop.f32.mrb[0].mxu0
        %v1521 = vadd.f32 %v1449, %v1520
        %v1522 = vpop.f32.mrb[0].mxu0
        %1523 = vdwg.mxu0
        %1524 = vxpose.xlu0.b32.start [1/16] %v1357, 128
        %1525 = vxpose.xlu0.b32.cont [2/16] 0.0, 128
        %1526 = vxpose.xlu0.b32.cont [3/16] 0.0, 128
        %1527 = vxpose.xlu0.b32.cont [4/16] 0.0, 128
        %1528 = vxpose.xlu0.b32.cont [5/16] 0.0, 128
        %1529 = vxpose.xlu0.b32.cont [6/16] 0.0, 128
        %1530 = vxpose.xlu0.b32.cont [7/16] 0.0, 128
        %1531 = vxpose.xlu0.b32.cont [8/16] 0.0, 128
        %1532 = vxpose.xlu0.b32.cont [9/16] 0.0, 128
        %1533 = vxpose.xlu0.b32.cont [10/16] 0.0, 128
        %1534 = vxpose.xlu0.b32.cont [11/16] 0.0, 128
        %1535 = vxpose.xlu0.b32.cont [12/16] 0.0, 128
        %1536 = vxpose.xlu0.b32.cont [13/16] 0.0, 128
        %1537 = vxpose.xlu0.b32.cont [14/16] 0.0, 128
        %1538 = vxpose.xlu0.b32.cont [15/16] 0.0, 128
        %1539 = vxpose.xlu0.b32.end [16/16] 0.0, 128
        %v1540 = vpop.trf.xlu0
        %v1541 = vpop.trf.xlu0
        %v1542 = vpop.trf.xlu0
        %v1543 = vpop.trf.xlu0
        %v1544 = vpop.trf.xlu0
        %v1545 = vpop.trf.xlu0
        %v1546 = vpop.trf.xlu0
        %v1547 = vpop.trf.xlu0
        %v1548 = vpop.trf.xlu0
        %v1549 = vpop.trf.xlu0
        %v1550 = vpop.trf.xlu0
        %v1551 = vpop.trf.xlu0
        %v1552 = vpop.trf.xlu0
        %v1553 = vpop.trf.xlu0
        %v1554 = vpop.trf.xlu0
        %v1555 = vpop.trf.xlu0
        %v1557 = vsel %vm750, %v1540, 0
        %v1560 = vsel %vm750, %v1541, 0
        %v1563 = vsel %vm750, %v1542, 0
        %v1566 = vsel %vm750, %v1543, 0
        %v1569 = vsel %vm750, %v1544, 0
        %v1572 = vsel %vm750, %v1545, 0
        %v1575 = vsel %vm750, %v1546, 0
        %v1578 = vsel %vm750, %v1547, 0
        %v1581 = vsel %vm750, %v1548, 0
        %v1584 = vsel %vm750, %v1549, 0
        %v1587 = vsel %vm750, %v1550, 0
        %v1590 = vsel %vm750, %v1551, 0
        %v1593 = vsel %vm750, %v1552, 0
        %v1596 = vsel %vm750, %v1553, 0
        %v1599 = vsel %vm750, %v1554, 0
        %v1602 = vsel %vm750, %v1555, 0
        %1604 = vmatprep.subr.mxu0 0.0
        %1605 = vmatpush1.msra.mxu0 %v1439
        %1606 = vmatprep.subr.mxu0 0.0
        %1607 = vmatpush1.msra.mxu0 0.0
        %1608 = vmatprep.subr.mxu0 0.0
        %1609 = vmatpush1.msra.mxu0 0.0
        %1610 = vmatprep.subr.mxu0 0.0
        %1611 = vmatpush1.msra.mxu0 0.0
        %1612 = vmatprep.subr.mxu0 0.0
        %1613 = vmatpush1.msra.mxu0 0.0
        %1614 = vmatprep.subr.mxu0 0.0
        %1615 = vmatpush1.msra.mxu0 0.0
        %1616 = vmatprep.subr.mxu0 0.0
        %1617 = vmatpush1.msra.mxu0 0.0
        %1618 = vmatprep.subr.mxu0 0.0
        %1619 = vmatpush1.msra.mxu0 0.0
        %1620 = vmatprep.subr.mxu0 0.0
        %1621 = vmatpush1.msra.mxu0 0.0
        %1622 = vmatprep.subr.mxu0 0.0
        %1623 = vmatpush1.msra.mxu0 0.0
        %1624 = vmatprep.subr.mxu0 0.0
        %1625 = vmatpush1.msra.mxu0 0.0
        %1626 = vmatprep.subr.mxu0 0.0
        %1627 = vmatpush1.msra.mxu0 0.0
        %1628 = vmatprep.subr.mxu0 0.0
        %1629 = vmatpush1.msra.mxu0 0.0
        %1630 = vmatprep.subr.mxu0 0.0
        %1631 = vmatpush1.msra.mxu0 0.0
        %1632 = vmatprep.subr.mxu0 0.0
        %1633 = vmatpush1.msra.mxu0 0.0
        %1634 = vmatprep.subr.mxu0 0.0
        %1635 = vmatpush1.msra.mxu0 0.0
        %1636 = vmatprep.subr.mxu0 0.0
        %1637 = vmatpush1.msra.mxu0 0.0
        %1638 = vmatprep.subr.mxu0 0.0
        %1639 = vmatpush1.msra.mxu0 0.0
        %1640 = vmatprep.subr.mxu0 0.0
        %1641 = vmatpush1.msra.mxu0 0.0
        %1642 = vmatprep.subr.mxu0 0.0
        %1643 = vmatpush1.msra.mxu0 0.0
        %1644 = vmatprep.subr.mxu0 0.0
        %1645 = vmatpush1.msra.mxu0 0.0
        %1646 = vmatprep.subr.mxu0 0.0
        %1647 = vmatpush1.msra.mxu0 0.0
        %1648 = vmatprep.subr.mxu0 0.0
        %1649 = vmatpush1.msra.mxu0 0.0
        %1650 = vmatprep.subr.mxu0 0.0
        %1651 = vmatpush1.msra.mxu0 0.0
        %1652 = vmatprep.subr.mxu0 0.0
        %1653 = vmatpush1.msra.mxu0 0.0
        %1654 = vmatprep.subr.mxu0 0.0
        %1655 = vmatpush1.msra.mxu0 0.0
        %1656 = vmatprep.subr.mxu0 0.0
        %1657 = vmatpush1.msra.mxu0 0.0
        %1658 = vmatprep.subr.mxu0 0.0
        %1659 = vmatpush1.msra.mxu0 0.0
        %1660 = vmatprep.subr.mxu0 0.0
        %1661 = vmatpush1.msra.mxu0 0.0
        %1662 = vmatprep.subr.mxu0 0.0
        %1663 = vmatpush1.msra.mxu0 0.0
        %1664 = vmatprep.subr.mxu0 0.0
        %1665 = vmatpush1.msra.mxu0 0.0
        %1666 = vmatprep.subr.mxu0 0.0
        %1667 = vmatpush1.msra.mxu0 0.0
        %1668 = vmatprep.mubr.f32.mxu0 0.0
        %1669 = vmatmul.mubr.f32.gmra.mrb[0].mxu0 %v1557
        %v1670 = vpop.f32.mrb[0].mxu0
        %v1671 = vadd.f32 %v716, %v1670
        %v1672 = vpop.f32.mrb[0].mxu0
        %1673 = vmatprep.mubr.f32.mxu0 0.0
        %1674 = vmatmul.mubr.f32.gmra.mrb[0].mxu0 %v1560
        %v1675 = vpop.f32.mrb[0].mxu0
        %v1676 = vadd.f32 %v716, %v1675
        %v1677 = vpop.f32.mrb[0].mxu0
        %1678 = vmatprep.mubr.f32.mxu0 0.0
        %1679 = vmatmul.mubr.f32.gmra.mrb[0].mxu0 %v1563
        %v1680 = vpop.f32.mrb[0].mxu0
        %v1681 = vadd.f32 %v716, %v1680
        %v1682 = vpop.f32.mrb[0].mxu0
        %1683 = vmatprep.mubr.f32.mxu0 0.0
        %1684 = vmatmul.mubr.f32.gmra.mrb[0].mxu0 %v1566
        %v1685 = vpop.f32.mrb[0].mxu0
        %v1686 = vadd.f32 %v716, %v1685
        %v1687 = vpop.f32.mrb[0].mxu0
        %1688 = vmatprep.mubr.f32.mxu0 0.0
        %1689 = vmatmul.mubr.f32.gmra.mrb[0].mxu0 %v1569
        %v1690 = vpop.f32.mrb[0].mxu0
        %v1691 = vadd.f32 %v716, %v1690
        %v1692 = vpop.f32.mrb[0].mxu0
        %1693 = vmatprep.mubr.f32.mxu0 0.0
        %1694 = vmatmul.mubr.f32.gmra.mrb[0].mxu0 %v1572
        %v1695 = vpop.f32.mrb[0].mxu0
        %v1696 = vadd.f32 %v716, %v1695
        %v1697 = vpop.f32.mrb[0].mxu0
        %1698 = vmatprep.mubr.f32.mxu0 0.0
        %1699 = vmatmul.mubr.f32.gmra.mrb[0].mxu0 %v1575
        %v1700 = vpop.f32.mrb[0].mxu0
        %v1701 = vadd.f32 %v716, %v1700
        %v1702 = vpop.f32.mrb[0].mxu0
        %1703 = vmatprep.mubr.f32.mxu0 0.0
        %1704 = vmatmul.mubr.f32.gmra.mrb[0].mxu0 %v1578
        %v1705 = vpop.f32.mrb[0].mxu0
        %v1706 = vadd.f32 %v716, %v1705
        %v1707 = vpop.f32.mrb[0].mxu0
        %1708 = vmatprep.mubr.f32.mxu0 0.0
        %1709 = vmatmul.mubr.f32.gmra.mrb[0].mxu0 %v1581
        %v1710 = vpop.f32.mrb[0].mxu0
        %v1711 = vadd.f32 %v716, %v1710
        %v1712 = vpop.f32.mrb[0].mxu0
        %1713 = vmatprep.mubr.f32.mxu0 0.0
        %1714 = vmatmul.mubr.f32.gmra.mrb[0].mxu0 %v1584
        %v1715 = vpop.f32.mrb[0].mxu0
        %v1716 = vadd.f32 %v716, %v1715
        %v1717 = vpop.f32.mrb[0].mxu0
        %1718 = vmatprep.mubr.f32.mxu0 0.0
        %1719 = vmatmul.mubr.f32.gmra.mrb[0].mxu0 %v1587
        %v1720 = vpop.f32.mrb[0].mxu0
        %v1721 = vadd.f32 %v716, %v1720
        %v1722 = vpop.f32.mrb[0].mxu0
        %1723 = vmatprep.mubr.f32.mxu0 0.0
        %1724 = vmatmul.mubr.f32.gmra.mrb[0].mxu0 %v1590
        %v1725 = vpop.f32.mrb[0].mxu0
        %v1726 = vadd.f32 %v716, %v1725
        %v1727 = vpop.f32.mrb[0].mxu0
        %1728 = vmatprep.mubr.f32.mxu0 0.0
        %1729 = vmatmul.mubr.f32.gmra.mrb[0].mxu0 %v1593
        %v1730 = vpop.f32.mrb[0].mxu0
        %v1731 = vadd.f32 %v716, %v1730
        %v1732 = vpop.f32.mrb[0].mxu0
        %1733 = vmatprep.mubr.f32.mxu0 0.0
        %1734 = vmatmul.mubr.f32.gmra.mrb[0].mxu0 %v1596
        %v1735 = vpop.f32.mrb[0].mxu0
        %v1736 = vadd.f32 %v716, %v1735
        %v1737 = vpop.f32.mrb[0].mxu0
        %1738 = vmatprep.mubr.f32.mxu0 0.0
        %1739 = vmatmul.mubr.f32.gmra.mrb[0].mxu0 %v1599
        %v1740 = vpop.f32.mrb[0].mxu0
        %v1741 = vadd.f32 %v716, %v1740
        %v1742 = vpop.f32.mrb[0].mxu0
        %1743 = vmatprep.mubr.f32.mxu0 0.0
        %1744 = vmatmul.mubr.f32.gmra.mrb[0].mxu0 %v1602
        %v1745 = vpop.f32.mrb[0].mxu0
        %v1746 = vadd.f32 %v716, %v1745
        %v1747 = vpop.f32.mrb[0].mxu0
        %1748 = vdwg.mxu0
        %1749 = vmax.xlane.f32.xlu0 %v1671
        %v1750 = vpop.xlane.xlu0 %1749
        %1751 = vmax.xlane.f32.xlu0 %v1676
        %v1752 = vpop.xlane.xlu0 %1751
        %1753 = vmax.xlane.f32.xlu0 %v1681
        %v1754 = vpop.xlane.xlu0 %1753
        %1755 = vmax.xlane.f32.xlu0 %v1686
        %v1756 = vpop.xlane.xlu0 %1755
        %1757 = vmax.xlane.f32.xlu0 %v1691
        %v1758 = vpop.xlane.xlu0 %1757
        %1759 = vmax.xlane.f32.xlu0 %v1696
        %v1760 = vpop.xlane.xlu0 %1759
        %1761 = vmax.xlane.f32.xlu0 %v1701
        %v1762 = vpop.xlane.xlu0 %1761
        %1763 = vmax.xlane.f32.xlu0 %v1706
        %v1764 = vpop.xlane.xlu0 %1763
        %1765 = vmax.xlane.f32.xlu0 %v1711
        %v1766 = vpop.xlane.xlu0 %1765
        %1767 = vmax.xlane.f32.xlu0 %v1716
        %v1768 = vpop.xlane.xlu0 %1767
        %1769 = vmax.xlane.f32.xlu0 %v1721
        %v1770 = vpop.xlane.xlu0 %1769
        %1771 = vmax.xlane.f32.xlu0 %v1726
        %v1772 = vpop.xlane.xlu0 %1771
        %1773 = vmax.xlane.f32.xlu0 %v1731
        %v1774 = vpop.xlane.xlu0 %1773
        %1775 = vmax.xlane.f32.xlu0 %v1736
        %v1776 = vpop.xlane.xlu0 %1775
        %1777 = vmax.xlane.f32.xlu0 %v1741
        %v1778 = vpop.xlane.xlu0 %1777
        %1779 = vmax.xlane.f32.xlu0 %v1746
        %v1780 = vpop.xlane.xlu0 %1779
        %v1781 = vsub.f32 %v1671, %v1750
        %v1782 = vsub.f32 %v1676, %v1752
        %v1783 = vsub.f32 %v1681, %v1754
        %v1784 = vsub.f32 %v1686, %v1756
        %v1785 = vsub.f32 %v1691, %v1758
        %v1786 = vsub.f32 %v1696, %v1760
        %v1787 = vsub.f32 %v1701, %v1762
        %v1788 = vsub.f32 %v1706, %v1764
        %v1789 = vsub.f32 %v1711, %v1766
        %v1790 = vsub.f32 %v1716, %v1768
        %v1791 = vsub.f32 %v1721, %v1770
        %v1792 = vsub.f32 %v1726, %v1772
        %v1793 = vsub.f32 %v1731, %v1774
        %v1794 = vsub.f32 %v1736, %v1776
        %v1795 = vsub.f32 %v1741, %v1778
        %v1796 = vsub.f32 %v1746, %v1780
        %v1797 = vmul.f32 %v1781, 1.442695
        %v1798 = vpow.pop %v1797
        %v1799 = vmul.f32 %v1782, 1.442695
        %v1800 = vpow.pop %v1799
        %v1801 = vmul.f32 %v1783, 1.442695
        %v1802 = vpow.pop %v1801
        %v1803 = vmul.f32 %v1784, 1.442695
        %v1804 = vpow.pop %v1803
        %v1805 = vmul.f32 %v1785, 1.442695
        %v1806 = vpow.pop %v1805
        %v1807 = vmul.f32 %v1786, 1.442695
        %v1808 = vpow.pop %v1807
        %v1809 = vmul.f32 %v1787, 1.442695
        %v1810 = vpow.pop %v1809
        %v1811 = vmul.f32 %v1788, 1.442695
        %v1812 = vpow.pop %v1811
        %v1813 = vmul.f32 %v1789, 1.442695
        %v1814 = vpow.pop %v1813
        %v1815 = vmul.f32 %v1790, 1.442695
        %v1816 = vpow.pop %v1815
        %v1817 = vmul.f32 %v1791, 1.442695
        %v1818 = vpow.pop %v1817
        %v1819 = vmul.f32 %v1792, 1.442695
        %v1820 = vpow.pop %v1819
        %v1821 = vmul.f32 %v1793, 1.442695
        %v1822 = vpow.pop %v1821
        %v1823 = vmul.f32 %v1794, 1.442695
        %v1824 = vpow.pop %v1823
        %v1825 = vmul.f32 %v1795, 1.442695
        %v1826 = vpow.pop %v1825
        %v1827 = vmul.f32 %v1796, 1.442695
        %v1828 = vpow.pop %v1827
        %1829 = vadd.xlane.f32.xlu0 %v1798
        %v1830 = vpop.xlane.xlu0 %1829
        %1831 = vadd.xlane.f32.xlu0 %v1800
        %v1832 = vpop.xlane.xlu0 %1831
        %1833 = vadd.xlane.f32.xlu0 %v1802
        %v1834 = vpop.xlane.xlu0 %1833
        %1835 = vadd.xlane.f32.xlu0 %v1804
        %v1836 = vpop.xlane.xlu0 %1835
        %1837 = vadd.xlane.f32.xlu0 %v1806
        %v1838 = vpop.xlane.xlu0 %1837
        %1839 = vadd.xlane.f32.xlu0 %v1808
        %v1840 = vpop.xlane.xlu0 %1839
        %1841 = vadd.xlane.f32.xlu0 %v1810
        %v1842 = vpop.xlane.xlu0 %1841
        %1843 = vadd.xlane.f32.xlu0 %v1812
        %v1844 = vpop.xlane.xlu0 %1843
        %1845 = vadd.xlane.f32.xlu0 %v1814
        %v1846 = vpop.xlane.xlu0 %1845
        %1847 = vadd.xlane.f32.xlu0 %v1816
        %v1848 = vpop.xlane.xlu0 %1847
        %1849 = vadd.xlane.f32.xlu0 %v1818
        %v1850 = vpop.xlane.xlu0 %1849
        %1851 = vadd.xlane.f32.xlu0 %v1820
        %v1852 = vpop.xlane.xlu0 %1851
        %1853 = vadd.xlane.f32.xlu0 %v1822
        %v1854 = vpop.xlane.xlu0 %1853
        %1855 = vadd.xlane.f32.xlu0 %v1824
        %v1856 = vpop.xlane.xlu0 %1855
        %1857 = vadd.xlane.f32.xlu0 %v1826
        %v1858 = vpop.xlane.xlu0 %1857
        %1859 = vadd.xlane.f32.xlu0 %v1828
        %v1860 = vpop.xlane.xlu0 %1859
        %v1861 = vrcp.pop %v1830
        %v1862 = vrcp.pop %v1832
        %v1863 = vrcp.pop %v1834
        %v1864 = vrcp.pop %v1836
        %v1865 = vrcp.pop %v1838
        %v1866 = vrcp.pop %v1840
        %v1867 = vrcp.pop %v1842
        %v1868 = vrcp.pop %v1844
        %v1869 = vrcp.pop %v1846
        %v1870 = vrcp.pop %v1848
        %v1871 = vrcp.pop %v1850
        %v1872 = vrcp.pop %v1852
        %v1873 = vrcp.pop %v1854
        %v1874 = vrcp.pop %v1856
        %v1875 = vrcp.pop %v1858
        %v1876 = vrcp.pop %v1860
        %v1877 = vmul.f32 %v1798, %v1861
        %v1878 = vmul.f32 %v1800, %v1862
        %v1879 = vmul.f32 %v1802, %v1863
        %v1880 = vmul.f32 %v1804, %v1864
        %v1881 = vmul.f32 %v1806, %v1865
        %v1882 = vmul.f32 %v1808, %v1866
        %v1883 = vmul.f32 %v1810, %v1867
        %v1884 = vmul.f32 %v1812, %v1868
        %v1885 = vmul.f32 %v1814, %v1869
        %v1886 = vmul.f32 %v1816, %v1870
        %v1887 = vmul.f32 %v1818, %v1871
        %v1888 = vmul.f32 %v1820, %v1872
        %v1889 = vmul.f32 %v1822, %v1873
        %v1890 = vmul.f32 %v1824, %v1874
        %v1891 = vmul.f32 %v1826, %v1875
        %v1892 = vmul.f32 %v1828, %v1876
        %v1893 = vmul.f32 %v1877, %v1092
        %v1894 = vmul.f32 %v1878, %v1092
        %v1895 = vmul.f32 %v1879, %v1092
        %v1896 = vmul.f32 %v1880, %v1092
        %v1897 = vmul.f32 %v1881, %v1092
        %v1898 = vmul.f32 %v1882, %v1092
        %v1899 = vmul.f32 %v1883, %v1092
        %v1900 = vmul.f32 %v1884, %v1092
        %v1901 = vmul.f32 %v1885, %v1092
        %v1902 = vmul.f32 %v1886, %v1092
        %v1903 = vmul.f32 %v1887, %v1092
        %v1904 = vmul.f32 %v1888, %v1092
        %v1905 = vmul.f32 %v1889, %v1092
        %v1906 = vmul.f32 %v1890, %v1092
        %v1907 = vmul.f32 %v1891, %v1092
        %v1908 = vmul.f32 %v1892, %v1092
        %1909 = vmatprep.subr.mxu0 0.0
        %1910 = vmatpush1.xpose.msra.mxu0 %v1893
        %1911 = vmatprep.subr.mxu0 0.0
        %1912 = vmatpush1.xpose.msra.mxu0 %v1894
        %1913 = vmatprep.subr.mxu0 0.0
        %1914 = vmatpush1.xpose.msra.mxu0 %v1895
        %1915 = vmatprep.subr.mxu0 0.0
        %1916 = vmatpush1.xpose.msra.mxu0 %v1896
        %1917 = vmatprep.subr.mxu0 0.0
        %1918 = vmatpush1.xpose.msra.mxu0 %v1897
        %1919 = vmatprep.subr.mxu0 0.0
        %1920 = vmatpush1.xpose.msra.mxu0 %v1898
        %1921 = vmatprep.subr.mxu0 0.0
        %1922 = vmatpush1.xpose.msra.mxu0 %v1899
        %1923 = vmatprep.subr.mxu0 0.0
        %1924 = vmatpush1.xpose.msra.mxu0 %v1900
        %1925 = vmatprep.subr.mxu0 0.0
        %1926 = vmatpush1.xpose.msra.mxu0 %v1901
        %1927 = vmatprep.subr.mxu0 0.0
        %1928 = vmatpush1.xpose.msra.mxu0 %v1902
        %1929 = vmatprep.subr.mxu0 0.0
        %1930 = vmatpush1.xpose.msra.mxu0 %v1903
        %1931 = vmatprep.subr.mxu0 0.0
        %1932 = vmatpush1.xpose.msra.mxu0 %v1904
        %1933 = vmatprep.subr.mxu0 0.0
        %1934 = vmatpush1.xpose.msra.mxu0 %v1905
        %1935 = vmatprep.subr.mxu0 0.0
        %1936 = vmatpush1.xpose.msra.mxu0 %v1906
        %1937 = vmatprep.subr.mxu0 0.0
        %1938 = vmatpush1.xpose.msra.mxu0 %v1907
        %1939 = vmatprep.subr.mxu0 0.0
        %1940 = vmatpush1.xpose.msra.mxu0 %v1908
        %1941 = vmatprep.subr.mxu0 0.0
        %1942 = vmatpush1.xpose.msra.mxu0 0.0
        %1943 = vmatprep.subr.mxu0 0.0
        %1944 = vmatpush1.xpose.msra.mxu0 0.0
        %1945 = vmatprep.subr.mxu0 0.0
        %1946 = vmatpush1.xpose.msra.mxu0 0.0
        %1947 = vmatprep.subr.mxu0 0.0
        %1948 = vmatpush1.xpose.msra.mxu0 0.0
        %1949 = vmatprep.subr.mxu0 0.0
        %1950 = vmatpush1.xpose.msra.mxu0 0.0
        %1951 = vmatprep.subr.mxu0 0.0
        %1952 = vmatpush1.xpose.msra.mxu0 0.0
        %1953 = vmatprep.subr.mxu0 0.0
        %1954 = vmatpush1.xpose.msra.mxu0 0.0
        %1955 = vmatprep.subr.mxu0 0.0
        %1956 = vmatpush1.xpose.msra.mxu0 0.0
        %1957 = vmatprep.subr.mxu0 0.0
        %1958 = vmatpush1.xpose.msra.mxu0 0.0
        %1959 = vmatprep.subr.mxu0 0.0
        %1960 = vmatpush1.xpose.msra.mxu0 0.0
        %1961 = vmatprep.subr.mxu0 0.0
        %1962 = vmatpush1.xpose.msra.mxu0 0.0
        %1963 = vmatprep.subr.mxu0 0.0
        %1964 = vmatpush1.xpose.msra.mxu0 0.0
        %1965 = vmatprep.subr.mxu0 0.0
        %1966 = vmatpush1.xpose.msra.mxu0 0.0
        %1967 = vmatprep.subr.mxu0 0.0
        %1968 = vmatpush1.xpose.msra.mxu0 0.0
        %1969 = vmatprep.subr.mxu0 0.0
        %1970 = vmatpush1.xpose.msra.mxu0 0.0
        %1971 = vmatprep.subr.mxu0 0.0
        %1972 = vmatpush1.xpose.msra.mxu0 0.0
        %1973 = vmatprep.mubr.f32.mxu0 0.0
        %1974 = vmatmul.mubr.f32.gmra.mrb[0].mxu0 %v1521
        %v1975 = vpop.f32.mrb[0].mxu0
        %v1976 = vadd.f32 0.0, %v1975
        %v1977 = vpop.f32.mrb[0].mxu0
        %1978 = vdwg.mxu0
        %s1979 = scalar_lea.vmem %s9, 16
        %v1980 = vld [vmem:[%s1979] sm:$0xff]
        %v1981 = vld [vmem:[%s1979 + $0x8] sm:$0xff]
        %v1982 = vmax.f32 %v1976, 0.0
        %s1983 = scalar_lea.vmem %s10, 16
        %v1984 = vld [vmem:[%s1983] sm:$0xff]
        %v1985 = vld [vmem:[%s1983 + $0x8] sm:$0xff]
        %1987 = vset.pattern.permute.xlu0 0
        %1988 = vperm.xlu0 %1987, %v1984
        %v1989 = vpop.permute.xlu0 %1988
        %1992 = vset.pattern.permute.xlu0 0
        %1993 = vperm.xlu0 %1992, %v1985
        %v1994 = vpop.permute.xlu0 %1993
        %v1997 = vsel %vm750, %v1980, 0
        %v2000 = vsel %vm750, %v1981, 0
        %2002 = vmatprep.subr.mxu0 0.0
        %2003 = vmatpush1.msra.mxu0 %v1982
        %2004 = vmatprep.subr.mxu0 0.0
        %2005 = vmatpush1.msra.mxu0 0.0
        %2006 = vmatprep.subr.mxu0 0.0
        %2007 = vmatpush1.msra.mxu0 0.0
        %2008 = vmatprep.subr.mxu0 0.0
        %2009 = vmatpush1.msra.mxu0 0.0
        %2010 = vmatprep.subr.mxu0 0.0
        %2011 = vmatpush1.msra.mxu0 0.0
        %2012 = vmatprep.subr.mxu0 0.0
        %2013 = vmatpush1.msra.mxu0 0.0
        %2014 = vmatprep.subr.mxu0 0.0
        %2015 = vmatpush1.msra.mxu0 0.0
        %2016 = vmatprep.subr.mxu0 0.0
        %2017 = vmatpush1.msra.mxu0 0.0
        %2018 = vmatprep.subr.mxu0 0.0
        %2019 = vmatpush1.msra.mxu0 0.0
        %2020 = vmatprep.subr.mxu0 0.0
        %2021 = vmatpush1.msra.mxu0 0.0
        %2022 = vmatprep.subr.mxu0 0.0
        %2023 = vmatpush1.msra.mxu0 0.0
        %2024 = vmatprep.subr.mxu0 0.0
        %2025 = vmatpush1.msra.mxu0 0.0
        %2026 = vmatprep.subr.mxu0 0.0
        %2027 = vmatpush1.msra.mxu0 0.0
        %2028 = vmatprep.subr.mxu0 0.0
        %2029 = vmatpush1.msra.mxu0 0.0
        %2030 = vmatprep.subr.mxu0 0.0
        %2031 = vmatpush1.msra.mxu0 0.0
        %2032 = vmatprep.subr.mxu0 0.0
        %2033 = vmatpush1.msra.mxu0 0.0
        %2034 = vmatprep.subr.mxu0 0.0
        %2035 = vmatpush1.msra.mxu0 0.0
        %2036 = vmatprep.subr.mxu0 0.0
        %2037 = vmatpush1.msra.mxu0 0.0
        %2038 = vmatprep.subr.mxu0 0.0
        %2039 = vmatpush1.msra.mxu0 0.0
        %2040 = vmatprep.subr.mxu0 0.0
        %2041 = vmatpush1.msra.mxu0 0.0
        %2042 = vmatprep.subr.mxu0 0.0
        %2043 = vmatpush1.msra.mxu0 0.0
        %2044 = vmatprep.subr.mxu0 0.0
        %2045 = vmatpush1.msra.mxu0 0.0
        %2046 = vmatprep.subr.mxu0 0.0
        %2047 = vmatpush1.msra.mxu0 0.0
        %2048 = vmatprep.subr.mxu0 0.0
        %2049 = vmatpush1.msra.mxu0 0.0
        %2050 = vmatprep.subr.mxu0 0.0
        %2051 = vmatpush1.msra.mxu0 0.0
        %2052 = vmatprep.subr.mxu0 0.0
        %2053 = vmatpush1.msra.mxu0 0.0
        %2054 = vmatprep.subr.mxu0 0.0
        %2055 = vmatpush1.msra.mxu0 0.0
        %2056 = vmatprep.subr.mxu0 0.0
        %2057 = vmatpush1.msra.mxu0 0.0
        %2058 = vmatprep.subr.mxu0 0.0
        %2059 = vmatpush1.msra.mxu0 0.0
        %2060 = vmatprep.subr.mxu0 0.0
        %2061 = vmatpush1.msra.mxu0 0.0
        %2062 = vmatprep.subr.mxu0 0.0
        %2063 = vmatpush1.msra.mxu0 0.0
        %2064 = vmatprep.subr.mxu0 0.0
        %2065 = vmatpush1.msra.mxu0 0.0
        %2066 = vmatprep.mubr.f32.mxu0 0.0
        %2067 = vmatmul.mubr.f32.gmra.mrb[0].mxu0 %v1997
        %v2068 = vpop.f32.mrb[0].mxu0
        %v2069 = vadd.f32 %v1989, %v2068
        %v2070 = vpop.f32.mrb[0].mxu0
        %2071 = vmatprep.mubr.f32.mxu0 0.0
        %2072 = vmatmul.mubr.f32.gmra.mrb[0].mxu0 %v2000
        %v2073 = vpop.f32.mrb[0].mxu0
        %v2074 = vadd.f32 %v1994, %v2073
        %v2075 = vpop.f32.mrb[0].mxu0
        %2076 = vdwg.mxu0
        %s2077 = scalar_lea.vmem %s11, 16
        %v2078 = vld [vmem:[%s2077] sm:$0xff]
        %v2079 = vld [vmem:[%s2077 + $0x8] sm:$0xff]
        %v2081 = vsel %vm478, %v2078, 0
        %v2084 = vsel %vm478, %v2079, 0
        %2086 = vmatprep.subr.mxu0 0.0
        %2087 = vmatpush1.msra.mxu0 %v2069
        %2088 = vmatprep.subr.mxu0 0.0
        %2089 = vmatpush1.msra.mxu0 %v2074
        %2090 = vmatprep.subr.mxu0 0.0
        %2091 = vmatpush1.msra.mxu0 0.0
        %2092 = vmatprep.subr.mxu0 0.0
        %2093 = vmatpush1.msra.mxu0 0.0
        %2094 = vmatprep.subr.mxu0 0.0
        %2095 = vmatpush1.msra.mxu0 0.0
        %2096 = vmatprep.subr.mxu0 0.0
        %2097 = vmatpush1.msra.mxu0 0.0
        %2098 = vmatprep.subr.mxu0 0.0
        %2099 = vmatpush1.msra.mxu0 0.0
        %2100 = vmatprep.subr.mxu0 0.0
        %2101 = vmatpush1.msra.mxu0 0.0
        %2102 = vmatprep.subr.mxu0 0.0
        %2103 = vmatpush1.msra.mxu0 0.0
        %2104 = vmatprep.subr.mxu0 0.0
        %2105 = vmatpush1.msra.mxu0 0.0
        %2106 = vmatprep.subr.mxu0 0.0
        %2107 = vmatpush1.msra.mxu0 0.0
        %2108 = vmatprep.subr.mxu0 0.0
        %2109 = vmatpush1.msra.mxu0 0.0
        %2110 = vmatprep.subr.mxu0 0.0
        %2111 = vmatpush1.msra.mxu0 0.0
        %2112 = vmatprep.subr.mxu0 0.0
        %2113 = vmatpush1.msra.mxu0 0.0
        %2114 = vmatprep.subr.mxu0 0.0
        %2115 = vmatpush1.msra.mxu0 0.0
        %2116 = vmatprep.subr.mxu0 0.0
        %2117 = vmatpush1.msra.mxu0 0.0
        %2118 = vmatprep.subr.mxu0 0.0
        %2119 = vmatpush1.msra.mxu0 0.0
        %2120 = vmatprep.subr.mxu0 0.0
        %2121 = vmatpush1.msra.mxu0 0.0
        %2122 = vmatprep.subr.mxu0 0.0
        %2123 = vmatpush1.msra.mxu0 0.0
        %2124 = vmatprep.subr.mxu0 0.0
        %2125 = vmatpush1.msra.mxu0 0.0
        %2126 = vmatprep.subr.mxu0 0.0
        %2127 = vmatpush1.msra.mxu0 0.0
        %2128 = vmatprep.subr.mxu0 0.0
        %2129 = vmatpush1.msra.mxu0 0.0
        %2130 = vmatprep.subr.mxu0 0.0
        %2131 = vmatpush1.msra.mxu0 0.0
        %2132 = vmatprep.subr.mxu0 0.0
        %2133 = vmatpush1.msra.mxu0 0.0
        %2134 = vmatprep.subr.mxu0 0.0
        %2135 = vmatpush1.msra.mxu0 0.0
        %2136 = vmatprep.subr.mxu0 0.0
        %2137 = vmatpush1.msra.mxu0 0.0
        %2138 = vmatprep.subr.mxu0 0.0
        %2139 = vmatpush1.msra.mxu0 0.0
        %2140 = vmatprep.subr.mxu0 0.0
        %2141 = vmatpush1.msra.mxu0 0.0
        %2142 = vmatprep.subr.mxu0 0.0
        %2143 = vmatpush1.msra.mxu0 0.0
        %2144 = vmatprep.subr.mxu0 0.0
        %2145 = vmatpush1.msra.mxu0 0.0
        %2146 = vmatprep.subr.mxu0 0.0
        %2147 = vmatpush1.msra.mxu0 0.0
        %2148 = vmatprep.subr.mxu0 0.0
        %2149 = vmatpush1.msra.mxu0 0.0
        %2150 = vmatprep.mubr.f32.mxu0 0.0
        %2151 = vmatmul.mubr.f32.gmra.mrb[0].mxu0 %v2081
        %v2152 = vpop.f32.mrb[0].mxu0
        %v2153 = vadd.f32 0.0, %v2152
        %v2154 = vpop.f32.mrb[0].mxu0
        %2155 = vmatprep.mubr.f32.mxu0 0.0
        %2156 = vmatmul.mubr.f32.gmra.mrb[0].mxu0 %v2084
        %v2157 = vpop.f32.mrb[0].mxu0
        %v2158 = vadd.f32 0.0, %v2157
        %v2159 = vpop.f32.mrb[0].mxu0
        %2160 = vdwg.mxu0
        %v2162 = vsel %vm478, %v1276, 0
        %v2165 = vsel %vm478, %v1277, 0
        %2167 = vmatprep.subr.mxu0 0.0
        %2168 = vmatpush1.msra.mxu0 %v1268
        %2169 = vmatprep.subr.mxu0 0.0
        %2170 = vmatpush1.msra.mxu0 %v1273
        %2171 = vmatprep.subr.mxu0 0.0
        %2172 = vmatpush1.msra.mxu0 0.0
        %2173 = vmatprep.subr.mxu0 0.0
        %2174 = vmatpush1.msra.mxu0 0.0
        %2175 = vmatprep.subr.mxu0 0.0
        %2176 = vmatpush1.msra.mxu0 0.0
        %2177 = vmatprep.subr.mxu0 0.0
        %2178 = vmatpush1.msra.mxu0 0.0
        %2179 = vmatprep.subr.mxu0 0.0
        %2180 = vmatpush1.msra.mxu0 0.0
        %2181 = vmatprep.subr.mxu0 0.0
        %2182 = vmatpush1.msra.mxu0 0.0
        %2183 = vmatprep.subr.mxu0 0.0
        %2184 = vmatpush1.msra.mxu0 0.0
        %2185 = vmatprep.subr.mxu0 0.0
        %2186 = vmatpush1.msra.mxu0 0.0
        %2187 = vmatprep.subr.mxu0 0.0
        %2188 = vmatpush1.msra.mxu0 0.0
        %2189 = vmatprep.subr.mxu0 0.0
        %2190 = vmatpush1.msra.mxu0 0.0
        %2191 = vmatprep.subr.mxu0 0.0
        %2192 = vmatpush1.msra.mxu0 0.0
        %2193 = vmatprep.subr.mxu0 0.0
        %2194 = vmatpush1.msra.mxu0 0.0
        %2195 = vmatprep.subr.mxu0 0.0
        %2196 = vmatpush1.msra.mxu0 0.0
        %2197 = vmatprep.subr.mxu0 0.0
        %2198 = vmatpush1.msra.mxu0 0.0
        %2199 = vmatprep.subr.mxu0 0.0
        %2200 = vmatpush1.msra.mxu0 0.0
        %2201 = vmatprep.subr.mxu0 0.0
        %2202 = vmatpush1.msra.mxu0 0.0
        %2203 = vmatprep.subr.mxu0 0.0
        %2204 = vmatpush1.msra.mxu0 0.0
        %2205 = vmatprep.subr.mxu0 0.0
        %2206 = vmatpush1.msra.mxu0 0.0
        %2207 = vmatprep.subr.mxu0 0.0
        %2208 = vmatpush1.msra.mxu0 0.0
        %2209 = vmatprep.subr.mxu0 0.0
        %2210 = vmatpush1.msra.mxu0 0.0
        %2211 = vmatprep.subr.mxu0 0.0
        %2212 = vmatpush1.msra.mxu0 0.0
        %2213 = vmatprep.subr.mxu0 0.0
        %2214 = vmatpush1.msra.mxu0 0.0
        %2215 = vmatprep.subr.mxu0 0.0
        %2216 = vmatpush1.msra.mxu0 0.0
        %2217 = vmatprep.subr.mxu0 0.0
        %2218 = vmatpush1.msra.mxu0 0.0
        %2219 = vmatprep.subr.mxu0 0.0
        %2220 = vmatpush1.msra.mxu0 0.0
        %2221 = vmatprep.subr.mxu0 0.0
        %2222 = vmatpush1.msra.mxu0 0.0
        %2223 = vmatprep.subr.mxu0 0.0
        %2224 = vmatpush1.msra.mxu0 0.0
        %2225 = vmatprep.subr.mxu0 0.0
        %2226 = vmatpush1.msra.mxu0 0.0
        %2227 = vmatprep.subr.mxu0 0.0
        %2228 = vmatpush1.msra.mxu0 0.0
        %2229 = vmatprep.subr.mxu0 0.0
        %2230 = vmatpush1.msra.mxu0 0.0
        %2231 = vmatprep.mubr.f32.mxu0 0.0
        %2232 = vmatmul.mubr.f32.gmra.mrb[0].mxu0 %v2162
        %v2233 = vpop.f32.mrb[0].mxu0
        %v2234 = vadd.f32 %v2153, %v2233
        %v2235 = vpop.f32.mrb[0].mxu0
        %2236 = vmatprep.mubr.f32.mxu0 0.0
        %2237 = vmatmul.mubr.f32.gmra.mrb[0].mxu0 %v2165
        %v2238 = vpop.f32.mrb[0].mxu0
        %v2239 = vadd.f32 %v2158, %v2238
        %v2240 = vpop.f32.mrb[0].mxu0
        %2241 = vdwg.mxu0
        %s2242 = scalar_lea.vmem %s3, 16
        %v2243 = vld [vmem:[%s2242] sm:$0xff]
        %s2244 = scalar_lea.vmem %s4, 16
        %v2245 = vld [vmem:[%s2244] sm:$0xff]
        %2247 = vset.pattern.permute.xlu0 0
        %2248 = vperm.xlu0 %2247, %v2245
        %v2249 = vpop.permute.xlu0 %2248
        %v2252 = vsel %vm478, %v2243, 0
        %2254 = vmatprep.subr.mxu0 0.0
        %2255 = vmatpush1.msra.mxu0 %v467
        %2256 = vmatprep.subr.mxu0 0.0
        %2257 = vmatpush1.msra.mxu0 %v468
        %2258 = vmatprep.subr.mxu0 0.0
        %2259 = vmatpush1.msra.mxu0 0.0
        %2260 = vmatprep.subr.mxu0 0.0
        %2261 = vmatpush1.msra.mxu0 0.0
        %2262 = vmatprep.subr.mxu0 0.0
        %2263 = vmatpush1.msra.mxu0 0.0
        %2264 = vmatprep.subr.mxu0 0.0
        %2265 = vmatpush1.msra.mxu0 0.0
        %2266 = vmatprep.subr.mxu0 0.0
        %2267 = vmatpush1.msra.mxu0 0.0
        %2268 = vmatprep.subr.mxu0 0.0
        %2269 = vmatpush1.msra.mxu0 0.0
        %2270 = vmatprep.subr.mxu0 0.0
        %2271 = vmatpush1.msra.mxu0 0.0
        %2272 = vmatprep.subr.mxu0 0.0
        %2273 = vmatpush1.msra.mxu0 0.0
        %2274 = vmatprep.subr.mxu0 0.0
        %2275 = vmatpush1.msra.mxu0 0.0
        %2276 = vmatprep.subr.mxu0 0.0
        %2277 = vmatpush1.msra.mxu0 0.0
        %2278 = vmatprep.subr.mxu0 0.0
        %2279 = vmatpush1.msra.mxu0 0.0
        %2280 = vmatprep.subr.mxu0 0.0
        %2281 = vmatpush1.msra.mxu0 0.0
        %2282 = vmatprep.subr.mxu0 0.0
        %2283 = vmatpush1.msra.mxu0 0.0
        %2284 = vmatprep.subr.mxu0 0.0
        %2285 = vmatpush1.msra.mxu0 0.0
        %2286 = vmatprep.subr.mxu0 0.0
        %2287 = vmatpush1.msra.mxu0 0.0
        %2288 = vmatprep.subr.mxu0 0.0
        %2289 = vmatpush1.msra.mxu0 0.0
        %2290 = vmatprep.subr.mxu0 0.0
        %2291 = vmatpush1.msra.mxu0 0.0
        %2292 = vmatprep.subr.mxu0 0.0
        %2293 = vmatpush1.msra.mxu0 0.0
        %2294 = vmatprep.subr.mxu0 0.0
        %2295 = vmatpush1.msra.mxu0 0.0
        %2296 = vmatprep.subr.mxu0 0.0
        %2297 = vmatpush1.msra.mxu0 0.0
        %2298 = vmatprep.subr.mxu0 0.0
        %2299 = vmatpush1.msra.mxu0 0.0
        %2300 = vmatprep.subr.mxu0 0.0
        %2301 = vmatpush1.msra.mxu0 0.0
        %2302 = vmatprep.subr.mxu0 0.0
        %2303 = vmatpush1.msra.mxu0 0.0
        %2304 = vmatprep.subr.mxu0 0.0
        %2305 = vmatpush1.msra.mxu0 0.0
        %2306 = vmatprep.subr.mxu0 0.0
        %2307 = vmatpush1.msra.mxu0 0.0
        %2308 = vmatprep.subr.mxu0 0.0
        %2309 = vmatpush1.msra.mxu0 0.0
        %2310 = vmatprep.subr.mxu0 0.0
        %2311 = vmatpush1.msra.mxu0 0.0
        %2312 = vmatprep.subr.mxu0 0.0
        %2313 = vmatpush1.msra.mxu0 0.0
        %2314 = vmatprep.subr.mxu0 0.0
        %2315 = vmatpush1.msra.mxu0 0.0
        %2316 = vmatprep.subr.mxu0 0.0
        %2317 = vmatpush1.msra.mxu0 0.0
        %2318 = vmatprep.mubr.f32.mxu0 0.0
        %2319 = vmatmul.mubr.f32.gmra.mrb[0].mxu0 %v2252
        %v2320 = vpop.f32.mrb[0].mxu0
        %v2321 = vadd.f32 %v2249, %v2320
        %v2322 = vpop.f32.mrb[0].mxu0
        %2323 = vdwg.mxu0
        %s2324 = scalar_lea.vmem %s5, 16
        %v2325 = vld [vmem:[%s2324] sm:$0xff]
        %s2326 = scalar_lea.vmem %s6, 16
        %v2327 = vld [vmem:[%s2326] sm:$0xff]
        %2329 = vset.pattern.permute.xlu0 0
        %2330 = vperm.xlu0 %2329, %v2327
        %v2331 = vpop.permute.xlu0 %2330
        %v2334 = vsel %vm478, %v2325, 0
        %2336 = vmatprep.subr.mxu0 0.0
        %2337 = vmatpush1.msra.mxu0 %v467
        %2338 = vmatprep.subr.mxu0 0.0
        %2339 = vmatpush1.msra.mxu0 %v468
        %2340 = vmatprep.subr.mxu0 0.0
        %2341 = vmatpush1.msra.mxu0 0.0
        %2342 = vmatprep.subr.mxu0 0.0
        %2343 = vmatpush1.msra.mxu0 0.0
        %2344 = vmatprep.subr.mxu0 0.0
        %2345 = vmatpush1.msra.mxu0 0.0
        %2346 = vmatprep.subr.mxu0 0.0
        %2347 = vmatpush1.msra.mxu0 0.0
        %2348 = vmatprep.subr.mxu0 0.0
        %2349 = vmatpush1.msra.mxu0 0.0
        %2350 = vmatprep.subr.mxu0 0.0
        %2351 = vmatpush1.msra.mxu0 0.0
        %2352 = vmatprep.subr.mxu0 0.0
        %2353 = vmatpush1.msra.mxu0 0.0
        %2354 = vmatprep.subr.mxu0 0.0
        %2355 = vmatpush1.msra.mxu0 0.0
        %2356 = vmatprep.subr.mxu0 0.0
        %2357 = vmatpush1.msra.mxu0 0.0
        %2358 = vmatprep.subr.mxu0 0.0
        %2359 = vmatpush1.msra.mxu0 0.0
        %2360 = vmatprep.subr.mxu0 0.0
        %2361 = vmatpush1.msra.mxu0 0.0
        %2362 = vmatprep.subr.mxu0 0.0
        %2363 = vmatpush1.msra.mxu0 0.0
        %2364 = vmatprep.subr.mxu0 0.0
        %2365 = vmatpush1.msra.mxu0 0.0
        %2366 = vmatprep.subr.mxu0 0.0
        %2367 = vmatpush1.msra.mxu0 0.0
        %2368 = vmatprep.subr.mxu0 0.0
        %2369 = vmatpush1.msra.mxu0 0.0
        %2370 = vmatprep.subr.mxu0 0.0
        %2371 = vmatpush1.msra.mxu0 0.0
        %2372 = vmatprep.subr.mxu0 0.0
        %2373 = vmatpush1.msra.mxu0 0.0
        %2374 = vmatprep.subr.mxu0 0.0
        %2375 = vmatpush1.msra.mxu0 0.0
        %2376 = vmatprep.subr.mxu0 0.0
        %2377 = vmatpush1.msra.mxu0 0.0
        %2378 = vmatprep.subr.mxu0 0.0
        %2379 = vmatpush1.msra.mxu0 0.0
        %2380 = vmatprep.subr.mxu0 0.0
        %2381 = vmatpush1.msra.mxu0 0.0
        %2382 = vmatprep.subr.mxu0 0.0
        %2383 = vmatpush1.msra.mxu0 0.0
        %2384 = vmatprep.subr.mxu0 0.0
        %2385 = vmatpush1.msra.mxu0 0.0
        %2386 = vmatprep.subr.mxu0 0.0
        %2387 = vmatpush1.msra.mxu0 0.0
        %2388 = vmatprep.subr.mxu0 0.0
        %2389 = vmatpush1.msra.mxu0 0.0
        %2390 = vmatprep.subr.mxu0 0.0
        %2391 = vmatpush1.msra.mxu0 0.0
        %2392 = vmatprep.subr.mxu0 0.0
        %2393 = vmatpush1.msra.mxu0 0.0
        %2394 = vmatprep.subr.mxu0 0.0
        %2395 = vmatpush1.msra.mxu0 0.0
        %2396 = vmatprep.subr.mxu0 0.0
        %2397 = vmatpush1.msra.mxu0 0.0
        %2398 = vmatprep.subr.mxu0 0.0
        %2399 = vmatpush1.msra.mxu0 0.0
        %2400 = vmatprep.mubr.f32.mxu0 0.0
        %2401 = vmatmul.mubr.f32.gmra.mrb[0].mxu0 %v2334
        %v2402 = vpop.f32.mrb[0].mxu0
        %v2403 = vadd.f32 %v2331, %v2402
        %v2404 = vpop.f32.mrb[0].mxu0
        %2405 = vdwg.mxu0
        %s2406 = scalar_lea.vmem %s7, 16
        %v2407 = vld [vmem:[%s2406] sm:$0xff]
        %s2408 = scalar_lea.vmem %s8, 16
        %v2409 = vld [vmem:[%s2408] sm:$0xff]
        %2411 = vset.pattern.permute.xlu0 0
        %2412 = vperm.xlu0 %2411, %v2409
        %v2413 = vpop.permute.xlu0 %2412
        %v2416 = vsel %vm478, %v2407, 0
        %2418 = vmatprep.subr.mxu0 0.0
        %2419 = vmatpush1.msra.mxu0 %v467
        %2420 = vmatprep.subr.mxu0 0.0
        %2421 = vmatpush1.msra.mxu0 %v468
        %2422 = vmatprep.subr.mxu0 0.0
        %2423 = vmatpush1.msra.mxu0 0.0
        %2424 = vmatprep.subr.mxu0 0.0
        %2425 = vmatpush1.msra.mxu0 0.0
        %2426 = vmatprep.subr.mxu0 0.0
        %2427 = vmatpush1.msra.mxu0 0.0
        %2428 = vmatprep.subr.mxu0 0.0
        %2429 = vmatpush1.msra.mxu0 0.0
        %2430 = vmatprep.subr.mxu0 0.0
        %2431 = vmatpush1.msra.mxu0 0.0
        %2432 = vmatprep.subr.mxu0 0.0
        %2433 = vmatpush1.msra.mxu0 0.0
        %2434 = vmatprep.subr.mxu0 0.0
        %2435 = vmatpush1.msra.mxu0 0.0
        %2436 = vmatprep.subr.mxu0 0.0
        %2437 = vmatpush1.msra.mxu0 0.0
        %2438 = vmatprep.subr.mxu0 0.0
        %2439 = vmatpush1.msra.mxu0 0.0
        %2440 = vmatprep.subr.mxu0 0.0
        %2441 = vmatpush1.msra.mxu0 0.0
        %2442 = vmatprep.subr.mxu0 0.0
        %2443 = vmatpush1.msra.mxu0 0.0
        %2444 = vmatprep.subr.mxu0 0.0
        %2445 = vmatpush1.msra.mxu0 0.0
        %2446 = vmatprep.subr.mxu0 0.0
        %2447 = vmatpush1.msra.mxu0 0.0
        %2448 = vmatprep.subr.mxu0 0.0
        %2449 = vmatpush1.msra.mxu0 0.0
        %2450 = vmatprep.subr.mxu0 0.0
        %2451 = vmatpush1.msra.mxu0 0.0
        %2452 = vmatprep.subr.mxu0 0.0
        %2453 = vmatpush1.msra.mxu0 0.0
        %2454 = vmatprep.subr.mxu0 0.0
        %2455 = vmatpush1.msra.mxu0 0.0
        %2456 = vmatprep.subr.mxu0 0.0
        %2457 = vmatpush1.msra.mxu0 0.0
        %2458 = vmatprep.subr.mxu0 0.0
        %2459 = vmatpush1.msra.mxu0 0.0
        %2460 = vmatprep.subr.mxu0 0.0
        %2461 = vmatpush1.msra.mxu0 0.0
        %2462 = vmatprep.subr.mxu0 0.0
        %2463 = vmatpush1.msra.mxu0 0.0
        %2464 = vmatprep.subr.mxu0 0.0
        %2465 = vmatpush1.msra.mxu0 0.0
        %2466 = vmatprep.subr.mxu0 0.0
        %2467 = vmatpush1.msra.mxu0 0.0
        %2468 = vmatprep.subr.mxu0 0.0
        %2469 = vmatpush1.msra.mxu0 0.0
        %2470 = vmatprep.subr.mxu0 0.0
        %2471 = vmatpush1.msra.mxu0 0.0
        %2472 = vmatprep.subr.mxu0 0.0
        %2473 = vmatpush1.msra.mxu0 0.0
        %2474 = vmatprep.subr.mxu0 0.0
        %2475 = vmatpush1.msra.mxu0 0.0
        %2476 = vmatprep.subr.mxu0 0.0
        %2477 = vmatpush1.msra.mxu0 0.0
        %2478 = vmatprep.subr.mxu0 0.0
        %2479 = vmatpush1.msra.mxu0 0.0
        %2480 = vmatprep.subr.mxu0 0.0
        %2481 = vmatpush1.msra.mxu0 0.0
        %2482 = vmatprep.mubr.f32.mxu0 0.0
        %2483 = vmatmul.mubr.f32.gmra.mrb[0].mxu0 %v2416
        %v2484 = vpop.f32.mrb[0].mxu0
        %v2485 = vadd.f32 %v2413, %v2484
        %v2486 = vpop.f32.mrb[0].mxu0
        %2487 = vdwg.mxu0
        %2488 = vxpose.xlu0.b32.start [1/16] %v2321, 128
        %2489 = vxpose.xlu0.b32.cont [2/16] 0.0, 128
        %2490 = vxpose.xlu0.b32.cont [3/16] 0.0, 128
        %2491 = vxpose.xlu0.b32.cont [4/16] 0.0, 128
        %2492 = vxpose.xlu0.b32.cont [5/16] 0.0, 128
        %2493 = vxpose.xlu0.b32.cont [6/16] 0.0, 128
        %2494 = vxpose.xlu0.b32.cont [7/16] 0.0, 128
        %2495 = vxpose.xlu0.b32.cont [8/16] 0.0, 128
        %2496 = vxpose.xlu0.b32.cont [9/16] 0.0, 128
        %2497 = vxpose.xlu0.b32.cont [10/16] 0.0, 128
        %2498 = vxpose.xlu0.b32.cont [11/16] 0.0, 128
        %2499 = vxpose.xlu0.b32.cont [12/16] 0.0, 128
        %2500 = vxpose.xlu0.b32.cont [13/16] 0.0, 128
        %2501 = vxpose.xlu0.b32.cont [14/16] 0.0, 128
        %2502 = vxpose.xlu0.b32.cont [15/16] 0.0, 128
        %2503 = vxpose.xlu0.b32.end [16/16] 0.0, 128
        %v2504 = vpop.trf.xlu0
        %v2505 = vpop.trf.xlu0
        %v2506 = vpop.trf.xlu0
        %v2507 = vpop.trf.xlu0
        %v2508 = vpop.trf.xlu0
        %v2509 = vpop.trf.xlu0
        %v2510 = vpop.trf.xlu0
        %v2511 = vpop.trf.xlu0
        %v2512 = vpop.trf.xlu0
        %v2513 = vpop.trf.xlu0
        %v2514 = vpop.trf.xlu0
        %v2515 = vpop.trf.xlu0
        %v2516 = vpop.trf.xlu0
        %v2517 = vpop.trf.xlu0
        %v2518 = vpop.trf.xlu0
        %v2519 = vpop.trf.xlu0
        %v2521 = vsel %vm750, %v2504, 0
        %v2524 = vsel %vm750, %v2505, 0
        %v2527 = vsel %vm750, %v2506, 0
        %v2530 = vsel %vm750, %v2507, 0
        %v2533 = vsel %vm750, %v2508, 0
        %v2536 = vsel %vm750, %v2509, 0
        %v2539 = vsel %vm750, %v2510, 0
        %v2542 = vsel %vm750, %v2511, 0
        %v2545 = vsel %vm750, %v2512, 0
        %v2548 = vsel %vm750, %v2513, 0
        %v2551 = vsel %vm750, %v2514, 0
        %v2554 = vsel %vm750, %v2515, 0
        %v2557 = vsel %vm750, %v2516, 0
        %v2560 = vsel %vm750, %v2517, 0
        %v2563 = vsel %vm750, %v2518, 0
        %v2566 = vsel %vm750, %v2519, 0
        %2568 = vmatprep.subr.mxu0 0.0
        %2569 = vmatpush1.msra.mxu0 %v2403
        %2570 = vmatprep.subr.mxu0 0.0
        %2571 = vmatpush1.msra.mxu0 0.0
        %2572 = vmatprep.subr.mxu0 0.0
        %2573 = vmatpush1.msra.mxu0 0.0
        %2574 = vmatprep.subr.mxu0 0.0
        %2575 = vmatpush1.msra.mxu0 0.0
        %2576 = vmatprep.subr.mxu0 0.0
        %2577 = vmatpush1.msra.mxu0 0.0
        %2578 = vmatprep.subr.mxu0 0.0
        %2579 = vmatpush1.msra.mxu0 0.0
        %2580 = vmatprep.subr.mxu0 0.0
        %2581 = vmatpush1.msra.mxu0 0.0
        %2582 = vmatprep.subr.mxu0 0.0
        %2583 = vmatpush1.msra.mxu0 0.0
        %2584 = vmatprep.subr.mxu0 0.0
        %2585 = vmatpush1.msra.mxu0 0.0
        %2586 = vmatprep.subr.mxu0 0.0
        %2587 = vmatpush1.msra.mxu0 0.0
        %2588 = vmatprep.subr.mxu0 0.0
        %2589 = vmatpush1.msra.mxu0 0.0
        %2590 = vmatprep.subr.mxu0 0.0
        %2591 = vmatpush1.msra.mxu0 0.0
        %2592 = vmatprep.subr.mxu0 0.0
        %2593 = vmatpush1.msra.mxu0 0.0
        %2594 = vmatprep.subr.mxu0 0.0
        %2595 = vmatpush1.msra.mxu0 0.0
        %2596 = vmatprep.subr.mxu0 0.0
        %2597 = vmatpush1.msra.mxu0 0.0
        %2598 = vmatprep.subr.mxu0 0.0
        %2599 = vmatpush1.msra.mxu0 0.0
        %2600 = vmatprep.subr.mxu0 0.0
        %2601 = vmatpush1.msra.mxu0 0.0
        %2602 = vmatprep.subr.mxu0 0.0
        %2603 = vmatpush1.msra.mxu0 0.0
        %2604 = vmatprep.subr.mxu0 0.0
        %2605 = vmatpush1.msra.mxu0 0.0
        %2606 = vmatprep.subr.mxu0 0.0
        %2607 = vmatpush1.msra.mxu0 0.0
        %2608 = vmatprep.subr.mxu0 0.0
        %2609 = vmatpush1.msra.mxu0 0.0
        %2610 = vmatprep.subr.mxu0 0.0
        %2611 = vmatpush1.msra.mxu0 0.0
        %2612 = vmatprep.subr.mxu0 0.0
        %2613 = vmatpush1.msra.mxu0 0.0
        %2614 = vmatprep.subr.mxu0 0.0
        %2615 = vmatpush1.msra.mxu0 0.0
        %2616 = vmatprep.subr.mxu0 0.0
        %2617 = vmatpush1.msra.mxu0 0.0
        %2618 = vmatprep.subr.mxu0 0.0
        %2619 = vmatpush1.msra.mxu0 0.0
        %2620 = vmatprep.subr.mxu0 0.0
        %2621 = vmatpush1.msra.mxu0 0.0
        %2622 = vmatprep.subr.mxu0 0.0
        %2623 = vmatpush1.msra.mxu0 0.0
        %2624 = vmatprep.subr.mxu0 0.0
        %2625 = vmatpush1.msra.mxu0 0.0
        %2626 = vmatprep.subr.mxu0 0.0
        %2627 = vmatpush1.msra.mxu0 0.0
        %2628 = vmatprep.subr.mxu0 0.0
        %2629 = vmatpush1.msra.mxu0 0.0
        %2630 = vmatprep.subr.mxu0 0.0
        %2631 = vmatpush1.msra.mxu0 0.0
        %2632 = vmatprep.mubr.f32.mxu0 0.0
        %2633 = vmatmul.mubr.f32.gmra.mrb[0].mxu0 %v2521
        %v2634 = vpop.f32.mrb[0].mxu0
        %v2635 = vadd.f32 %v716, %v2634
        %v2636 = vpop.f32.mrb[0].mxu0
        %2637 = vmatprep.mubr.f32.mxu0 0.0
        %2638 = vmatmul.mubr.f32.gmra.mrb[0].mxu0 %v2524
        %v2639 = vpop.f32.mrb[0].mxu0
        %v2640 = vadd.f32 %v716, %v2639
        %v2641 = vpop.f32.mrb[0].mxu0
        %2642 = vmatprep.mubr.f32.mxu0 0.0
        %2643 = vmatmul.mubr.f32.gmra.mrb[0].mxu0 %v2527
        %v2644 = vpop.f32.mrb[0].mxu0
        %v2645 = vadd.f32 %v716, %v2644
        %v2646 = vpop.f32.mrb[0].mxu0
        %2647 = vmatprep.mubr.f32.mxu0 0.0
        %2648 = vmatmul.mubr.f32.gmra.mrb[0].mxu0 %v2530
        %v2649 = vpop.f32.mrb[0].mxu0
        %v2650 = vadd.f32 %v716, %v2649
        %v2651 = vpop.f32.mrb[0].mxu0
        %2652 = vmatprep.mubr.f32.mxu0 0.0
        %2653 = vmatmul.mubr.f32.gmra.mrb[0].mxu0 %v2533
        %v2654 = vpop.f32.mrb[0].mxu0
        %v2655 = vadd.f32 %v716, %v2654
        %v2656 = vpop.f32.mrb[0].mxu0
        %2657 = vmatprep.mubr.f32.mxu0 0.0
        %2658 = vmatmul.mubr.f32.gmra.mrb[0].mxu0 %v2536
        %v2659 = vpop.f32.mrb[0].mxu0
        %v2660 = vadd.f32 %v716, %v2659
        %v2661 = vpop.f32.mrb[0].mxu0
        %2662 = vmatprep.mubr.f32.mxu0 0.0
        %2663 = vmatmul.mubr.f32.gmra.mrb[0].mxu0 %v2539
        %v2664 = vpop.f32.mrb[0].mxu0
        %v2665 = vadd.f32 %v716, %v2664
        %v2666 = vpop.f32.mrb[0].mxu0
        %2667 = vmatprep.mubr.f32.mxu0 0.0
        %2668 = vmatmul.mubr.f32.gmra.mrb[0].mxu0 %v2542
        %v2669 = vpop.f32.mrb[0].mxu0
        %v2670 = vadd.f32 %v716, %v2669
        %v2671 = vpop.f32.mrb[0].mxu0
        %2672 = vmatprep.mubr.f32.mxu0 0.0
        %2673 = vmatmul.mubr.f32.gmra.mrb[0].mxu0 %v2545
        %v2674 = vpop.f32.mrb[0].mxu0
        %v2675 = vadd.f32 %v716, %v2674
        %v2676 = vpop.f32.mrb[0].mxu0
        %2677 = vmatprep.mubr.f32.mxu0 0.0
        %2678 = vmatmul.mubr.f32.gmra.mrb[0].mxu0 %v2548
        %v2679 = vpop.f32.mrb[0].mxu0
        %v2680 = vadd.f32 %v716, %v2679
        %v2681 = vpop.f32.mrb[0].mxu0
        %2682 = vmatprep.mubr.f32.mxu0 0.0
        %2683 = vmatmul.mubr.f32.gmra.mrb[0].mxu0 %v2551
        %v2684 = vpop.f32.mrb[0].mxu0
        %v2685 = vadd.f32 %v716, %v2684
        %v2686 = vpop.f32.mrb[0].mxu0
        %2687 = vmatprep.mubr.f32.mxu0 0.0
        %2688 = vmatmul.mubr.f32.gmra.mrb[0].mxu0 %v2554
        %v2689 = vpop.f32.mrb[0].mxu0
        %v2690 = vadd.f32 %v716, %v2689
        %v2691 = vpop.f32.mrb[0].mxu0
        %2692 = vmatprep.mubr.f32.mxu0 0.0
        %2693 = vmatmul.mubr.f32.gmra.mrb[0].mxu0 %v2557
        %v2694 = vpop.f32.mrb[0].mxu0
        %v2695 = vadd.f32 %v716, %v2694
        %v2696 = vpop.f32.mrb[0].mxu0
        %2697 = vmatprep.mubr.f32.mxu0 0.0
        %2698 = vmatmul.mubr.f32.gmra.mrb[0].mxu0 %v2560
        %v2699 = vpop.f32.mrb[0].mxu0
        %v2700 = vadd.f32 %v716, %v2699
        %v2701 = vpop.f32.mrb[0].mxu0
        %2702 = vmatprep.mubr.f32.mxu0 0.0
        %2703 = vmatmul.mubr.f32.gmra.mrb[0].mxu0 %v2563
        %v2704 = vpop.f32.mrb[0].mxu0
        %v2705 = vadd.f32 %v716, %v2704
        %v2706 = vpop.f32.mrb[0].mxu0
        %2707 = vmatprep.mubr.f32.mxu0 0.0
        %2708 = vmatmul.mubr.f32.gmra.mrb[0].mxu0 %v2566
        %v2709 = vpop.f32.mrb[0].mxu0
        %v2710 = vadd.f32 %v716, %v2709
        %v2711 = vpop.f32.mrb[0].mxu0
        %2712 = vdwg.mxu0
        %2713 = vmax.xlane.f32.xlu0 %v2635
        %v2714 = vpop.xlane.xlu0 %2713
        %2715 = vmax.xlane.f32.xlu0 %v2640
        %v2716 = vpop.xlane.xlu0 %2715
        %2717 = vmax.xlane.f32.xlu0 %v2645
        %v2718 = vpop.xlane.xlu0 %2717
        %2719 = vmax.xlane.f32.xlu0 %v2650
        %v2720 = vpop.xlane.xlu0 %2719
        %2721 = vmax.xlane.f32.xlu0 %v2655
        %v2722 = vpop.xlane.xlu0 %2721
        %2723 = vmax.xlane.f32.xlu0 %v2660
        %v2724 = vpop.xlane.xlu0 %2723
        %2725 = vmax.xlane.f32.xlu0 %v2665
        %v2726 = vpop.xlane.xlu0 %2725
        %2727 = vmax.xlane.f32.xlu0 %v2670
        %v2728 = vpop.xlane.xlu0 %2727
        %2729 = vmax.xlane.f32.xlu0 %v2675
        %v2730 = vpop.xlane.xlu0 %2729
        %2731 = vmax.xlane.f32.xlu0 %v2680
        %v2732 = vpop.xlane.xlu0 %2731
        %2733 = vmax.xlane.f32.xlu0 %v2685
        %v2734 = vpop.xlane.xlu0 %2733
        %2735 = vmax.xlane.f32.xlu0 %v2690
        %v2736 = vpop.xlane.xlu0 %2735
        %2737 = vmax.xlane.f32.xlu0 %v2695
        %v2738 = vpop.xlane.xlu0 %2737
        %2739 = vmax.xlane.f32.xlu0 %v2700
        %v2740 = vpop.xlane.xlu0 %2739
        %2741 = vmax.xlane.f32.xlu0 %v2705
        %v2742 = vpop.xlane.xlu0 %2741
        %2743 = vmax.xlane.f32.xlu0 %v2710
        %v2744 = vpop.xlane.xlu0 %2743
        %v2745 = vsub.f32 %v2635, %v2714
        %v2746 = vsub.f32 %v2640, %v2716
        %v2747 = vsub.f32 %v2645, %v2718
        %v2748 = vsub.f32 %v2650, %v2720
        %v2749 = vsub.f32 %v2655, %v2722
        %v2750 = vsub.f32 %v2660, %v2724
        %v2751 = vsub.f32 %v2665, %v2726
        %v2752 = vsub.f32 %v2670, %v2728
        %v2753 = vsub.f32 %v2675, %v2730
        %v2754 = vsub.f32 %v2680, %v2732
        %v2755 = vsub.f32 %v2685, %v2734
        %v2756 = vsub.f32 %v2690, %v2736
        %v2757 = vsub.f32 %v2695, %v2738
        %v2758 = vsub.f32 %v2700, %v2740
        %v2759 = vsub.f32 %v2705, %v2742
        %v2760 = vsub.f32 %v2710, %v2744
        %v2761 = vmul.f32 %v2745, 1.442695
        %v2762 = vpow.pop %v2761
        %v2763 = vmul.f32 %v2746, 1.442695
        %v2764 = vpow.pop %v2763
        %v2765 = vmul.f32 %v2747, 1.442695
        %v2766 = vpow.pop %v2765
        %v2767 = vmul.f32 %v2748, 1.442695
        %v2768 = vpow.pop %v2767
        %v2769 = vmul.f32 %v2749, 1.442695
        %v2770 = vpow.pop %v2769
        %v2771 = vmul.f32 %v2750, 1.442695
        %v2772 = vpow.pop %v2771
        %v2773 = vmul.f32 %v2751, 1.442695
        %v2774 = vpow.pop %v2773
        %v2775 = vmul.f32 %v2752, 1.442695
        %v2776 = vpow.pop %v2775
        %v2777 = vmul.f32 %v2753, 1.442695
        %v2778 = vpow.pop %v2777
        %v2779 = vmul.f32 %v2754, 1.442695
        %v2780 = vpow.pop %v2779
        %v2781 = vmul.f32 %v2755, 1.442695
        %v2782 = vpow.pop %v2781
        %v2783 = vmul.f32 %v2756, 1.442695
        %v2784 = vpow.pop %v2783
        %v2785 = vmul.f32 %v2757, 1.442695
        %v2786 = vpow.pop %v2785
        %v2787 = vmul.f32 %v2758, 1.442695
        %v2788 = vpow.pop %v2787
        %v2789 = vmul.f32 %v2759, 1.442695
        %v2790 = vpow.pop %v2789
        %v2791 = vmul.f32 %v2760, 1.442695
        %v2792 = vpow.pop %v2791
        %2793 = vadd.xlane.f32.xlu0 %v2762
        %v2794 = vpop.xlane.xlu0 %2793
        %2795 = vadd.xlane.f32.xlu0 %v2764
        %v2796 = vpop.xlane.xlu0 %2795
        %2797 = vadd.xlane.f32.xlu0 %v2766
        %v2798 = vpop.xlane.xlu0 %2797
        %2799 = vadd.xlane.f32.xlu0 %v2768
        %v2800 = vpop.xlane.xlu0 %2799
        %2801 = vadd.xlane.f32.xlu0 %v2770
        %v2802 = vpop.xlane.xlu0 %2801
        %2803 = vadd.xlane.f32.xlu0 %v2772
        %v2804 = vpop.xlane.xlu0 %2803
        %2805 = vadd.xlane.f32.xlu0 %v2774
        %v2806 = vpop.xlane.xlu0 %2805
        %2807 = vadd.xlane.f32.xlu0 %v2776
        %v2808 = vpop.xlane.xlu0 %2807
        %2809 = vadd.xlane.f32.xlu0 %v2778
        %v2810 = vpop.xlane.xlu0 %2809
        %2811 = vadd.xlane.f32.xlu0 %v2780
        %v2812 = vpop.xlane.xlu0 %2811
        %2813 = vadd.xlane.f32.xlu0 %v2782
        %v2814 = vpop.xlane.xlu0 %2813
        %2815 = vadd.xlane.f32.xlu0 %v2784
        %v2816 = vpop.xlane.xlu0 %2815
        %2817 = vadd.xlane.f32.xlu0 %v2786
        %v2818 = vpop.xlane.xlu0 %2817
        %2819 = vadd.xlane.f32.xlu0 %v2788
        %v2820 = vpop.xlane.xlu0 %2819
        %2821 = vadd.xlane.f32.xlu0 %v2790
        %v2822 = vpop.xlane.xlu0 %2821
        %2823 = vadd.xlane.f32.xlu0 %v2792
        %v2824 = vpop.xlane.xlu0 %2823
        %v2825 = vrcp.pop %v2794
        %v2826 = vrcp.pop %v2796
        %v2827 = vrcp.pop %v2798
        %v2828 = vrcp.pop %v2800
        %v2829 = vrcp.pop %v2802
        %v2830 = vrcp.pop %v2804
        %v2831 = vrcp.pop %v2806
        %v2832 = vrcp.pop %v2808
        %v2833 = vrcp.pop %v2810
        %v2834 = vrcp.pop %v2812
        %v2835 = vrcp.pop %v2814
        %v2836 = vrcp.pop %v2816
        %v2837 = vrcp.pop %v2818
        %v2838 = vrcp.pop %v2820
        %v2839 = vrcp.pop %v2822
        %v2840 = vrcp.pop %v2824
        %v2841 = vmul.f32 %v2762, %v2825
        %v2842 = vmul.f32 %v2764, %v2826
        %v2843 = vmul.f32 %v2766, %v2827
        %v2844 = vmul.f32 %v2768, %v2828
        %v2845 = vmul.f32 %v2770, %v2829
        %v2846 = vmul.f32 %v2772, %v2830
        %v2847 = vmul.f32 %v2774, %v2831
        %v2848 = vmul.f32 %v2776, %v2832
        %v2849 = vmul.f32 %v2778, %v2833
        %v2850 = vmul.f32 %v2780, %v2834
        %v2851 = vmul.f32 %v2782, %v2835
        %v2852 = vmul.f32 %v2784, %v2836
        %v2853 = vmul.f32 %v2786, %v2837
        %v2854 = vmul.f32 %v2788, %v2838
        %v2855 = vmul.f32 %v2790, %v2839
        %v2856 = vmul.f32 %v2792, %v2840
        %v2857 = vmul.f32 %v2841, %v1092
        %v2858 = vmul.f32 %v2842, %v1092
        %v2859 = vmul.f32 %v2843, %v1092
        %v2860 = vmul.f32 %v2844, %v1092
        %v2861 = vmul.f32 %v2845, %v1092
        %v2862 = vmul.f32 %v2846, %v1092
        %v2863 = vmul.f32 %v2847, %v1092
        %v2864 = vmul.f32 %v2848, %v1092
        %v2865 = vmul.f32 %v2849, %v1092
        %v2866 = vmul.f32 %v2850, %v1092
        %v2867 = vmul.f32 %v2851, %v1092
        %v2868 = vmul.f32 %v2852, %v1092
        %v2869 = vmul.f32 %v2853, %v1092
        %v2870 = vmul.f32 %v2854, %v1092
        %v2871 = vmul.f32 %v2855, %v1092
        %v2872 = vmul.f32 %v2856, %v1092
        %2873 = vmatprep.subr.mxu0 0.0
        %2874 = vmatpush1.xpose.msra.mxu0 %v2857
        %2875 = vmatprep.subr.mxu0 0.0
        %2876 = vmatpush1.xpose.msra.mxu0 %v2858
        %2877 = vmatprep.subr.mxu0 0.0
        %2878 = vmatpush1.xpose.msra.mxu0 %v2859
        %2879 = vmatprep.subr.mxu0 0.0
        %2880 = vmatpush1.xpose.msra.mxu0 %v2860
        %2881 = vmatprep.subr.mxu0 0.0
        %2882 = vmatpush1.xpose.msra.mxu0 %v2861
        %2883 = vmatprep.subr.mxu0 0.0
        %2884 = vmatpush1.xpose.msra.mxu0 %v2862
        %2885 = vmatprep.subr.mxu0 0.0
        %2886 = vmatpush1.xpose.msra.mxu0 %v2863
        %2887 = vmatprep.subr.mxu0 0.0
        %2888 = vmatpush1.xpose.msra.mxu0 %v2864
        %2889 = vmatprep.subr.mxu0 0.0
        %2890 = vmatpush1.xpose.msra.mxu0 %v2865
        %2891 = vmatprep.subr.mxu0 0.0
        %2892 = vmatpush1.xpose.msra.mxu0 %v2866
        %2893 = vmatprep.subr.mxu0 0.0
        %2894 = vmatpush1.xpose.msra.mxu0 %v2867
        %2895 = vmatprep.subr.mxu0 0.0
        %2896 = vmatpush1.xpose.msra.mxu0 %v2868
        %2897 = vmatprep.subr.mxu0 0.0
        %2898 = vmatpush1.xpose.msra.mxu0 %v2869
        %2899 = vmatprep.subr.mxu0 0.0
        %2900 = vmatpush1.xpose.msra.mxu0 %v2870
        %2901 = vmatprep.subr.mxu0 0.0
        %2902 = vmatpush1.xpose.msra.mxu0 %v2871
        %2903 = vmatprep.subr.mxu0 0.0
        %2904 = vmatpush1.xpose.msra.mxu0 %v2872
        %2905 = vmatprep.subr.mxu0 0.0
        %2906 = vmatpush1.xpose.msra.mxu0 0.0
        %2907 = vmatprep.subr.mxu0 0.0
        %2908 = vmatpush1.xpose.msra.mxu0 0.0
        %2909 = vmatprep.subr.mxu0 0.0
        %2910 = vmatpush1.xpose.msra.mxu0 0.0
        %2911 = vmatprep.subr.mxu0 0.0
        %2912 = vmatpush1.xpose.msra.mxu0 0.0
        %2913 = vmatprep.subr.mxu0 0.0
        %2914 = vmatpush1.xpose.msra.mxu0 0.0
        %2915 = vmatprep.subr.mxu0 0.0
        %2916 = vmatpush1.xpose.msra.mxu0 0.0
        %2917 = vmatprep.subr.mxu0 0.0
        %2918 = vmatpush1.xpose.msra.mxu0 0.0
        %2919 = vmatprep.subr.mxu0 0.0
        %2920 = vmatpush1.xpose.msra.mxu0 0.0
        %2921 = vmatprep.subr.mxu0 0.0
        %2922 = vmatpush1.xpose.msra.mxu0 0.0
        %2923 = vmatprep.subr.mxu0 0.0
        %2924 = vmatpush1.xpose.msra.mxu0 0.0
        %2925 = vmatprep.subr.mxu0 0.0
        %2926 = vmatpush1.xpose.msra.mxu0 0.0
        %2927 = vmatprep.subr.mxu0 0.0
        %2928 = vmatpush1.xpose.msra.mxu0 0.0
        %2929 = vmatprep.subr.mxu0 0.0
        %2930 = vmatpush1.xpose.msra.mxu0 0.0
        %2931 = vmatprep.subr.mxu0 0.0
        %2932 = vmatpush1.xpose.msra.mxu0 0.0
        %2933 = vmatprep.subr.mxu0 0.0
        %2934 = vmatpush1.xpose.msra.mxu0 0.0
        %2935 = vmatprep.subr.mxu0 0.0
        %2936 = vmatpush1.xpose.msra.mxu0 0.0
        %2937 = vmatprep.mubr.f32.mxu0 0.0
        %2938 = vmatmul.mubr.f32.gmra.mrb[0].mxu0 %v2485
        %v2939 = vpop.f32.mrb[0].mxu0
        %v2940 = vadd.f32 0.0, %v2939
        %v2941 = vpop.f32.mrb[0].mxu0
        %2942 = vdwg.mxu0
        %s2943 = scalar_lea.vmem %s9, 32
        %v2944 = vld [vmem:[%s2943] sm:$0xff]
        %v2945 = vld [vmem:[%s2943 + $0x8] sm:$0xff]
        %v2946 = vmax.f32 %v2940, 0.0
        %s2947 = scalar_lea.vmem %s10, 32
        %v2948 = vld [vmem:[%s2947] sm:$0xff]
        %v2949 = vld [vmem:[%s2947 + $0x8] sm:$0xff]
        %2951 = vset.pattern.permute.xlu0 0
        %2952 = vperm.xlu0 %2951, %v2948
        %v2953 = vpop.permute.xlu0 %2952
        %2956 = vset.pattern.permute.xlu0 0
        %2957 = vperm.xlu0 %2956, %v2949
        %v2958 = vpop.permute.xlu0 %2957
        %v2961 = vsel %vm750, %v2944, 0
        %v2964 = vsel %vm750, %v2945, 0
        %2966 = vmatprep.subr.mxu0 0.0
        %2967 = vmatpush1.msra.mxu0 %v2946
        %2968 = vmatprep.subr.mxu0 0.0
        %2969 = vmatpush1.msra.mxu0 0.0
        %2970 = vmatprep.subr.mxu0 0.0
        %2971 = vmatpush1.msra.mxu0 0.0
        %2972 = vmatprep.subr.mxu0 0.0
        %2973 = vmatpush1.msra.mxu0 0.0
        %2974 = vmatprep.subr.mxu0 0.0
        %2975 = vmatpush1.msra.mxu0 0.0
        %2976 = vmatprep.subr.mxu0 0.0
        %2977 = vmatpush1.msra.mxu0 0.0
        %2978 = vmatprep.subr.mxu0 0.0
        %2979 = vmatpush1.msra.mxu0 0.0
        %2980 = vmatprep.subr.mxu0 0.0
        %2981 = vmatpush1.msra.mxu0 0.0
        %2982 = vmatprep.subr.mxu0 0.0
        %2983 = vmatpush1.msra.mxu0 0.0
        %2984 = vmatprep.subr.mxu0 0.0
        %2985 = vmatpush1.msra.mxu0 0.0
        %2986 = vmatprep.subr.mxu0 0.0
        %2987 = vmatpush1.msra.mxu0 0.0
        %2988 = vmatprep.subr.mxu0 0.0
        %2989 = vmatpush1.msra.mxu0 0.0
        %2990 = vmatprep.subr.mxu0 0.0
        %2991 = vmatpush1.msra.mxu0 0.0
        %2992 = vmatprep.subr.mxu0 0.0
        %2993 = vmatpush1.msra.mxu0 0.0
        %2994 = vmatprep.subr.mxu0 0.0
        %2995 = vmatpush1.msra.mxu0 0.0
        %2996 = vmatprep.subr.mxu0 0.0
        %2997 = vmatpush1.msra.mxu0 0.0
        %2998 = vmatprep.subr.mxu0 0.0
        %2999 = vmatpush1.msra.mxu0 0.0
        %3000 = vmatprep.subr.mxu0 0.0
        %3001 = vmatpush1.msra.mxu0 0.0
        %3002 = vmatprep.subr.mxu0 0.0
        %3003 = vmatpush1.msra.mxu0 0.0
        %3004 = vmatprep.subr.mxu0 0.0
        %3005 = vmatpush1.msra.mxu0 0.0
        %3006 = vmatprep.subr.mxu0 0.0
        %3007 = vmatpush1.msra.mxu0 0.0
        %3008 = vmatprep.subr.mxu0 0.0
        %3009 = vmatpush1.msra.mxu0 0.0
        %3010 = vmatprep.subr.mxu0 0.0
        %3011 = vmatpush1.msra.mxu0 0.0
        %3012 = vmatprep.subr.mxu0 0.0
        %3013 = vmatpush1.msra.mxu0 0.0
        %3014 = vmatprep.subr.mxu0 0.0
        %3015 = vmatpush1.msra.mxu0 0.0
        %3016 = vmatprep.subr.mxu0 0.0
        %3017 = vmatpush1.msra.mxu0 0.0
        %3018 = vmatprep.subr.mxu0 0.0
        %3019 = vmatpush1.msra.mxu0 0.0
        %3020 = vmatprep.subr.mxu0 0.0
        %3021 = vmatpush1.msra.mxu0 0.0
        %3022 = vmatprep.subr.mxu0 0.0
        %3023 = vmatpush1.msra.mxu0 0.0
        %3024 = vmatprep.subr.mxu0 0.0
        %3025 = vmatpush1.msra.mxu0 0.0
        %3026 = vmatprep.subr.mxu0 0.0
        %3027 = vmatpush1.msra.mxu0 0.0
        %3028 = vmatprep.subr.mxu0 0.0
        %3029 = vmatpush1.msra.mxu0 0.0
        %3030 = vmatprep.mubr.f32.mxu0 0.0
        %3031 = vmatmul.mubr.f32.gmra.mrb[0].mxu0 %v2961
        %v3032 = vpop.f32.mrb[0].mxu0
        %v3033 = vadd.f32 %v2953, %v3032
        %v3034 = vpop.f32.mrb[0].mxu0
        %3035 = vmatprep.mubr.f32.mxu0 0.0
        %3036 = vmatmul.mubr.f32.gmra.mrb[0].mxu0 %v2964
        %v3037 = vpop.f32.mrb[0].mxu0
        %v3038 = vadd.f32 %v2958, %v3037
        %v3039 = vpop.f32.mrb[0].mxu0
        %3040 = vdwg.mxu0
        %s3041 = scalar_lea.vmem %s11, 32
        %v3042 = vld [vmem:[%s3041] sm:$0xff]
        %v3043 = vld [vmem:[%s3041 + $0x8] sm:$0xff]
        %v3045 = vsel %vm478, %v3042, 0
        %v3048 = vsel %vm478, %v3043, 0
        %3050 = vmatprep.subr.mxu0 0.0
        %3051 = vmatpush1.msra.mxu0 %v3033
        %3052 = vmatprep.subr.mxu0 0.0
        %3053 = vmatpush1.msra.mxu0 %v3038
        %3054 = vmatprep.subr.mxu0 0.0
        %3055 = vmatpush1.msra.mxu0 0.0
        %3056 = vmatprep.subr.mxu0 0.0
        %3057 = vmatpush1.msra.mxu0 0.0
        %3058 = vmatprep.subr.mxu0 0.0
        %3059 = vmatpush1.msra.mxu0 0.0
        %3060 = vmatprep.subr.mxu0 0.0
        %3061 = vmatpush1.msra.mxu0 0.0
        %3062 = vmatprep.subr.mxu0 0.0
        %3063 = vmatpush1.msra.mxu0 0.0
        %3064 = vmatprep.subr.mxu0 0.0
        %3065 = vmatpush1.msra.mxu0 0.0
        %3066 = vmatprep.subr.mxu0 0.0
        %3067 = vmatpush1.msra.mxu0 0.0
        %3068 = vmatprep.subr.mxu0 0.0
        %3069 = vmatpush1.msra.mxu0 0.0
        %3070 = vmatprep.subr.mxu0 0.0
        %3071 = vmatpush1.msra.mxu0 0.0
        %3072 = vmatprep.subr.mxu0 0.0
        %3073 = vmatpush1.msra.mxu0 0.0
        %3074 = vmatprep.subr.mxu0 0.0
        %3075 = vmatpush1.msra.mxu0 0.0
        %3076 = vmatprep.subr.mxu0 0.0
        %3077 = vmatpush1.msra.mxu0 0.0
        %3078 = vmatprep.subr.mxu0 0.0
        %3079 = vmatpush1.msra.mxu0 0.0
        %3080 = vmatprep.subr.mxu0 0.0
        %3081 = vmatpush1.msra.mxu0 0.0
        %3082 = vmatprep.subr.mxu0 0.0
        %3083 = vmatpush1.msra.mxu0 0.0
        %3084 = vmatprep.subr.mxu0 0.0
        %3085 = vmatpush1.msra.mxu0 0.0
        %3086 = vmatprep.subr.mxu0 0.0
        %3087 = vmatpush1.msra.mxu0 0.0
        %3088 = vmatprep.subr.mxu0 0.0
        %3089 = vmatpush1.msra.mxu0 0.0
        %3090 = vmatprep.subr.mxu0 0.0
        %3091 = vmatpush1.msra.mxu0 0.0
        %3092 = vmatprep.subr.mxu0 0.0
        %3093 = vmatpush1.msra.mxu0 0.0
        %3094 = vmatprep.subr.mxu0 0.0
        %3095 = vmatpush1.msra.mxu0 0.0
        %3096 = vmatprep.subr.mxu0 0.0
        %3097 = vmatpush1.msra.mxu0 0.0
        %3098 = vmatprep.subr.mxu0 0.0
        %3099 = vmatpush1.msra.mxu0 0.0
        %3100 = vmatprep.subr.mxu0 0.0
        %3101 = vmatpush1.msra.mxu0 0.0
        %3102 = vmatprep.subr.mxu0 0.0
        %3103 = vmatpush1.msra.mxu0 0.0
        %3104 = vmatprep.subr.mxu0 0.0
        %3105 = vmatpush1.msra.mxu0 0.0
        %3106 = vmatprep.subr.mxu0 0.0
        %3107 = vmatpush1.msra.mxu0 0.0
        %3108 = vmatprep.subr.mxu0 0.0
        %3109 = vmatpush1.msra.mxu0 0.0
        %3110 = vmatprep.subr.mxu0 0.0
        %3111 = vmatpush1.msra.mxu0 0.0
        %3112 = vmatprep.subr.mxu0 0.0
        %3113 = vmatpush1.msra.mxu0 0.0
        %3114 = vmatprep.mubr.f32.mxu0 0.0
        %3115 = vmatmul.mubr.f32.gmra.mrb[0].mxu0 %v3045
        %v3116 = vpop.f32.mrb[0].mxu0
        %v3117 = vadd.f32 0.0, %v3116
        %v3118 = vpop.f32.mrb[0].mxu0
        %3119 = vmatprep.mubr.f32.mxu0 0.0
        %3120 = vmatmul.mubr.f32.gmra.mrb[0].mxu0 %v3048
        %v3121 = vpop.f32.mrb[0].mxu0
        %v3122 = vadd.f32 0.0, %v3121
        %v3123 = vpop.f32.mrb[0].mxu0
        %3124 = vdwg.mxu0
        %v3125 = vadd.f32 %v2234, %v3117
        %v3126 = vadd.f32 %v2239, %v3122
        %v3127 = vmul.f32 %v3125, %v1092
        %v3128 = vmul.f32 %v3126, %v1092
        %v3129 = vld [vmem:[%s12] sm:$0xff]
        %v3130 = vld [vmem:[%s12 + $0x8] sm:$0xff]
        %3132 = vset.pattern.permute.xlu0 0
        %3133 = vperm.xlu0 %3132, %v3129
        %v3134 = vpop.permute.xlu0 %3133
        %3137 = vset.pattern.permute.xlu0 0
        %3138 = vperm.xlu0 %3137, %v3130
        %v3139 = vpop.permute.xlu0 %3138
        %v3141 = vadd.f32 %v3127, %v3134
        %v3142 = vadd.f32 %v3128, %v3139
        %3143 = vst [vmem:[%s455] sm:$0xff] %v3141
        %3144 = vst [vmem:[%s455 + $0x8] sm:$0xff] %v3142
        %s3145 = sand.u32 %s323, 1
        %s3146 = scalar_lea.sflag [#allocation3], %s3145
        %s3147 = sand.u32 %s323, 1
        %s3148 = smul.addr %s3147, 16
        %s3149 = scalar_lea.vmem [#allocation2], %s3148
        // Predicated region
        $region73: #{tpu_custom_call.1} parent=71 // pred_check
          %p3150 = pneg %p333
        $region74: #{tpu_custom_call.1} parent=71 // pred_check_branch
          %3152 = sbr.rel (%p3150) target = $region76
        $region75: #{tpu_custom_call.1} parent=71 // pred_region
          %s3154 = ssub.s32 256, 256
          %3155 = vsyncadd %s3146, %s3154
          %s3156 = smul.addr %s27, 2
          %s3157 = smul.addr %s3156, 128
          %s3158 = scalar_lea.hbm %s13, %s3157
          %s3159 = sshll.u32 %s3149, 4
          %s3160 = int_to_ptr.vmem [resolvable:$true] %s3159
          %3165 = dma.vmem_to_hbm [thread:$0]  %s3160, 256, %s3158, %s3146, 128, 128, 8
        $region76: #{tpu_custom_call.1} parent=71 // pred_fallthru
          _
      $region72: #{tpu_custom_call.1} parent=5 // pred_fallthru
        _
      %p3166 = scmp.le.s32.totalorder 2, %s22
      // Predicated region
      $region77: #{tpu_custom_call.1} parent=5 // pred_check
        %p3167 = pneg %p3166
      $region78: #{tpu_custom_call.1} parent=5 // pred_check_branch
        %3169 = sbr.rel (%p3167) target = $region80
      $region79: #{tpu_custom_call.1} parent=5 // pred_region
        %s3170 = ssub.s32 %s22, 2
        // Predicated region
        $region81: #{tpu_custom_call.1} parent=79 // pred_check
          %p3171 = pneg %p339
        $region82: #{tpu_custom_call.1} parent=79 // pred_check_branch
          %3173 = sbr.rel (%p3171) target = $region84
        $region83: #{tpu_custom_call.1} parent=79 // pred_region
          %s3174 = sand.u32 %s324, 1
          %s3175 = scalar_lea.sflag [#allocation3], %s3174
          %s3176 = sand.u32 %s324, 1
          %s3177 = smul.addr %s3176, 16
          %s3178 = scalar_lea.vmem [#allocation2], %s3177
          %3179 = dma.done %s3175, 256
        $region84: #{tpu_custom_call.1} parent=79 // pred_fallthru
          _
      $region80: #{tpu_custom_call.1} parent=5 // pred_fallthru
        _
    $region6: #{tpu_custom_call.1} parent=1 // loop_footer
      %s26 = sadd.s32 1, %s22
    $region7: #{tpu_custom_call.1} parent=1 // loop_footer_branch
      %21 = sbr.rel target = $region3
    $region8: #{tpu_custom_call.1} parent=1 // loop_exit
      _
    %3180 = vsyncpa [#allocation3], 1
    %s3181 = scalar_lea.sflag [#allocation3], 1
    %3182 = vsyncpa %s3181, 1

</llo_original>
